<compile_context>
chip_gen: v7x
topology: tpu7x:2x2x1
jax: 0.10.0
libtpu: 0.0.40
codegen_flags: <defaults>
</compile_context>

<pallas_src>
import functools

import jax
import jax.numpy as jnp
import numpy as np
from jax.experimental import pallas as pl
from jax.experimental.pallas import tpu as pltpu


# ----------------------------------------------------------------------------
# Kernel: one batch-block (TB molecules) per grid step.
# ----------------------------------------------------------------------------
def _subset_kernel(vf_ref, mask_ref, veohenc_ref, subs_ref, mass_ref, inten_ref,
                   ln1g_ref, ln1b_ref, w1f_ref, w1o_ref, b1_ref,
                   w2a_ref, b2a_ref, w2b_ref, b2b_ref,
                   lnpg_ref, lnpb_ref, ws_ref, bs_ref,
                   iota_ref, clip_ref, expand_ref,
                   spect_ref, probs_ref, *, spect_bin_n):
    f32 = jnp.float32
    bf16 = jnp.bfloat16

    vf = vf_ref[...]            # (TB, A, GF)
    mask = mask_ref[...]        # (TB, 1, A)   {0,1}
    subs = subs_ref[...]        # (TB, S, A)   {0,1}
    TB, S, _ = subs.shape
    GF = vf.shape[-1]
    D = w2a_ref.shape[-1]

    # -- subset-weighted vertex mean ------------------------------------------
    # mask is binary => (subs*mask) @ vf == (subs*mask) @ (vf*mask)
    subs_m = subs * mask                                                    # (TB, S, A)
    swvs = jnp.einsum('bsa,baf->bsf', subs_m, vf,
                      preferred_element_type=f32)                           # (TB, S, GF)
    subset_size = jnp.sum(subs_m, axis=-1, keepdims=True) + 1e-4            # (TB, S, 1)
    swvm = swvs / subset_size

    # -- LayerNorm over G_F (subset_weighted_norm) -----------------------------
    mu = jnp.mean(swvm, axis=-1, keepdims=True)
    var = jnp.mean(jnp.square(swvm - mu), axis=-1, keepdims=True)
    normed = (swvm - mu) * jax.lax.rsqrt(var + 1e-5) * ln1g_ref[...][None] \
             + ln1b_ref[...][None]                                          # (TB, S, GF)

    # -- fused StructuredOneHot (accumulated / thermometer) --------------------
    # veohenc already has counts broadcast into encoding slots per element.
    counts = jnp.einsum('bsa,bae->bse', subs, veohenc_ref[...],
                        preferred_element_type=f32)                         # (TB, S, ENC)
    counts = jnp.minimum(counts, clip_ref[...][None])                       # clip to slot size - 1
    formula_oh = (iota_ref[...][None] >= counts).astype(f32)                # (TB, S, ENC)

    # -- MLP on flattened rows (TB*S, .); split first layer (no lane concat) ---
    x1 = normed.reshape(TB * S, GF)
    x2 = formula_oh.reshape(TB * S, formula_oh.shape[-1])
    h = jnp.dot(x1.astype(bf16), w1f_ref[...], preferred_element_type=f32)
    h = h + jnp.dot(x2.astype(bf16), w1o_ref[...], preferred_element_type=f32)
    h = jnp.maximum(h + b1_ref[...], 0.0)
    h = jnp.maximum(jnp.dot(h.astype(bf16), w2a_ref[...],
                            preferred_element_type=f32) + b2a_ref[...], 0.0)
    h = jnp.maximum(jnp.dot(h.astype(bf16), w2b_ref[...],
                            preferred_element_type=f32) + b2b_ref[...], 0.0)

    # -- pre-score LayerNorm + score + softmax over subset samples -------------
    mu2 = jnp.mean(h, axis=-1, keepdims=True)
    var2 = jnp.mean(jnp.square(h - mu2), axis=-1, keepdims=True)
    hn = (h - mu2) * jax.lax.rsqrt(var2 + 1e-5) * lnpg_ref[...] + lnpb_ref[...]

    hn3 = hn.reshape(TB, S, D)
    scores = jnp.sum(hn3 * ws_ref[...][None], axis=-1) + bs_ref[...]        # (TB, S)

    m = jnp.max(scores, axis=-1, keepdims=True)
    p = jnp.exp(scores - m)
    probs = p / jnp.sum(p, axis=-1, keepdims=True)                          # (TB, S)
    probs_ref[...] = probs

    # -- dense "sparse mass matrix @ probs": compare + one batched MXU dot -----
    # probs expanded over the NM peaks of each subset via a constant matrix.
    w_flat = jnp.dot(probs, expand_ref[...], preferred_element_type=f32) \
             * inten_ref[...]                                               # (TB, K)
    bins = jax.lax.broadcasted_iota(jnp.int32, (1, 1, spect_bin_n), 2)
    onehot = (mass_ref[...] == bins).astype(f32)                            # (TB, K, SPECT)
    spect = jnp.einsum('bok,bkm->bom', w_flat[:, None, :], onehot,
                       preferred_element_type=f32)                          # (TB, 1, SPECT)
    spect_ref[...] = spect.reshape(TB, spect_bin_n)


# ----------------------------------------------------------------------------
# Wrapper
# ----------------------------------------------------------------------------
def _pick_tb(batch_n):
    # biggest batch tile that keeps >=2 grid steps (v7x: 2 TensorCores) and a
    # sublane-friendly (multiple-of-8) leading block dim.
    for tb in (32, 16, 8):
        if batch_n % tb == 0 and batch_n // tb >= 2:
            return tb
    if batch_n % 8 == 0:
        return 8
    return batch_n  # block == full batch (still legal: equals full array dim)


def subsets_sample_weighted_formula(vert_feat_in, vert_mask_in, vert_element_oh, adj_oh,
                                    atom_subsets, atom_subsets_peaks, params,
                                    oh_sizes=(20, 20, 20, 20, 20), spect_bin_n=512):
    del adj_oh  # unused by the PyTorch forward as well
    B, A, GF = vert_feat_in.shape
    S = atom_subsets.shape[1]
    NM = atom_subsets_peaks.shape[2]
    E = vert_element_oh.shape[-1]
    oh_sizes = tuple(int(s) for s in oh_sizes)
    ENC = int(np.sum(oh_sizes))
    K = S * NM
    D = params["w2a"].shape[0]

    TB = _pick_tb(B)
    assert B % TB == 0, "batch must be divisible by the chosen batch tile"

    f32 = jnp.float32
    bf16 = jnp.bfloat16

    vf = vert_feat_in.astype(f32)
    mask_row = vert_mask_in.astype(f32).reshape(B, 1, A)
    subs = atom_subsets.astype(f32)

    # constants for the fused StructuredOneHot
    seg_sel = np.zeros((E, ENC), np.float32)
    iota_np = np.zeros((1, ENC), np.float32)
    clip_np = np.zeros((1, ENC), np.float32)
    off = 0
    for e, sz in enumerate(oh_sizes):
        seg_sel[e, off:off + sz] = 1.0
        iota_np[0, off:off + sz] = np.arange(sz, dtype=np.float32)
        clip_np[0, off:off + sz] = float(sz - 1)
        off += sz
    # broadcast element one-hots into encoding slots (tiny XLA precompute)
    veoh_enc = jnp.einsum('bae,ef->baf', vert_element_oh.astype(f32),
                          jnp.asarray(seg_sel))                              # (B, A, ENC)

    # peak data flattened subset-major; probs -> per-peak expansion matrix
    # NOTE: masses rounding outside [0, spect_bin_n) are silently dropped
    # (matches one-hot semantics of the dense scatter).
    mass_flat = jnp.round(atom_subsets_peaks[..., 0]).astype(jnp.int32).reshape(B, K, 1)
    inten_flat = atom_subsets_peaks[..., 1].astype(f32).reshape(B, K)
    expand_np = np.repeat(np.eye(S, dtype=np.float32), NM, axis=1)           # (S, K)

    # bf16 operands for the internal_d matmuls (f32 accumulation in-kernel)
    w1f = params["w1"][:GF].astype(bf16)
    w1o = params["w1"][GF:].astype(bf16)
    w2a = params["w2a"].astype(bf16)
    w2b = params["w2b"].astype(bf16)

    per3 = lambda b: (b, 0, 0)
    per2 = lambda b: (b, 0)
    sh2 = lambda b: (0, 0)

    kernel = functools.partial(_subset_kernel, spect_bin_n=spect_bin_n)

    in_specs = [
        pl.BlockSpec((TB, A, GF), per3),        # vert features
        pl.BlockSpec((TB, 1, A), per3),         # vertex mask (row form)
        pl.BlockSpec((TB, A, ENC), per3),       # element one-hot, slot-broadcast
        pl.BlockSpec((TB, S, A), per3),         # atom subsets
        pl.BlockSpec((TB, K, 1), per3),         # rounded peak masses (int32)
        pl.BlockSpec((TB, K), per2),            # peak intensities
        pl.BlockSpec((1, GF), sh2),             # ln1 gamma
        pl.BlockSpec((1, GF), sh2),             # ln1 beta
        pl.BlockSpec((GF, D), sh2),             # w1 (feature half, bf16)
        pl.BlockSpec((ENC, D), sh2),            # w1 (formula half, bf16)
        pl.BlockSpec((1, D), sh2),              # b1
        pl.BlockSpec((D, D), sh2),              # w2a (bf16)
        pl.BlockSpec((1, D), sh2),              # b2a
        pl.BlockSpec((D, D), sh2),              # w2b (bf16)
        pl.BlockSpec((1, D), sh2),              # b2b
        pl.BlockSpec((1, D), sh2),              # lnp gamma
        pl.BlockSpec((1, D), sh2),              # lnp beta
        pl.BlockSpec((1, D), sh2),              # score weight
        pl.BlockSpec((1, 1), sh2),              # score bias
        pl.BlockSpec((1, ENC), sh2),            # thermometer iota
        pl.BlockSpec((1, ENC), sh2),            # per-slot clip max
        pl.BlockSpec((S, K), sh2),              # probs -> peaks expansion
    ]
    out_specs = (
        pl.BlockSpec((TB, spect_bin_n), per2),  # spect (lane-dense)
        pl.BlockSpec((TB, S), per2),            # formulae probs (lane-dense)
    )
    out_shape = (
        jax.ShapeDtypeStruct((B, spect_bin_n), f32),
        jax.ShapeDtypeStruct((B, S), f32),
    )

    spect, probs = pl.pallas_call(
        kernel,
        grid=(B // TB,),
        in_specs=in_specs,
        out_specs=out_specs,
        out_shape=out_shape,
        compiler_params=pltpu.CompilerParams(dimension_semantics=("parallel",)),
    )(vf, mask_row, veoh_enc, subs, mass_flat, inten_flat,
      params["ln1_g"], params["ln1_b"], w1f, w1o, params["b1"],
      w2a, params["b2a"], w2b, params["b2b"],
      params["lnp_g"], params["lnp_b"], params["ws"], params["bs"],
      jnp.asarray(iota_np), jnp.asarray(clip_np), jnp.asarray(expand_np))

    return {"spect_out": spect, "formulae_probs": probs}


# ----------------------------------------------------------------------------
# Deterministic parameter init (shapes per the module __init__)
# ----------------------------------------------------------------------------
def make_params(key, g_feat_in, formula_enc_n, internal_d):
    def lin(k, fin, fout):
        kw, kb = jax.random.split(k)
        w = jax.random.normal(kw, (fin, fout), jnp.float32) / np.sqrt(fin)
        b = 0.01 * jax.random.normal(kb, (1, fout), jnp.float32)
        return w, b

    ks = jax.random.split(key, 4)
    params = {
        "ln1_g": jnp.ones((1, g_feat_in), jnp.float32),
        "ln1_b": jnp.zeros((1, g_feat_in), jnp.float32),
        "lnp_g": jnp.ones((1, internal_d), jnp.float32),
        "lnp_b": jnp.zeros((1, internal_d), jnp.float32),
    }
    params["w1"], params["b1"] = lin(ks[0], g_feat_in + formula_enc_n, internal_d)
    params["w2a"], params["b2a"] = lin(ks[1], internal_d, internal_d)
    params["w2b"], params["b2b"] = lin(ks[2], internal_d, internal_d)
    ws, bs = lin(ks[3], internal_d, 1)
    params["ws"] = ws.reshape(1, internal_d)
    params["bs"] = bs.reshape(1, 1)
    return params


# ----------------------------------------------------------------------------
# Pure-JAX reference (f32 end-to-end) for correctness checking
# ----------------------------------------------------------------------------
def reference_forward(vert_feat, vert_mask, vert_element_oh, atom_subsets, peaks,
                      params, oh_sizes, spect_bin_n):
    masked_vf = vert_feat * vert_mask[..., None]
    subs_m = atom_subsets * vert_mask[:, None, :]
    swvs = jnp.einsum('ijk,ilj->ilk', masked_vf, subs_m)
    subset_size = subs_m.sum(-1)[..., None] + 1e-4
    swvm = swvs / subset_size
    mu = swvm.mean(-1, keepdims=True)
    var = ((swvm - mu) ** 2).mean(-1, keepdims=True)
    normed = (swvm - mu) / jnp.sqrt(var + 1e-5) * params["ln1_g"][0] + params["ln1_b"][0]

    counts = jnp.einsum('bae,bfa->bfe', vert_element_oh, atom_subsets).astype(jnp.int32)
    parts = []
    for e, sz in enumerate(oh_sizes):
        io = jnp.arange(sz)[None, None, :]
        c = jnp.clip(counts[..., e:e + 1], 0, sz - 1)
        parts.append((io >= c).astype(jnp.float32))
    formula_oh = jnp.concatenate(parts, -1)

    x = jnp.concatenate([normed, formula_oh], -1)
    h = jax.nn.relu(x @ params["w1"] + params["b1"][0])
    h = jax.nn.relu(h @ params["w2a"] + params["b2a"][0])
    h = jax.nn.relu(h @ params["w2b"] + params["b2b"][0])
    mu2 = h.mean(-1, keepdims=True)
    var2 = ((h - mu2) ** 2).mean(-1, keepdims=True)
    hn = (h - mu2) / jnp.sqrt(var2 + 1e-5) * params["lnp_g"][0] + params["lnp_b"][0]
    scores = (hn * params["ws"][0]).sum(-1) + params["bs"][0, 0]
    probs = jax.nn.softmax(scores, axis=-1)

    mass_idx = jnp.round(peaks[..., 0]).astype(jnp.int32)
    inten = peaks[..., 1]
    w = probs[..., None] * inten
    onehot = jax.nn.one_hot(mass_idx, spect_bin_n, dtype=jnp.float32)
    spect = jnp.einsum('bsn,bsnm->bm', w, onehot)
    return {"spect_out": spect, "formulae_probs": probs}


# ----------------------------------------------------------------------------
if __name__ == "__main__":
    B, A, GF, S, E, NM, D, SPECT = 16, 16, 32, 8, 5, 4, 128, 512
    oh_sizes = (20, 20, 20, 20, 20)

    key = jax.random.PRNGKey(0)
    k1, k2, k3, k4, k5, k6, kp = jax.random.split(key, 7)

    vert_feat = jax.random.normal(k1, (B, A, GF), jnp.float32)
    vert_mask = (jax.random.uniform(k2, (B, A)) > 0.2).astype(jnp.float32)
    elem_idx = jax.random.randint(k3, (B, A), 0, E)
    vert_element_oh = jax.nn.one_hot(elem_idx, E, dtype=jnp.float32)
    adj_oh = jnp.zeros((B, A, A, 4), jnp.float32)   # unused by forward (signature parity)
    atom_subsets = (jax.random.uniform(k4, (B, S, A)) > 0.5).astype(jnp.float32)
    masses = jax.random.randint(k5, (B, S, NM), 0, SPECT).astype(jnp.float32)
    intens = jax.random.uniform(k6, (B, S, NM), dtype=jnp.float32)
    atom_subsets_peaks = jnp.stack([masses, intens], axis=-1)

    params = make_params(kp, GF, int(np.sum(oh_sizes)), D)

    out = subsets_sample_weighted_formula(vert_feat, vert_mask, vert_element_oh, adj_oh,
                                          atom_subsets, atom_subsets_peaks, params,
                                          oh_sizes=oh_sizes, spect_bin_n=SPECT)
    out = jax.block_until_ready(out)

    ref = reference_forward(vert_feat, vert_mask, vert_element_oh, atom_subsets,
                            atom_subsets_peaks, params, oh_sizes, SPECT)

    assert out["spect_out"].shape == (B, SPECT)
    assert out["formulae_probs"].shape == (B, S)
    np.testing.assert_allclose(np.asarray(out["formulae_probs"]),
                               np.asarray(ref["formulae_probs"]), rtol=2e-2, atol=2e-2)
    np.testing.assert_allclose(np.asarray(out["spect_out"]),
                               np.asarray(ref["spect_out"]), rtol=2e-2, atol=2e-2)
    print("KERNEL_OK")
</pallas_src>

<mosaic_0001>
module attributes {stable_mosaic.version = 11 : i64} {
  func.func @_subset_kernel(%arg0: i32, %arg1: memref<8x16x32xf32, #tpu.memory_space<vmem>>, %arg2: memref<8x1x16xf32, #tpu.memory_space<vmem>>, %arg3: memref<8x16x100xf32, #tpu.memory_space<vmem>>, %arg4: memref<8x8x16xf32, #tpu.memory_space<vmem>>, %arg5: memref<8x32x1xi32, #tpu.memory_space<vmem>>, %arg6: memref<8x32xf32, #tpu.memory_space<vmem>>, %arg7: memref<1x32xf32, #tpu.memory_space<vmem>>, %arg8: memref<1x32xf32, #tpu.memory_space<vmem>>, %arg9: memref<32x128xbf16, #tpu.memory_space<vmem>>, %arg10: memref<100x128xbf16, #tpu.memory_space<vmem>>, %arg11: memref<1x128xf32, #tpu.memory_space<vmem>>, %arg12: memref<128x128xbf16, #tpu.memory_space<vmem>>, %arg13: memref<1x128xf32, #tpu.memory_space<vmem>>, %arg14: memref<128x128xbf16, #tpu.memory_space<vmem>>, %arg15: memref<1x128xf32, #tpu.memory_space<vmem>>, %arg16: memref<1x128xf32, #tpu.memory_space<vmem>>, %arg17: memref<1x128xf32, #tpu.memory_space<vmem>>, %arg18: memref<1x128xf32, #tpu.memory_space<vmem>>, %arg19: memref<1x1xf32, #tpu.memory_space<vmem>>, %arg20: memref<1x100xf32, #tpu.memory_space<vmem>>, %arg21: memref<1x100xf32, #tpu.memory_space<vmem>>, %arg22: memref<8x32xf32, #tpu.memory_space<vmem>>, %arg23: memref<8x512xf32, #tpu.memory_space<vmem>>, %arg24: memref<8x8xf32, #tpu.memory_space<vmem>>) attributes {dimension_semantics = [#tpu.dimension_semantics<parallel>], iteration_bounds = array<i64: 2>, scalar_prefetch = 0 : i64, scratch_operands = 0 : i64, tpu.core_type = #tpu.core_type<tc>, window_params = [{transform_indices = @transform_0, window_bounds = array<i64: 8, 16, 32>}, {transform_indices = @transform_1, window_bounds = array<i64: 8, 1, 16>}, {transform_indices = @transform_2, window_bounds = array<i64: 8, 16, 100>}, {transform_indices = @transform_3, window_bounds = array<i64: 8, 8, 16>}, {transform_indices = @transform_4, window_bounds = array<i64: 8, 32, 1>}, {transform_indices = @transform_5, window_bounds = array<i64: 8, 32>}, {pipeline_mode = #tpu.pipeline_mode<synchronous>, transform_indices = @transform_6, window_bounds = array<i64: 1, 32>}, {pipeline_mode = #tpu.pipeline_mode<synchronous>, transform_indices = @transform_7, window_bounds = array<i64: 1, 32>}, {pipeline_mode = #tpu.pipeline_mode<synchronous>, transform_indices = @transform_8, window_bounds = array<i64: 32, 128>}, {pipeline_mode = #tpu.pipeline_mode<synchronous>, transform_indices = @transform_9, window_bounds = array<i64: 100, 128>}, {pipeline_mode = #tpu.pipeline_mode<synchronous>, transform_indices = @transform_10, window_bounds = array<i64: 1, 128>}, {pipeline_mode = #tpu.pipeline_mode<synchronous>, transform_indices = @transform_11, window_bounds = array<i64: 128, 128>}, {pipeline_mode = #tpu.pipeline_mode<synchronous>, transform_indices = @transform_12, window_bounds = array<i64: 1, 128>}, {pipeline_mode = #tpu.pipeline_mode<synchronous>, transform_indices = @transform_13, window_bounds = array<i64: 128, 128>}, {pipeline_mode = #tpu.pipeline_mode<synchronous>, transform_indices = @transform_14, window_bounds = array<i64: 1, 128>}, {pipeline_mode = #tpu.pipeline_mode<synchronous>, transform_indices = @transform_15, window_bounds = array<i64: 1, 128>}, {pipeline_mode = #tpu.pipeline_mode<synchronous>, transform_indices = @transform_16, window_bounds = array<i64: 1, 128>}, {pipeline_mode = #tpu.pipeline_mode<synchronous>, transform_indices = @transform_17, window_bounds = array<i64: 1, 128>}, {pipeline_mode = #tpu.pipeline_mode<synchronous>, transform_indices = @transform_18, window_bounds = array<i64: 1, 1>}, {pipeline_mode = #tpu.pipeline_mode<synchronous>, transform_indices = @transform_19, window_bounds = array<i64: 1, 100>}, {pipeline_mode = #tpu.pipeline_mode<synchronous>, transform_indices = @transform_20, window_bounds = array<i64: 1, 100>}, {pipeline_mode = #tpu.pipeline_mode<synchronous>, transform_indices = @transform_21, window_bounds = array<i64: 8, 32>}, {transform_indices = @transform_22, window_bounds = array<i64: 8, 512>}, {transform_indices = @transform_23, window_bounds = array<i64: 8, 8>}]} {
    %c0 = arith.constant 0 : index
    %c0_0 = arith.constant 0 : index
    %c0_1 = arith.constant 0 : index
    %0 = vector.load %arg1[%c0, %c0_0, %c0_1] : memref<8x16x32xf32, #tpu.memory_space<vmem>>, vector<8x16x32xf32>
    %c0_2 = arith.constant 0 : index
    %c0_3 = arith.constant 0 : index
    %c0_4 = arith.constant 0 : index
    %1 = vector.load %arg2[%c0_2, %c0_3, %c0_4] : memref<8x1x16xf32, #tpu.memory_space<vmem>>, vector<8x1x16xf32>
    %c0_5 = arith.constant 0 : index
    %c0_6 = arith.constant 0 : index
    %c0_7 = arith.constant 0 : index
    %2 = vector.load %arg4[%c0_5, %c0_6, %c0_7] : memref<8x8x16xf32, #tpu.memory_space<vmem>>, vector<8x8x16xf32>
    %3 = vector.broadcast %1 : vector<8x1x16xf32> to vector<8x8x16xf32>
    %4 = arith.mulf %2, %3 : vector<8x8x16xf32>
    "tpu.trace_start"() <{level = 10 : i32, message = "bsa,baf->bsf"}> : () -> ()
    %cst = arith.constant dense<0.000000e+00> : vector<8x8x32xf32>
    %5 = tpu.matmul %4, %0, %cst {dimension_numbers = #tpu.dot_dimension_numbers<[2], [1], [1], [2], [0, 0, 0, 1, 1, 2], [0], [0]>} : vector<8x8x16xf32>, vector<8x16x32xf32>, vector<8x8x32xf32> -> vector<8x8x32xf32>
    "tpu.trace_stop"() : () -> ()
    %cst_8 = arith.constant dense<0.000000e+00> : vector<8x8xf32>
    %6 = vector.multi_reduction <add>, %4, %cst_8 [2] : vector<8x8x16xf32> to vector<8x8xf32>
    %7 = vector.shape_cast %6 : vector<8x8xf32> to vector<8x8x1xf32>
    %cst_9 = arith.constant 9.99999974E-5 : f32
    %8 = vector.broadcast %cst_9 : f32 to vector<8x8x1xf32>
    %9 = arith.addf %7, %8 : vector<8x8x1xf32>
    %10 = vector.broadcast %9 : vector<8x8x1xf32> to vector<8x8x32xf32>
    %11 = arith.divf %5, %10 : vector<8x8x32xf32>
    %cst_10 = arith.constant dense<0.000000e+00> : vector<8x8xf32>
    %12 = vector.multi_reduction <add>, %11, %cst_10 [2] : vector<8x8x32xf32> to vector<8x8xf32>
    %13 = vector.shape_cast %12 : vector<8x8xf32> to vector<8x8x1xf32>
    %cst_11 = arith.constant 3.200000e+01 : f32
    %14 = vector.broadcast %cst_11 : f32 to vector<8x8x1xf32>
    %15 = arith.divf %13, %14 : vector<8x8x1xf32>
    %16 = vector.broadcast %15 : vector<8x8x1xf32> to vector<8x8x32xf32>
    %17 = arith.subf %11, %16 : vector<8x8x32xf32>
    %18 = arith.mulf %17, %17 : vector<8x8x32xf32>
    %cst_12 = arith.constant dense<0.000000e+00> : vector<8x8xf32>
    %19 = vector.multi_reduction <add>, %18, %cst_12 [2] : vector<8x8x32xf32> to vector<8x8xf32>
    %20 = vector.shape_cast %19 : vector<8x8xf32> to vector<8x8x1xf32>
    %cst_13 = arith.constant 3.200000e+01 : f32
    %21 = vector.broadcast %cst_13 : f32 to vector<8x8x1xf32>
    %22 = arith.divf %20, %21 : vector<8x8x1xf32>
    %23 = vector.broadcast %15 : vector<8x8x1xf32> to vector<8x8x32xf32>
    %24 = arith.subf %11, %23 : vector<8x8x32xf32>
    %cst_14 = arith.constant 9.99999974E-6 : f32
    %25 = vector.broadcast %cst_14 : f32 to vector<8x8x1xf32>
    %26 = arith.addf %22, %25 : vector<8x8x1xf32>
    %27 = math.rsqrt %26 : vector<8x8x1xf32>
    %28 = vector.broadcast %27 : vector<8x8x1xf32> to vector<8x8x32xf32>
    %29 = arith.mulf %24, %28 : vector<8x8x32xf32>
    %c0_15 = arith.constant 0 : index
    %c0_16 = arith.constant 0 : index
    %30 = vector.load %arg7[%c0_15, %c0_16] : memref<1x32xf32, #tpu.memory_space<vmem>>, vector<1x32xf32>
    %31 = vector.shape_cast %30 : vector<1x32xf32> to vector<1x1x32xf32>
    %32 = vector.broadcast %31 : vector<1x1x32xf32> to vector<8x8x32xf32>
    %33 = arith.mulf %29, %32 : vector<8x8x32xf32>
    %c0_17 = arith.constant 0 : index
    %c0_18 = arith.constant 0 : index
    %34 = vector.load %arg8[%c0_17, %c0_18] : memref<1x32xf32, #tpu.memory_space<vmem>>, vector<1x32xf32>
    %35 = vector.shape_cast %34 : vector<1x32xf32> to vector<1x1x32xf32>
    %36 = vector.broadcast %35 : vector<1x1x32xf32> to vector<8x8x32xf32>
    %37 = arith.addf %33, %36 : vector<8x8x32xf32>
    %c0_19 = arith.constant 0 : index
    %c0_20 = arith.constant 0 : index
    %c0_21 = arith.constant 0 : index
    %38 = vector.load %arg3[%c0_19, %c0_20, %c0_21] : memref<8x16x100xf32, #tpu.memory_space<vmem>>, vector<8x16x100xf32>
    "tpu.trace_start"() <{level = 10 : i32, message = "bsa,bae->bse"}> : () -> ()
    %cst_22 = arith.constant dense<0.000000e+00> : vector<8x8x100xf32>
    %39 = tpu.matmul %2, %38, %cst_22 {dimension_numbers = #tpu.dot_dimension_numbers<[2], [1], [1], [2], [0, 0, 0, 1, 1, 2], [0], [0]>} : vector<8x8x16xf32>, vector<8x16x100xf32>, vector<8x8x100xf32> -> vector<8x8x100xf32>
    "tpu.trace_stop"() : () -> ()
    %c0_23 = arith.constant 0 : index
    %c0_24 = arith.constant 0 : index
    %40 = vector.load %arg21[%c0_23, %c0_24] : memref<1x100xf32, #tpu.memory_space<vmem>>, vector<1x100xf32>
    %41 = vector.shape_cast %40 : vector<1x100xf32> to vector<1x1x100xf32>
    %42 = vector.broadcast %41 : vector<1x1x100xf32> to vector<8x8x100xf32>
    %43 = arith.minimumf %39, %42 : vector<8x8x100xf32>
    %c0_25 = arith.constant 0 : index
    %c0_26 = arith.constant 0 : index
    %44 = vector.load %arg20[%c0_25, %c0_26] : memref<1x100xf32, #tpu.memory_space<vmem>>, vector<1x100xf32>
    %45 = vector.shape_cast %44 : vector<1x100xf32> to vector<1x1x100xf32>
    %46 = vector.broadcast %45 : vector<1x1x100xf32> to vector<8x8x100xf32>
    %47 = arith.cmpf oge, %46, %43 : vector<8x8x100xf32>
    %48 = arith.extui %47 : vector<8x8x100xi1> to vector<8x8x100xi32>
    %49 = arith.sitofp %48 : vector<8x8x100xi32> to vector<8x8x100xf32>
    %50 = vector.shape_cast %37 : vector<8x8x32xf32> to vector<64x32xf32>
    %51 = vector.shape_cast %49 : vector<8x8x100xf32> to vector<64x100xf32>
    %52 = arith.truncf %50 : vector<64x32xf32> to vector<64x32xbf16>
    %c0_27 = arith.constant 0 : index
    %c0_28 = arith.constant 0 : index
    %53 = vector.load %arg9[%c0_27, %c0_28] : memref<32x128xbf16, #tpu.memory_space<vmem>>, vector<32x128xbf16>
    %cst_29 = arith.constant dense<0.000000e+00> : vector<64x128xf32>
    %54 = tpu.matmul %52, %53, %cst_29 {dimension_numbers = #tpu.dot_dimension_numbers<[1], [0], [0], [1], [0, 0, 1, 1], [], []>} : vector<64x32xbf16>, vector<32x128xbf16>, vector<64x128xf32> -> vector<64x128xf32>
    %55 = arith.truncf %51 : vector<64x100xf32> to vector<64x100xbf16>
    %c0_30 = arith.constant 0 : index
    %c0_31 = arith.constant 0 : index
    %56 = vector.load %arg10[%c0_30, %c0_31] : memref<100x128xbf16, #tpu.memory_space<vmem>>, vector<100x128xbf16>
    %cst_32 = arith.constant dense<0.000000e+00> : vector<64x128xf32>
    %57 = tpu.matmul %55, %56, %cst_32 {dimension_numbers = #tpu.dot_dimension_numbers<[1], [0], [0], [1], [0, 0, 1, 1], [], []>} : vector<64x100xbf16>, vector<100x128xbf16>, vector<64x128xf32> -> vector<64x128xf32>
    %58 = arith.addf %54, %57 : vector<64x128xf32>
    %c0_33 = arith.constant 0 : index
    %c0_34 = arith.constant 0 : index
    %59 = vector.load %arg11[%c0_33, %c0_34] : memref<1x128xf32, #tpu.memory_space<vmem>>, vector<1x128xf32>
    %60 = vector.broadcast %59 : vector<1x128xf32> to vector<64x128xf32>
    %61 = arith.addf %58, %60 : vector<64x128xf32>
    %cst_35 = arith.constant 0.000000e+00 : f32
    %62 = vector.broadcast %cst_35 : f32 to vector<64x128xf32>
    %63 = arith.maximumf %61, %62 : vector<64x128xf32>
    %64 = arith.truncf %63 : vector<64x128xf32> to vector<64x128xbf16>
    %c0_36 = arith.constant 0 : index
    %c0_37 = arith.constant 0 : index
    %65 = vector.load %arg12[%c0_36, %c0_37] : memref<128x128xbf16, #tpu.memory_space<vmem>>, vector<128x128xbf16>
    %cst_38 = arith.constant dense<0.000000e+00> : vector<64x128xf32>
    %66 = tpu.matmul %64, %65, %cst_38 {dimension_numbers = #tpu.dot_dimension_numbers<[1], [0], [0], [1], [0, 0, 1, 1], [], []>} : vector<64x128xbf16>, vector<128x128xbf16>, vector<64x128xf32> -> vector<64x128xf32>
    %c0_39 = arith.constant 0 : index
    %c0_40 = arith.constant 0 : index
    %67 = vector.load %arg13[%c0_39, %c0_40] : memref<1x128xf32, #tpu.memory_space<vmem>>, vector<1x128xf32>
    %68 = vector.broadcast %67 : vector<1x128xf32> to vector<64x128xf32>
    %69 = arith.addf %66, %68 : vector<64x128xf32>
    %cst_41 = arith.constant 0.000000e+00 : f32
    %70 = vector.broadcast %cst_41 : f32 to vector<64x128xf32>
    %71 = arith.maximumf %69, %70 : vector<64x128xf32>
    %72 = arith.truncf %71 : vector<64x128xf32> to vector<64x128xbf16>
    %c0_42 = arith.constant 0 : index
    %c0_43 = arith.constant 0 : index
    %73 = vector.load %arg14[%c0_42, %c0_43] : memref<128x128xbf16, #tpu.memory_space<vmem>>, vector<128x128xbf16>
    %cst_44 = arith.constant dense<0.000000e+00> : vector<64x128xf32>
    %74 = tpu.matmul %72, %73, %cst_44 {dimension_numbers = #tpu.dot_dimension_numbers<[1], [0], [0], [1], [0, 0, 1, 1], [], []>} : vector<64x128xbf16>, vector<128x128xbf16>, vector<64x128xf32> -> vector<64x128xf32>
    %c0_45 = arith.constant 0 : index
    %c0_46 = arith.constant 0 : index
    %75 = vector.load %arg15[%c0_45, %c0_46] : memref<1x128xf32, #tpu.memory_space<vmem>>, vector<1x128xf32>
    %76 = vector.broadcast %75 : vector<1x128xf32> to vector<64x128xf32>
    %77 = arith.addf %74, %76 : vector<64x128xf32>
    %cst_47 = arith.constant 0.000000e+00 : f32
    %78 = vector.broadcast %cst_47 : f32 to vector<64x128xf32>
    %79 = arith.maximumf %77, %78 : vector<64x128xf32>
    %cst_48 = arith.constant dense<0.000000e+00> : vector<64xf32>
    %80 = vector.multi_reduction <add>, %79, %cst_48 [1] : vector<64x128xf32> to vector<64xf32>
    %81 = vector.shape_cast %80 : vector<64xf32> to vector<64x1xf32>
    %cst_49 = arith.constant 1.280000e+02 : f32
    %82 = vector.broadcast %cst_49 : f32 to vector<64x1xf32>
    %83 = arith.divf %81, %82 : vector<64x1xf32>
    %84 = vector.broadcast %83 : vector<64x1xf32> to vector<64x128xf32>
    %85 = arith.subf %79, %84 : vector<64x128xf32>
    %86 = arith.mulf %85, %85 : vector<64x128xf32>
    %cst_50 = arith.constant dense<0.000000e+00> : vector<64xf32>
    %87 = vector.multi_reduction <add>, %86, %cst_50 [1] : vector<64x128xf32> to vector<64xf32>
    %88 = vector.shape_cast %87 : vector<64xf32> to vector<64x1xf32>
    %cst_51 = arith.constant 1.280000e+02 : f32
    %89 = vector.broadcast %cst_51 : f32 to vector<64x1xf32>
    %90 = arith.divf %88, %89 : vector<64x1xf32>
    %91 = vector.broadcast %83 : vector<64x1xf32> to vector<64x128xf32>
    %92 = arith.subf %79, %91 : vector<64x128xf32>
    %cst_52 = arith.constant 9.99999974E-6 : f32
    %93 = vector.broadcast %cst_52 : f32 to vector<64x1xf32>
    %94 = arith.addf %90, %93 : vector<64x1xf32>
    %95 = math.rsqrt %94 : vector<64x1xf32>
    %96 = vector.broadcast %95 : vector<64x1xf32> to vector<64x128xf32>
    %97 = arith.mulf %92, %96 : vector<64x128xf32>
    %c0_53 = arith.constant 0 : index
    %c0_54 = arith.constant 0 : index
    %98 = vector.load %arg16[%c0_53, %c0_54] : memref<1x128xf32, #tpu.memory_space<vmem>>, vector<1x128xf32>
    %99 = vector.broadcast %98 : vector<1x128xf32> to vector<64x128xf32>
    %100 = arith.mulf %97, %99 : vector<64x128xf32>
    %c0_55 = arith.constant 0 : index
    %c0_56 = arith.constant 0 : index
    %101 = vector.load %arg17[%c0_55, %c0_56] : memref<1x128xf32, #tpu.memory_space<vmem>>, vector<1x128xf32>
    %102 = vector.broadcast %101 : vector<1x128xf32> to vector<64x128xf32>
    %103 = arith.addf %100, %102 : vector<64x128xf32>
    %104 = vector.shape_cast %103 : vector<64x128xf32> to vector<8x8x128xf32>
    %c0_57 = arith.constant 0 : index
    %c0_58 = arith.constant 0 : index
    %105 = vector.load %arg18[%c0_57, %c0_58] : memref<1x128xf32, #tpu.memory_space<vmem>>, vector<1x128xf32>
    %106 = vector.shape_cast %105 : vector<1x128xf32> to vector<1x1x128xf32>
    %107 = vector.broadcast %106 : vector<1x1x128xf32> to vector<8x8x128xf32>
    %108 = arith.mulf %104, %107 : vector<8x8x128xf32>
    %cst_59 = arith.constant dense<0.000000e+00> : vector<8x8xf32>
    %109 = vector.multi_reduction <add>, %108, %cst_59 [2] : vector<8x8x128xf32> to vector<8x8xf32>
    %c0_60 = arith.constant 0 : index
    %c0_61 = arith.constant 0 : index
    %110 = vector.load %arg19[%c0_60, %c0_61] : memref<1x1xf32, #tpu.memory_space<vmem>>, vector<1x1xf32>
    %111 = vector.broadcast %110 : vector<1x1xf32> to vector<8x8xf32>
    %112 = arith.addf %109, %111 : vector<8x8xf32>
    %cst_62 = arith.constant dense<0xFF800000> : vector<8xf32>
    %113 = vector.multi_reduction <maximumf>, %112, %cst_62 [1] : vector<8x8xf32> to vector<8xf32>
    %114 = vector.shape_cast %113 : vector<8xf32> to vector<8x1xf32>
    %115 = vector.broadcast %114 : vector<8x1xf32> to vector<8x8xf32>
    %116 = arith.subf %112, %115 : vector<8x8xf32>
    %117 = math.exp %116 : vector<8x8xf32>
    %cst_63 = arith.constant dense<0.000000e+00> : vector<8xf32>
    %118 = vector.multi_reduction <add>, %117, %cst_63 [1] : vector<8x8xf32> to vector<8xf32>
    %119 = vector.shape_cast %118 : vector<8xf32> to vector<8x1xf32>
    %120 = vector.broadcast %119 : vector<8x1xf32> to vector<8x8xf32>
    %121 = arith.divf %117, %120 : vector<8x8xf32>
    %c0_64 = arith.constant 0 : index
    %c0_65 = arith.constant 0 : index
    %122 = vector.load %arg24[%c0_64, %c0_65] : memref<8x8xf32, #tpu.memory_space<vmem>>, vector<8x8xf32>
    tpu.vector_store %arg24[%c0_64, %c0_65], %121 {strides = array<i32>} : memref<8x8xf32, #tpu.memory_space<vmem>>, vector<8x8xf32>,
    %c0_66 = arith.constant 0 : index
    %c0_67 = arith.constant 0 : index
    %123 = vector.load %arg22[%c0_66, %c0_67] : memref<8x32xf32, #tpu.memory_space<vmem>>, vector<8x32xf32>
    %cst_68 = arith.constant dense<0.000000e+00> : vector<8x32xf32>
    %124 = tpu.matmul %121, %123, %cst_68 {dimension_numbers = #tpu.dot_dimension_numbers<[1], [0], [0], [1], [0, 0, 1, 1], [], []>} : vector<8x8xf32>, vector<8x32xf32>, vector<8x32xf32> -> vector<8x32xf32>
    %c0_69 = arith.constant 0 : index
    %c0_70 = arith.constant 0 : index
    %125 = vector.load %arg6[%c0_69, %c0_70] : memref<8x32xf32, #tpu.memory_space<vmem>>, vector<8x32xf32>
    %126 = arith.mulf %124, %125 : vector<8x32xf32>
    %127 = tpu.iota {dimensions = array<i32: 2>} : vector<1x1x512xi32>
    %c0_71 = arith.constant 0 : index
    %c0_72 = arith.constant 0 : index
    %c0_73 = arith.constant 0 : index
    %128 = vector.load %arg5[%c0_71, %c0_72, %c0_73] : memref<8x32x1xi32, #tpu.memory_space<vmem>>, vector<8x32x1xi32>
    %129 = vector.broadcast %128 : vector<8x32x1xi32> to vector<8x32x512xi32>
    %130 = vector.broadcast %127 : vector<1x1x512xi32> to vector<8x32x512xi32>
    %131 = arith.cmpi eq, %129, %130 : vector<8x32x512xi32>
    %132 = arith.extui %131 : vector<8x32x512xi1> to vector<8x32x512xi32>
    %133 = arith.sitofp %132 : vector<8x32x512xi32> to vector<8x32x512xf32>
    %134 = vector.shape_cast %126 : vector<8x32xf32> to vector<8x1x32xf32>
    "tpu.trace_start"() <{level = 10 : i32, message = "bok,bkm->bom"}> : () -> ()
    %cst_74 = arith.constant dense<0.000000e+00> : vector<8x1x512xf32>
    %135 = tpu.matmul %134, %133, %cst_74 {dimension_numbers = #tpu.dot_dimension_numbers<[2], [1], [1], [2], [0, 0, 0, 1, 1, 2], [0], [0]>} : vector<8x1x32xf32>, vector<8x32x512xf32>, vector<8x1x512xf32> -> vector<8x1x512xf32>
    "tpu.trace_stop"() : () -> ()
    %136 = vector.shape_cast %135 : vector<8x1x512xf32> to vector<8x512xf32>
    %c0_75 = arith.constant 0 : index
    %c0_76 = arith.constant 0 : index
    %137 = vector.load %arg23[%c0_75, %c0_76] : memref<8x512xf32, #tpu.memory_space<vmem>>, vector<8x512xf32>
    tpu.vector_store %arg23[%c0_75, %c0_76], %136 {strides = array<i32>} : memref<8x512xf32, #tpu.memory_space<vmem>>, vector<8x512xf32>,
    return
  }
  func.func @transform_0(%arg0: i32) -> (i32, i32, i32) {
    %c0_i32 = arith.constant 0 : i32
    %c0_i32_0 = arith.constant 0 : i32
    %c0_i32_1 = arith.constant 0 : i32
    return %arg0, %c0_i32, %c0_i32_0 : i32, i32, i32
  }
  func.func @transform_1(%arg0: i32) -> (i32, i32, i32) {
    %c0_i32 = arith.constant 0 : i32
    %c0_i32_0 = arith.constant 0 : i32
    %c0_i32_1 = arith.constant 0 : i32
    return %arg0, %c0_i32, %c0_i32_0 : i32, i32, i32
  }
  func.func @transform_2(%arg0: i32) -> (i32, i32, i32) {
    %c0_i32 = arith.constant 0 : i32
    %c0_i32_0 = arith.constant 0 : i32
    %c0_i32_1 = arith.constant 0 : i32
    return %arg0, %c0_i32, %c0_i32_0 : i32, i32, i32
  }
  func.func @transform_3(%arg0: i32) -> (i32, i32, i32) {
    %c0_i32 = arith.constant 0 : i32
    %c0_i32_0 = arith.constant 0 : i32
    %c0_i32_1 = arith.constant 0 : i32
    return %arg0, %c0_i32, %c0_i32_0 : i32, i32, i32
  }
  func.func @transform_4(%arg0: i32) -> (i32, i32, i32) {
    %c0_i32 = arith.constant 0 : i32
    %c0_i32_0 = arith.constant 0 : i32
    %c0_i32_1 = arith.constant 0 : i32
    return %arg0, %c0_i32, %c0_i32_0 : i32, i32, i32
  }
  func.func @transform_5(%arg0: i32) -> (i32, i32) {
    %c0_i32 = arith.constant 0 : i32
    %c0_i32_0 = arith.constant 0 : i32
    return %arg0, %c0_i32 : i32, i32
  }
  func.func @transform_6(%arg0: i32) -> (i32, i32) {
    %c0_i32 = arith.constant 0 : i32
    %c0_i32_0 = arith.constant 0 : i32
    %c0_i32_1 = arith.constant 0 : i32
    return %c0_i32, %c0_i32_0 : i32, i32
  }
  func.func @transform_7(%arg0: i32) -> (i32, i32) {
    %c0_i32 = arith.constant 0 : i32
    %c0_i32_0 = arith.constant 0 : i32
    %c0_i32_1 = arith.constant 0 : i32
    return %c0_i32, %c0_i32_0 : i32, i32
  }
  func.func @transform_8(%arg0: i32) -> (i32, i32) {
    %c0_i32 = arith.constant 0 : i32
    %c0_i32_0 = arith.constant 0 : i32
    %c0_i32_1 = arith.constant 0 : i32
    return %c0_i32, %c0_i32_0 : i32, i32
  }
  func.func @transform_9(%arg0: i32) -> (i32, i32) {
    %c0_i32 = arith.constant 0 : i32
    %c0_i32_0 = arith.constant 0 : i32
    %c0_i32_1 = arith.constant 0 : i32
    return %c0_i32, %c0_i32_0 : i32, i32
  }
  func.func @transform_10(%arg0: i32) -> (i32, i32) {
    %c0_i32 = arith.constant 0 : i32
    %c0_i32_0 = arith.constant 0 : i32
    %c0_i32_1 = arith.constant 0 : i32
    return %c0_i32, %c0_i32_0 : i32, i32
  }
  func.func @transform_11(%arg0: i32) -> (i32, i32) {
    %c0_i32 = arith.constant 0 : i32
    %c0_i32_0 = arith.constant 0 : i32
    %c0_i32_1 = arith.constant 0 : i32
    return %c0_i32, %c0_i32_0 : i32, i32
  }
  func.func @transform_12(%arg0: i32) -> (i32, i32) {
    %c0_i32 = arith.constant 0 : i32
    %c0_i32_0 = arith.constant 0 : i32
    %c0_i32_1 = arith.constant 0 : i32
    return %c0_i32, %c0_i32_0 : i32, i32
  }
  func.func @transform_13(%arg0: i32) -> (i32, i32) {
    %c0_i32 = arith.constant 0 : i32
    %c0_i32_0 = arith.constant 0 : i32
    %c0_i32_1 = arith.constant 0 : i32
    return %c0_i32, %c0_i32_0 : i32, i32
  }
  func.func @transform_14(%arg0: i32) -> (i32, i32) {
    %c0_i32 = arith.constant 0 : i32
    %c0_i32_0 = arith.constant 0 : i32
    %c0_i32_1 = arith.constant 0 : i32
    return %c0_i32, %c0_i32_0 : i32, i32
  }
  func.func @transform_15(%arg0: i32) -> (i32, i32) {
    %c0_i32 = arith.constant 0 : i32
    %c0_i32_0 = arith.constant 0 : i32
    %c0_i32_1 = arith.constant 0 : i32
    return %c0_i32, %c0_i32_0 : i32, i32
  }
  func.func @transform_16(%arg0: i32) -> (i32, i32) {
    %c0_i32 = arith.constant 0 : i32
    %c0_i32_0 = arith.constant 0 : i32
    %c0_i32_1 = arith.constant 0 : i32
    return %c0_i32, %c0_i32_0 : i32, i32
  }
  func.func @transform_17(%arg0: i32) -> (i32, i32) {
    %c0_i32 = arith.constant 0 : i32
    %c0_i32_0 = arith.constant 0 : i32
    %c0_i32_1 = arith.constant 0 : i32
    return %c0_i32, %c0_i32_0 : i32, i32
  }
  func.func @transform_18(%arg0: i32) -> (i32, i32) {
    %c0_i32 = arith.constant 0 : i32
    %c0_i32_0 = arith.constant 0 : i32
    %c0_i32_1 = arith.constant 0 : i32
    return %c0_i32, %c0_i32_0 : i32, i32
  }
  func.func @transform_19(%arg0: i32) -> (i32, i32) {
    %c0_i32 = arith.constant 0 : i32
    %c0_i32_0 = arith.constant 0 : i32
    %c0_i32_1 = arith.constant 0 : i32
    return %c0_i32, %c0_i32_0 : i32, i32
  }
  func.func @transform_20(%arg0: i32) -> (i32, i32) {
    %c0_i32 = arith.constant 0 : i32
    %c0_i32_0 = arith.constant 0 : i32
    %c0_i32_1 = arith.constant 0 : i32
    return %c0_i32, %c0_i32_0 : i32, i32
  }
  func.func @transform_21(%arg0: i32) -> (i32, i32) {
    %c0_i32 = arith.constant 0 : i32
    %c0_i32_0 = arith.constant 0 : i32
    %c0_i32_1 = arith.constant 0 : i32
    return %c0_i32, %c0_i32_0 : i32, i32
  }
  func.func @transform_22(%arg0: i32) -> (i32, i32) {
    %c0_i32 = arith.constant 0 : i32
    %c0_i32_0 = arith.constant 0 : i32
    return %arg0, %c0_i32 : i32, i32
  }
  func.func @transform_23(%arg0: i32) -> (i32, i32) {
    %c0_i32 = arith.constant 0 : i32
    %c0_i32_0 = arith.constant 0 : i32
    return %arg0, %c0_i32 : i32, i32
  }
}

</mosaic_0001>

<llo_original>
// kernel: tpu_custom_call.1
$region0: #{tpu_custom_call.1}
  #allocation0 [shape = 'u32[]', space=smem, size = 0x4, offset = 0x4, fixed_abs, tag = 'smem constant byte address 0x4 - core index']
  #allocation1 [shape = 'u32[144,128]{1,0:T(1,128)}', space=vmem, size = 0x12000, scoped, tag = 'internal scratch']
  #allocation2 [shape = 'f32[1,1]{1,0:T(1,128)S(1)}', space=vmem, size = 0x200, scoped, tag = 'scoped memory for tpu_custom_call.1']
  %s0 = inlined_call_operand.vmem [shape: f32[16,16,32], index: 0, kind: input, shape index: {}]
  %s1 = inlined_call_operand.hbm [shape: f32[16,1,16], index: 1, kind: input, shape index: {}]
  %s2 = inlined_call_operand.vmem [shape: f32[16,16,100], index: 2, kind: input, shape index: {}]
  %s3 = inlined_call_operand.hbm [shape: f32[16,8,16], index: 3, kind: input, shape index: {}]
  %s4 = inlined_call_operand.vmem [shape: s32[16,32,1], index: 4, kind: input, shape index: {}]
  %s5 = inlined_call_operand.hbm [shape: f32[16,32], index: 5, kind: input, shape index: {}]
  %s6 = inlined_call_operand.vmem [shape: f32[1,32], index: 6, kind: input, shape index: {}]
  %s7 = inlined_call_operand.vmem [shape: f32[1,32], index: 7, kind: input, shape index: {}]
  %s8 = inlined_call_operand.hbm [shape: bf16[32,128], index: 8, kind: input, shape index: {}]
  %s9 = inlined_call_operand.hbm [shape: bf16[100,128], index: 9, kind: input, shape index: {}]
  %s10 = inlined_call_operand.vmem [shape: f32[1,128], index: 10, kind: input, shape index: {}]
  %s11 = inlined_call_operand.hbm [shape: bf16[128,128], index: 11, kind: input, shape index: {}]
  %s12 = inlined_call_operand.vmem [shape: f32[1,128], index: 12, kind: input, shape index: {}]
  %s13 = inlined_call_operand.vmem [shape: bf16[128,128], index: 13, kind: input, shape index: {}]
  %s14 = inlined_call_operand.hbm [shape: f32[1,128], index: 14, kind: input, shape index: {}]
  %s15 = inlined_call_operand.hbm [shape: f32[1,128], index: 15, kind: input, shape index: {}]
  %s16 = inlined_call_operand.hbm [shape: f32[1,128], index: 16, kind: input, shape index: {}]
  %s17 = inlined_call_operand.vmem [shape: f32[1,128], index: 17, kind: input, shape index: {}]
  %s18 = inlined_call_operand.<no memory space> [shape: f32[1,1], index: 18, kind: input, shape index: {}]
  %s19 = inlined_call_operand.vmem [shape: f32[1,100], index: 19, kind: input, shape index: {}]
  %s20 = inlined_call_operand.vmem [shape: f32[1,100], index: 20, kind: input, shape index: {}]
  %s21 = inlined_call_operand.vmem [shape: f32[8,32], index: 21, kind: input, shape index: {}]
  %s22 = inlined_call_operand.hbm [shape: f32[16,512], index: 22, kind: output, shape index: {0}]
  %s23 = inlined_call_operand.vmem [shape: f32[16,8], index: 23, kind: output, shape index: {1}]
  %24 = xla_tuple %s22, %s23
  %s25 = sld [smem:[#allocation0]]
  $region165: #{tpu_custom_call.1} parent=0
    _
  %s27 = ssub.s32 1, %s25
  %s28 = scalar_select 0, %s27, %s25
  %v29 = vstv %s18
  %30 = vst [vmem:[#allocation2] sm:$0x1] %v29
  $region1: #{tpu_custom_call.1} parent=0
    #allocation3 [shape = 'u8[8192]{0}', space=vmem, size = 0x2000, scoped, tag = 'input window, operand 1']
    #allocation4 [shape = 's32[2]{0}', space=sflag, size = 0x8, scoped, tag = 'scoped memory for tpu_custom_call.1']
    #allocation5 [shape = 's32[2]{0}', space=sflag, size = 0x8, scoped, tag = 'scoped memory for tpu_custom_call.1']
    #allocation6 [shape = 'u8[65536]{0}', space=vmem, size = 0x10000, scoped, tag = 'input window, operand 3']
    #allocation7 [shape = 's32[2]{0}', space=sflag, size = 0x8, scoped, tag = 'scoped memory for tpu_custom_call.1']
    #allocation8 [shape = 'u8[8192]{0}', space=vmem, size = 0x2000, scoped, tag = 'input window, operand 5']
    #allocation9 [shape = 'u8[8192]{0}', space=vmem, size = 0x2000, scoped, tag = 'input window, operand 8, single buffered']
    #allocation10 [shape = 's32[1]{0}', space=sflag, size = 0x4, scoped, tag = 'scoped memory for tpu_custom_call.1']
    #allocation11 [shape = 'u8[26624]{0}', space=vmem, size = 0x6800, scoped, tag = 'input window, operand 9, single buffered']
    #allocation12 [shape = 'u8[32768]{0}', space=vmem, size = 0x8000, scoped, tag = 'input window, operand 11, single buffered']
    #allocation13 [shape = 's32[1]{0}', space=sflag, size = 0x4, scoped, tag = 'scoped memory for tpu_custom_call.1']
    #allocation14 [shape = 'u8[512]{0}', space=vmem, size = 0x400, scoped, tag = 'input window, operand 14, single buffered']
    #allocation15 [shape = 'u8[512]{0}', space=vmem, size = 0x400, scoped, tag = 'input window, operand 15, single buffered']
    #allocation16 [shape = 's32[1]{0}', space=sflag, size = 0x4, scoped, tag = 'scoped memory for tpu_custom_call.1']
    #allocation17 [shape = 'u8[512]{0}', space=vmem, size = 0x400, scoped, tag = 'input window, operand 16, single buffered']
    #allocation18 [shape = 'u8[32768]{0}', space=vmem, size = 0x8000, scoped, tag = 'output window, operand 0']
    %31 = vsyncpa [#allocation4], 0
    %s32 = scalar_lea.sflag [#allocation4], 1
    %33 = vsyncpa %s32, 0
    %34 = vsyncpa [#allocation7], 0
    %s35 = scalar_lea.sflag [#allocation7], 1
    %36 = vsyncpa %s35, 0
    %37 = vsyncpa [#allocation10], 0
    %38 = vsyncpa [#allocation13], 0
    %39 = vsyncpa [#allocation16], 0
    %40 = vsyncpa [#allocation5], 0
    %s41 = scalar_lea.sflag [#allocation5], 1
    %42 = vsyncpa %s41, 0
    loop: start=0, step=1, limit=4
    $region2: #{tpu_custom_call.1} parent=1 // loop_pre_header
      _
    $region3: #{tpu_custom_call.1} parent=1 // loop_header
      %s44 = sphi 0, %s48
      %p45 = scmp.ge.s32.totalorder %s44, 4
      %s54 = sphi 0, %s56
      %s57 = sphi 0, %s54
      %s58 = sphi 0, %s57
      %s74 = sphi 0, %s58
      %s80 = sphi 0, %s82
      %s83 = sphi 0, %s80
      %s84 = sphi 0, %s83
      %s100 = sphi 0, %s84
      %s106 = sphi 0, %s108
      %s109 = sphi 0, %s106
      %s110 = sphi 0, %s109
      %s126 = sphi 0, %s110
      %s132 = sphi 0, %s134
      %s135 = sphi 0, %s132
      %s136 = sphi 0, %s135
      %s152 = sphi 0, %s136
      %s158 = sphi 0, %s160
      %s161 = sphi 0, %s158
      %s162 = sphi 0, %s161
      %s178 = sphi 0, %s162
      %s184 = sphi 0, %s186
      %s187 = sphi 0, %s184
      %s188 = sphi 0, %s187
      %s204 = sphi 0, %s188
      %s208 = sphi 0, %s208
      %s210 = sphi 0, %s208
      %s211 = sphi 0, %s210
      %s225 = sphi 0, %s211
      %s229 = sphi 0, %s229
      %s231 = sphi 0, %s229
      %s232 = sphi 0, %s231
      %s246 = sphi 0, %s232
      %s250 = sphi 0, %s250
      %s252 = sphi 0, %s250
      %s253 = sphi 0, %s252
      %s267 = sphi 0, %s253
      %s271 = sphi 0, %s271
      %s273 = sphi 0, %s271
      %s274 = sphi 0, %s273
      %s288 = sphi 0, %s274
      %s292 = sphi 0, %s292
      %s294 = sphi 0, %s292
      %s295 = sphi 0, %s294
      %s309 = sphi 0, %s295
      %s313 = sphi 0, %s313
      %s315 = sphi 0, %s313
      %s316 = sphi 0, %s315
      %s330 = sphi 0, %s316
      %s334 = sphi 0, %s334
      %s336 = sphi 0, %s334
      %s337 = sphi 0, %s336
      %s351 = sphi 0, %s337
      %s355 = sphi 0, %s355
      %s357 = sphi 0, %s355
      %s358 = sphi 0, %s357
      %s372 = sphi 0, %s358
      %s376 = sphi 0, %s376
      %s378 = sphi 0, %s376
      %s379 = sphi 0, %s378
      %s393 = sphi 0, %s379
      %s397 = sphi 0, %s397
      %s399 = sphi 0, %s397
      %s400 = sphi 0, %s399
      %s414 = sphi 0, %s400
      %s418 = sphi 0, %s418
      %s420 = sphi 0, %s418
      %s421 = sphi 0, %s420
      %s435 = sphi 0, %s421
      %s439 = sphi 0, %s439
      %s441 = sphi 0, %s439
      %s442 = sphi 0, %s441
      %s456 = sphi 0, %s442
      %s460 = sphi 0, %s460
      %s462 = sphi 0, %s460
      %s463 = sphi 0, %s462
      %s477 = sphi 0, %s463
      %s481 = sphi 0, %s481
      %s483 = sphi 0, %s481
      %s484 = sphi 0, %s483
      %s498 = sphi 0, %s484
      %s502 = sphi 0, %s502
      %s504 = sphi 0, %s502
      %s505 = sphi 0, %s504
      %s519 = sphi 0, %s505
      %s523 = sphi 0, %s523
      %s525 = sphi 0, %s523
      %s526 = sphi 0, %s525
      %s540 = sphi 0, %s526
      %s546 = sphi 0, %s548
      %s549 = sphi 0, %s546
      %s550 = sphi 0, %s549
      %s566 = sphi 0, %s550
      %s572 = sphi 0, %s574
      %s575 = sphi 0, %s572
      %s576 = sphi 0, %s575
      %s592 = sphi 0, %s576
    $region4: #{tpu_custom_call.1} parent=1 // loop_header_branch
      %47 = sbr.rel (%p45) target = $region8
    $region5: #{tpu_custom_call.1} parent=1 // loop_body
      %s49 = ssub.s32 %s44, 1
      %s50 = ssub.s32 %s44, 2
      %s51 = sadd.s32 %s44, 1
      %s52 = ssub.s32 %s44, %s51
      %p53 = scmp.eq.s32.totalorder %s52, 0
      %s55 = sadd.s32 %s54, 1
      %s56 = scalar_select %p53, %s54, %s55
      %p59 = pneg %p53
      %p60 = scmp.eq.s32.totalorder %s44, 1
      %p61 = por %p59, %p60
      %p62 = scmp.ne.s32.totalorder %s54, %s57
      %p63 = scmp.eq.s32.totalorder %s44, 0
      %p64 = por %p62, %p63
      %p65 = scmp.ne.s32.totalorder %s54, %s57
      %p66 = scmp.eq.s32.totalorder %s49, 1
      %p67 = por %p65, %p66
      %p68 = scmp.ne.s32.totalorder %s57, %s58
      %p69 = scmp.eq.s32.totalorder %s49, 0
      %p70 = por %p68, %p69
      %p71 = scmp.ne.s32.totalorder %s57, %s58
      %p72 = scmp.eq.s32.totalorder %s50, 1
      %p73 = por %p71, %p72
      %p75 = scmp.ne.s32.totalorder %s58, %s74
      %p76 = scmp.eq.s32.totalorder %s50, 0
      %p77 = por %p75, %p76
      %s78 = ssub.s32 %s44, %s51
      %p79 = scmp.eq.s32.totalorder %s78, 0
      %s81 = sadd.s32 %s80, 1
      %s82 = scalar_select %p79, %s80, %s81
      %p85 = pneg %p79
      %p86 = scmp.eq.s32.totalorder %s44, 1
      %p87 = por %p85, %p86
      %p88 = scmp.ne.s32.totalorder %s80, %s83
      %p89 = scmp.eq.s32.totalorder %s44, 0
      %p90 = por %p88, %p89
      %p91 = scmp.ne.s32.totalorder %s80, %s83
      %p92 = scmp.eq.s32.totalorder %s49, 1
      %p93 = por %p91, %p92
      %p94 = scmp.ne.s32.totalorder %s83, %s84
      %p95 = scmp.eq.s32.totalorder %s49, 0
      %p96 = por %p94, %p95
      %p97 = scmp.ne.s32.totalorder %s83, %s84
      %p98 = scmp.eq.s32.totalorder %s50, 1
      %p99 = por %p97, %p98
      %p101 = scmp.ne.s32.totalorder %s84, %s100
      %p102 = scmp.eq.s32.totalorder %s50, 0
      %p103 = por %p101, %p102
      %s104 = ssub.s32 %s44, %s51
      %p105 = scmp.eq.s32.totalorder %s104, 0
      %s107 = sadd.s32 %s106, 1
      %s108 = scalar_select %p105, %s106, %s107
      %p111 = pneg %p105
      %p112 = scmp.eq.s32.totalorder %s44, 1
      %p113 = por %p111, %p112
      %p114 = scmp.ne.s32.totalorder %s106, %s109
      %p115 = scmp.eq.s32.totalorder %s44, 0
      %p116 = por %p114, %p115
      %p117 = scmp.ne.s32.totalorder %s106, %s109
      %p118 = scmp.eq.s32.totalorder %s49, 1
      %p119 = por %p117, %p118
      %p120 = scmp.ne.s32.totalorder %s109, %s110
      %p121 = scmp.eq.s32.totalorder %s49, 0
      %p122 = por %p120, %p121
      %p123 = scmp.ne.s32.totalorder %s109, %s110
      %p124 = scmp.eq.s32.totalorder %s50, 1
      %p125 = por %p123, %p124
      %p127 = scmp.ne.s32.totalorder %s110, %s126
      %p128 = scmp.eq.s32.totalorder %s50, 0
      %p129 = por %p127, %p128
      %s130 = ssub.s32 %s44, %s51
      %p131 = scmp.eq.s32.totalorder %s130, 0
      %s133 = sadd.s32 %s132, 1
      %s134 = scalar_select %p131, %s132, %s133
      %p137 = pneg %p131
      %p138 = scmp.eq.s32.totalorder %s44, 1
      %p139 = por %p137, %p138
      %p140 = scmp.ne.s32.totalorder %s132, %s135
      %p141 = scmp.eq.s32.totalorder %s44, 0
      %p142 = por %p140, %p141
      %p143 = scmp.ne.s32.totalorder %s132, %s135
      %p144 = scmp.eq.s32.totalorder %s49, 1
      %p145 = por %p143, %p144
      %p146 = scmp.ne.s32.totalorder %s135, %s136
      %p147 = scmp.eq.s32.totalorder %s49, 0
      %p148 = por %p146, %p147
      %p149 = scmp.ne.s32.totalorder %s135, %s136
      %p150 = scmp.eq.s32.totalorder %s50, 1
      %p151 = por %p149, %p150
      %p153 = scmp.ne.s32.totalorder %s136, %s152
      %p154 = scmp.eq.s32.totalorder %s50, 0
      %p155 = por %p153, %p154
      %s156 = ssub.s32 %s44, %s51
      %p157 = scmp.eq.s32.totalorder %s156, 0
      %s159 = sadd.s32 %s158, 1
      %s160 = scalar_select %p157, %s158, %s159
      %p163 = pneg %p157
      %p164 = scmp.eq.s32.totalorder %s44, 1
      %p165 = por %p163, %p164
      %p166 = scmp.ne.s32.totalorder %s158, %s161
      %p167 = scmp.eq.s32.totalorder %s44, 0
      %p168 = por %p166, %p167
      %p169 = scmp.ne.s32.totalorder %s158, %s161
      %p170 = scmp.eq.s32.totalorder %s49, 1
      %p171 = por %p169, %p170
      %p172 = scmp.ne.s32.totalorder %s161, %s162
      %p173 = scmp.eq.s32.totalorder %s49, 0
      %p174 = por %p172, %p173
      %p175 = scmp.ne.s32.totalorder %s161, %s162
      %p176 = scmp.eq.s32.totalorder %s50, 1
      %p177 = por %p175, %p176
      %p179 = scmp.ne.s32.totalorder %s162, %s178
      %p180 = scmp.eq.s32.totalorder %s50, 0
      %p181 = por %p179, %p180
      %s182 = ssub.s32 %s44, %s51
      %p183 = scmp.eq.s32.totalorder %s182, 0
      %s185 = sadd.s32 %s184, 1
      %s186 = scalar_select %p183, %s184, %s185
      %p189 = pneg %p183
      %p190 = scmp.eq.s32.totalorder %s44, 1
      %p191 = por %p189, %p190
      %p192 = scmp.ne.s32.totalorder %s184, %s187
      %p193 = scmp.eq.s32.totalorder %s44, 0
      %p194 = por %p192, %p193
      %p195 = scmp.ne.s32.totalorder %s184, %s187
      %p196 = scmp.eq.s32.totalorder %s49, 1
      %p197 = por %p195, %p196
      %p198 = scmp.ne.s32.totalorder %s187, %s188
      %p199 = scmp.eq.s32.totalorder %s49, 0
      %p200 = por %p198, %p199
      %p201 = scmp.ne.s32.totalorder %s187, %s188
      %p202 = scmp.eq.s32.totalorder %s50, 1
      %p203 = por %p201, %p202
      %p205 = scmp.ne.s32.totalorder %s188, %s204
      %p206 = scmp.eq.s32.totalorder %s50, 0
      %p207 = por %p205, %p206
      %s209 = sadd.s32 %s208, 1
      %p212 = scmp.eq.s32.totalorder %s44, 1
      %p213 = scmp.ne.s32.totalorder %s208, %s210
      %p214 = scmp.eq.s32.totalorder %s44, 0
      %p215 = por %p213, %p214
      %p216 = scmp.ne.s32.totalorder %s208, %s210
      %p217 = scmp.eq.s32.totalorder %s49, 1
      %p218 = por %p216, %p217
      %p219 = scmp.ne.s32.totalorder %s210, %s211
      %p220 = scmp.eq.s32.totalorder %s49, 0
      %p221 = por %p219, %p220
      %p222 = scmp.ne.s32.totalorder %s210, %s211
      %p223 = scmp.eq.s32.totalorder %s50, 1
      %p224 = por %p222, %p223
      %p226 = scmp.ne.s32.totalorder %s211, %s225
      %p227 = scmp.eq.s32.totalorder %s50, 0
      %p228 = por %p226, %p227
      %s230 = sadd.s32 %s229, 1
      %p233 = scmp.eq.s32.totalorder %s44, 1
      %p234 = scmp.ne.s32.totalorder %s229, %s231
      %p235 = scmp.eq.s32.totalorder %s44, 0
      %p236 = por %p234, %p235
      %p237 = scmp.ne.s32.totalorder %s229, %s231
      %p238 = scmp.eq.s32.totalorder %s49, 1
      %p239 = por %p237, %p238
      %p240 = scmp.ne.s32.totalorder %s231, %s232
      %p241 = scmp.eq.s32.totalorder %s49, 0
      %p242 = por %p240, %p241
      %p243 = scmp.ne.s32.totalorder %s231, %s232
      %p244 = scmp.eq.s32.totalorder %s50, 1
      %p245 = por %p243, %p244
      %p247 = scmp.ne.s32.totalorder %s232, %s246
      %p248 = scmp.eq.s32.totalorder %s50, 0
      %p249 = por %p247, %p248
      %s251 = sadd.s32 %s250, 1
      %p254 = scmp.eq.s32.totalorder %s44, 1
      %p255 = scmp.ne.s32.totalorder %s250, %s252
      %p256 = scmp.eq.s32.totalorder %s44, 0
      %p257 = por %p255, %p256
      %p258 = scmp.ne.s32.totalorder %s250, %s252
      %p259 = scmp.eq.s32.totalorder %s49, 1
      %p260 = por %p258, %p259
      %p261 = scmp.ne.s32.totalorder %s252, %s253
      %p262 = scmp.eq.s32.totalorder %s49, 0
      %p263 = por %p261, %p262
      %p264 = scmp.ne.s32.totalorder %s252, %s253
      %p265 = scmp.eq.s32.totalorder %s50, 1
      %p266 = por %p264, %p265
      %p268 = scmp.ne.s32.totalorder %s253, %s267
      %p269 = scmp.eq.s32.totalorder %s50, 0
      %p270 = por %p268, %p269
      %s272 = sadd.s32 %s271, 1
      %p275 = scmp.eq.s32.totalorder %s44, 1
      %p276 = scmp.ne.s32.totalorder %s271, %s273
      %p277 = scmp.eq.s32.totalorder %s44, 0
      %p278 = por %p276, %p277
      %p279 = scmp.ne.s32.totalorder %s271, %s273
      %p280 = scmp.eq.s32.totalorder %s49, 1
      %p281 = por %p279, %p280
      %p282 = scmp.ne.s32.totalorder %s273, %s274
      %p283 = scmp.eq.s32.totalorder %s49, 0
      %p284 = por %p282, %p283
      %p285 = scmp.ne.s32.totalorder %s273, %s274
      %p286 = scmp.eq.s32.totalorder %s50, 1
      %p287 = por %p285, %p286
      %p289 = scmp.ne.s32.totalorder %s274, %s288
      %p290 = scmp.eq.s32.totalorder %s50, 0
      %p291 = por %p289, %p290
      %s293 = sadd.s32 %s292, 1
      %p296 = scmp.eq.s32.totalorder %s44, 1
      %p297 = scmp.ne.s32.totalorder %s292, %s294
      %p298 = scmp.eq.s32.totalorder %s44, 0
      %p299 = por %p297, %p298
      %p300 = scmp.ne.s32.totalorder %s292, %s294
      %p301 = scmp.eq.s32.totalorder %s49, 1
      %p302 = por %p300, %p301
      %p303 = scmp.ne.s32.totalorder %s294, %s295
      %p304 = scmp.eq.s32.totalorder %s49, 0
      %p305 = por %p303, %p304
      %p306 = scmp.ne.s32.totalorder %s294, %s295
      %p307 = scmp.eq.s32.totalorder %s50, 1
      %p308 = por %p306, %p307
      %p310 = scmp.ne.s32.totalorder %s295, %s309
      %p311 = scmp.eq.s32.totalorder %s50, 0
      %p312 = por %p310, %p311
      %s314 = sadd.s32 %s313, 1
      %p317 = scmp.eq.s32.totalorder %s44, 1
      %p318 = scmp.ne.s32.totalorder %s313, %s315
      %p319 = scmp.eq.s32.totalorder %s44, 0
      %p320 = por %p318, %p319
      %p321 = scmp.ne.s32.totalorder %s313, %s315
      %p322 = scmp.eq.s32.totalorder %s49, 1
      %p323 = por %p321, %p322
      %p324 = scmp.ne.s32.totalorder %s315, %s316
      %p325 = scmp.eq.s32.totalorder %s49, 0
      %p326 = por %p324, %p325
      %p327 = scmp.ne.s32.totalorder %s315, %s316
      %p328 = scmp.eq.s32.totalorder %s50, 1
      %p329 = por %p327, %p328
      %p331 = scmp.ne.s32.totalorder %s316, %s330
      %p332 = scmp.eq.s32.totalorder %s50, 0
      %p333 = por %p331, %p332
      %s335 = sadd.s32 %s334, 1
      %p338 = scmp.eq.s32.totalorder %s44, 1
      %p339 = scmp.ne.s32.totalorder %s334, %s336
      %p340 = scmp.eq.s32.totalorder %s44, 0
      %p341 = por %p339, %p340
      %p342 = scmp.ne.s32.totalorder %s334, %s336
      %p343 = scmp.eq.s32.totalorder %s49, 1
      %p344 = por %p342, %p343
      %p345 = scmp.ne.s32.totalorder %s336, %s337
      %p346 = scmp.eq.s32.totalorder %s49, 0
      %p347 = por %p345, %p346
      %p348 = scmp.ne.s32.totalorder %s336, %s337
      %p349 = scmp.eq.s32.totalorder %s50, 1
      %p350 = por %p348, %p349
      %p352 = scmp.ne.s32.totalorder %s337, %s351
      %p353 = scmp.eq.s32.totalorder %s50, 0
      %p354 = por %p352, %p353
      %s356 = sadd.s32 %s355, 1
      %p359 = scmp.eq.s32.totalorder %s44, 1
      %p360 = scmp.ne.s32.totalorder %s355, %s357
      %p361 = scmp.eq.s32.totalorder %s44, 0
      %p362 = por %p360, %p361
      %p363 = scmp.ne.s32.totalorder %s355, %s357
      %p364 = scmp.eq.s32.totalorder %s49, 1
      %p365 = por %p363, %p364
      %p366 = scmp.ne.s32.totalorder %s357, %s358
      %p367 = scmp.eq.s32.totalorder %s49, 0
      %p368 = por %p366, %p367
      %p369 = scmp.ne.s32.totalorder %s357, %s358
      %p370 = scmp.eq.s32.totalorder %s50, 1
      %p371 = por %p369, %p370
      %p373 = scmp.ne.s32.totalorder %s358, %s372
      %p374 = scmp.eq.s32.totalorder %s50, 0
      %p375 = por %p373, %p374
      %s377 = sadd.s32 %s376, 1
      %p380 = scmp.eq.s32.totalorder %s44, 1
      %p381 = scmp.ne.s32.totalorder %s376, %s378
      %p382 = scmp.eq.s32.totalorder %s44, 0
      %p383 = por %p381, %p382
      %p384 = scmp.ne.s32.totalorder %s376, %s378
      %p385 = scmp.eq.s32.totalorder %s49, 1
      %p386 = por %p384, %p385
      %p387 = scmp.ne.s32.totalorder %s378, %s379
      %p388 = scmp.eq.s32.totalorder %s49, 0
      %p389 = por %p387, %p388
      %p390 = scmp.ne.s32.totalorder %s378, %s379
      %p391 = scmp.eq.s32.totalorder %s50, 1
      %p392 = por %p390, %p391
      %p394 = scmp.ne.s32.totalorder %s379, %s393
      %p395 = scmp.eq.s32.totalorder %s50, 0
      %p396 = por %p394, %p395
      %s398 = sadd.s32 %s397, 1
      %p401 = scmp.eq.s32.totalorder %s44, 1
      %p402 = scmp.ne.s32.totalorder %s397, %s399
      %p403 = scmp.eq.s32.totalorder %s44, 0
      %p404 = por %p402, %p403
      %p405 = scmp.ne.s32.totalorder %s397, %s399
      %p406 = scmp.eq.s32.totalorder %s49, 1
      %p407 = por %p405, %p406
      %p408 = scmp.ne.s32.totalorder %s399, %s400
      %p409 = scmp.eq.s32.totalorder %s49, 0
      %p410 = por %p408, %p409
      %p411 = scmp.ne.s32.totalorder %s399, %s400
      %p412 = scmp.eq.s32.totalorder %s50, 1
      %p413 = por %p411, %p412
      %p415 = scmp.ne.s32.totalorder %s400, %s414
      %p416 = scmp.eq.s32.totalorder %s50, 0
      %p417 = por %p415, %p416
      %s419 = sadd.s32 %s418, 1
      %p422 = scmp.eq.s32.totalorder %s44, 1
      %p423 = scmp.ne.s32.totalorder %s418, %s420
      %p424 = scmp.eq.s32.totalorder %s44, 0
      %p425 = por %p423, %p424
      %p426 = scmp.ne.s32.totalorder %s418, %s420
      %p427 = scmp.eq.s32.totalorder %s49, 1
      %p428 = por %p426, %p427
      %p429 = scmp.ne.s32.totalorder %s420, %s421
      %p430 = scmp.eq.s32.totalorder %s49, 0
      %p431 = por %p429, %p430
      %p432 = scmp.ne.s32.totalorder %s420, %s421
      %p433 = scmp.eq.s32.totalorder %s50, 1
      %p434 = por %p432, %p433
      %p436 = scmp.ne.s32.totalorder %s421, %s435
      %p437 = scmp.eq.s32.totalorder %s50, 0
      %p438 = por %p436, %p437
      %s440 = sadd.s32 %s439, 1
      %p443 = scmp.eq.s32.totalorder %s44, 1
      %p444 = scmp.ne.s32.totalorder %s439, %s441
      %p445 = scmp.eq.s32.totalorder %s44, 0
      %p446 = por %p444, %p445
      %p447 = scmp.ne.s32.totalorder %s439, %s441
      %p448 = scmp.eq.s32.totalorder %s49, 1
      %p449 = por %p447, %p448
      %p450 = scmp.ne.s32.totalorder %s441, %s442
      %p451 = scmp.eq.s32.totalorder %s49, 0
      %p452 = por %p450, %p451
      %p453 = scmp.ne.s32.totalorder %s441, %s442
      %p454 = scmp.eq.s32.totalorder %s50, 1
      %p455 = por %p453, %p454
      %p457 = scmp.ne.s32.totalorder %s442, %s456
      %p458 = scmp.eq.s32.totalorder %s50, 0
      %p459 = por %p457, %p458
      %s461 = sadd.s32 %s460, 1
      %p464 = scmp.eq.s32.totalorder %s44, 1
      %p465 = scmp.ne.s32.totalorder %s460, %s462
      %p466 = scmp.eq.s32.totalorder %s44, 0
      %p467 = por %p465, %p466
      %p468 = scmp.ne.s32.totalorder %s460, %s462
      %p469 = scmp.eq.s32.totalorder %s49, 1
      %p470 = por %p468, %p469
      %p471 = scmp.ne.s32.totalorder %s462, %s463
      %p472 = scmp.eq.s32.totalorder %s49, 0
      %p473 = por %p471, %p472
      %p474 = scmp.ne.s32.totalorder %s462, %s463
      %p475 = scmp.eq.s32.totalorder %s50, 1
      %p476 = por %p474, %p475
      %p478 = scmp.ne.s32.totalorder %s463, %s477
      %p479 = scmp.eq.s32.totalorder %s50, 0
      %p480 = por %p478, %p479
      %s482 = sadd.s32 %s481, 1
      %p485 = scmp.eq.s32.totalorder %s44, 1
      %p486 = scmp.ne.s32.totalorder %s481, %s483
      %p487 = scmp.eq.s32.totalorder %s44, 0
      %p488 = por %p486, %p487
      %p489 = scmp.ne.s32.totalorder %s481, %s483
      %p490 = scmp.eq.s32.totalorder %s49, 1
      %p491 = por %p489, %p490
      %p492 = scmp.ne.s32.totalorder %s483, %s484
      %p493 = scmp.eq.s32.totalorder %s49, 0
      %p494 = por %p492, %p493
      %p495 = scmp.ne.s32.totalorder %s483, %s484
      %p496 = scmp.eq.s32.totalorder %s50, 1
      %p497 = por %p495, %p496
      %p499 = scmp.ne.s32.totalorder %s484, %s498
      %p500 = scmp.eq.s32.totalorder %s50, 0
      %p501 = por %p499, %p500
      %s503 = sadd.s32 %s502, 1
      %p506 = scmp.eq.s32.totalorder %s44, 1
      %p507 = scmp.ne.s32.totalorder %s502, %s504
      %p508 = scmp.eq.s32.totalorder %s44, 0
      %p509 = por %p507, %p508
      %p510 = scmp.ne.s32.totalorder %s502, %s504
      %p511 = scmp.eq.s32.totalorder %s49, 1
      %p512 = por %p510, %p511
      %p513 = scmp.ne.s32.totalorder %s504, %s505
      %p514 = scmp.eq.s32.totalorder %s49, 0
      %p515 = por %p513, %p514
      %p516 = scmp.ne.s32.totalorder %s504, %s505
      %p517 = scmp.eq.s32.totalorder %s50, 1
      %p518 = por %p516, %p517
      %p520 = scmp.ne.s32.totalorder %s505, %s519
      %p521 = scmp.eq.s32.totalorder %s50, 0
      %p522 = por %p520, %p521
      %s524 = sadd.s32 %s523, 1
      %p527 = scmp.eq.s32.totalorder %s44, 1
      %p528 = scmp.ne.s32.totalorder %s523, %s525
      %p529 = scmp.eq.s32.totalorder %s44, 0
      %p530 = por %p528, %p529
      %p531 = scmp.ne.s32.totalorder %s523, %s525
      %p532 = scmp.eq.s32.totalorder %s49, 1
      %p533 = por %p531, %p532
      %p534 = scmp.ne.s32.totalorder %s525, %s526
      %p535 = scmp.eq.s32.totalorder %s49, 0
      %p536 = por %p534, %p535
      %p537 = scmp.ne.s32.totalorder %s525, %s526
      %p538 = scmp.eq.s32.totalorder %s50, 1
      %p539 = por %p537, %p538
      %p541 = scmp.ne.s32.totalorder %s526, %s540
      %p542 = scmp.eq.s32.totalorder %s50, 0
      %p543 = por %p541, %p542
      %s544 = ssub.s32 %s44, %s51
      %p545 = scmp.eq.s32.totalorder %s544, 0
      %s547 = sadd.s32 %s546, 1
      %s548 = scalar_select %p545, %s546, %s547
      %p551 = pneg %p545
      %p552 = scmp.eq.s32.totalorder %s44, 1
      %p553 = por %p551, %p552
      %p554 = scmp.ne.s32.totalorder %s546, %s549
      %p555 = scmp.eq.s32.totalorder %s44, 0
      %p556 = por %p554, %p555
      %p557 = scmp.ne.s32.totalorder %s546, %s549
      %p558 = scmp.eq.s32.totalorder %s49, 1
      %p559 = por %p557, %p558
      %p560 = scmp.ne.s32.totalorder %s549, %s550
      %p561 = scmp.eq.s32.totalorder %s49, 0
      %p562 = por %p560, %p561
      %p563 = scmp.ne.s32.totalorder %s549, %s550
      %p564 = scmp.eq.s32.totalorder %s50, 1
      %p565 = por %p563, %p564
      %p567 = scmp.ne.s32.totalorder %s550, %s566
      %p568 = scmp.eq.s32.totalorder %s50, 0
      %p569 = por %p567, %p568
      %s570 = ssub.s32 %s44, %s51
      %p571 = scmp.eq.s32.totalorder %s570, 0
      %s573 = sadd.s32 %s572, 1
      %s574 = scalar_select %p571, %s572, %s573
      %p577 = pneg %p571
      %p578 = scmp.eq.s32.totalorder %s44, 1
      %p579 = por %p577, %p578
      %p580 = scmp.ne.s32.totalorder %s572, %s575
      %p581 = scmp.eq.s32.totalorder %s44, 0
      %p582 = por %p580, %p581
      %p583 = scmp.ne.s32.totalorder %s572, %s575
      %p584 = scmp.eq.s32.totalorder %s49, 1
      %p585 = por %p583, %p584
      %p586 = scmp.ne.s32.totalorder %s575, %s576
      %p587 = scmp.eq.s32.totalorder %s49, 0
      %p588 = por %p586, %p587
      %p589 = scmp.ne.s32.totalorder %s575, %s576
      %p590 = scmp.eq.s32.totalorder %s50, 1
      %p591 = por %p589, %p590
      %p593 = scmp.ne.s32.totalorder %s576, %s592
      %p594 = scmp.eq.s32.totalorder %s50, 0
      %p595 = por %p593, %p594
      %p596 = scmp.le.s32.totalorder 1, %s44
      %p597 = scmp.lt.s32.totalorder %s44, 3
      %p598 = pnand %p596, %p597
      %p599 = pneg %p598
      // Predicated region
      $region9: #{tpu_custom_call.1} parent=5 // pred_check
        _
      $region10: #{tpu_custom_call.1} parent=5 // pred_check_branch
        %601 = sbr.rel (%p598) target = $region12
      $region11: #{tpu_custom_call.1} parent=5 // pred_region
        %s602 = ssub.s32 %s44, 1
        // Predicated region
        $region13: #{tpu_custom_call.1} parent=11 // pred_check
          %p603 = pneg %p221
        $region14: #{tpu_custom_call.1} parent=11 // pred_check_branch
          %605 = sbr.rel (%p603) target = $region16
        $region15: #{tpu_custom_call.1} parent=11 // pred_region
          _
        $region16: #{tpu_custom_call.1} parent=11 // pred_fallthru
          _
        // Predicated region
        $region17: #{tpu_custom_call.1} parent=11 // pred_check
          %p606 = pneg %p242
        $region18: #{tpu_custom_call.1} parent=11 // pred_check_branch
          %608 = sbr.rel (%p606) target = $region20
        $region19: #{tpu_custom_call.1} parent=11 // pred_region
          _
        $region20: #{tpu_custom_call.1} parent=11 // pred_fallthru
          _
        // Predicated region
        $region21: #{tpu_custom_call.1} parent=11 // pred_check
          %p609 = pneg %p263
        $region22: #{tpu_custom_call.1} parent=11 // pred_check_branch
          %611 = sbr.rel (%p609) target = $region24
        $region23: #{tpu_custom_call.1} parent=11 // pred_region
          %s613 = ssub.s32 256, 256
          %614 = vsyncadd [#allocation10], %s613
          %s615 = sshll.u32 [#allocation9], 4
          %s616 = int_to_ptr.vmem [resolvable:$true] %s615
          %621 = dma.hbm_to_vmem [thread:$0]  %s8, 256, %s616, [#allocation10], 64, 64, 4
        $region24: #{tpu_custom_call.1} parent=11 // pred_fallthru
          _
        // Predicated region
        $region25: #{tpu_custom_call.1} parent=11 // pred_check
          %p622 = pneg %p284
        $region26: #{tpu_custom_call.1} parent=11 // pred_check_branch
          %624 = sbr.rel (%p622) target = $region28
        $region27: #{tpu_custom_call.1} parent=11 // pred_region
          %s626 = ssub.s32 832, 832
          %627 = vsyncadd [#allocation10], %s626
          %s628 = sshll.u32 [#allocation11], 4
          %s629 = int_to_ptr.vmem [resolvable:$true] %s628
          %634 = dma.hbm_to_vmem [thread:$0]  %s9, 832, %s629, [#allocation10], 64, 64, 4
        $region28: #{tpu_custom_call.1} parent=11 // pred_fallthru
          _
        // Predicated region
        $region29: #{tpu_custom_call.1} parent=11 // pred_check
          %p635 = pneg %p305
        $region30: #{tpu_custom_call.1} parent=11 // pred_check_branch
          %637 = sbr.rel (%p635) target = $region32
        $region31: #{tpu_custom_call.1} parent=11 // pred_region
          _
        $region32: #{tpu_custom_call.1} parent=11 // pred_fallthru
          _
        // Predicated region
        $region33: #{tpu_custom_call.1} parent=11 // pred_check
          %p638 = pneg %p326
        $region34: #{tpu_custom_call.1} parent=11 // pred_check_branch
          %640 = sbr.rel (%p638) target = $region36
        $region35: #{tpu_custom_call.1} parent=11 // pred_region
          %s642 = ssub.s32 1024, 1024
          %643 = vsyncadd [#allocation13], %s642
          %s644 = sshll.u32 [#allocation12], 4
          %s645 = int_to_ptr.vmem [resolvable:$true] %s644
          %650 = dma.hbm_to_vmem [thread:$0]  %s11, 1024, %s645, [#allocation13], 64, 64, 4
        $region36: #{tpu_custom_call.1} parent=11 // pred_fallthru
          _
        // Predicated region
        $region37: #{tpu_custom_call.1} parent=11 // pred_check
          %p651 = pneg %p347
        $region38: #{tpu_custom_call.1} parent=11 // pred_check_branch
          %653 = sbr.rel (%p651) target = $region40
        $region39: #{tpu_custom_call.1} parent=11 // pred_region
          _
        $region40: #{tpu_custom_call.1} parent=11 // pred_fallthru
          _
        // Predicated region
        $region41: #{tpu_custom_call.1} parent=11 // pred_check
          %p654 = pneg %p368
        $region42: #{tpu_custom_call.1} parent=11 // pred_check_branch
          %656 = sbr.rel (%p654) target = $region44
        $region43: #{tpu_custom_call.1} parent=11 // pred_region
          _
        $region44: #{tpu_custom_call.1} parent=11 // pred_fallthru
          _
        // Predicated region
        $region45: #{tpu_custom_call.1} parent=11 // pred_check
          %p657 = pneg %p389
        $region46: #{tpu_custom_call.1} parent=11 // pred_check_branch
          %659 = sbr.rel (%p657) target = $region48
        $region47: #{tpu_custom_call.1} parent=11 // pred_region
          %s661 = ssub.s32 16, 16
          %662 = vsyncadd [#allocation13], %s661
          %s664 = sshll.u32 [#allocation14], 4
          %s665 = int_to_ptr.vmem [resolvable:$true] %s664
          %667 = dma.hbm_to_vmem [thread:$0]  %s14, 16, %s665, [#allocation13]
        $region48: #{tpu_custom_call.1} parent=11 // pred_fallthru
          _
        // Predicated region
        $region49: #{tpu_custom_call.1} parent=11 // pred_check
          %p668 = pneg %p410
        $region50: #{tpu_custom_call.1} parent=11 // pred_check_branch
          %670 = sbr.rel (%p668) target = $region52
        $region51: #{tpu_custom_call.1} parent=11 // pred_region
          %s672 = ssub.s32 16, 16
          %673 = vsyncadd [#allocation16], %s672
          %s675 = sshll.u32 [#allocation15], 4
          %s676 = int_to_ptr.vmem [resolvable:$true] %s675
          %678 = dma.hbm_to_vmem [thread:$0]  %s15, 16, %s676, [#allocation16]
        $region52: #{tpu_custom_call.1} parent=11 // pred_fallthru
          _
        // Predicated region
        $region53: #{tpu_custom_call.1} parent=11 // pred_check
          %p679 = pneg %p431
        $region54: #{tpu_custom_call.1} parent=11 // pred_check_branch
          %681 = sbr.rel (%p679) target = $region56
        $region55: #{tpu_custom_call.1} parent=11 // pred_region
          %s683 = ssub.s32 16, 16
          %684 = vsyncadd [#allocation16], %s683
          %s686 = sshll.u32 [#allocation17], 4
          %s687 = int_to_ptr.vmem [resolvable:$true] %s686
          %689 = dma.hbm_to_vmem [thread:$0]  %s16, 16, %s687, [#allocation16]
        $region56: #{tpu_custom_call.1} parent=11 // pred_fallthru
          _
        // Predicated region
        $region57: #{tpu_custom_call.1} parent=11 // pred_check
          %p690 = pneg %p452
        $region58: #{tpu_custom_call.1} parent=11 // pred_check_branch
          %692 = sbr.rel (%p690) target = $region60
        $region59: #{tpu_custom_call.1} parent=11 // pred_region
          _
        $region60: #{tpu_custom_call.1} parent=11 // pred_fallthru
          _
        // Predicated region
        $region61: #{tpu_custom_call.1} parent=11 // pred_check
          %p693 = pneg %p473
        $region62: #{tpu_custom_call.1} parent=11 // pred_check_branch
          %695 = sbr.rel (%p693) target = $region64
        $region63: #{tpu_custom_call.1} parent=11 // pred_region
          _
        $region64: #{tpu_custom_call.1} parent=11 // pred_fallthru
          _
        // Predicated region
        $region65: #{tpu_custom_call.1} parent=11 // pred_check
          %p696 = pneg %p494
        $region66: #{tpu_custom_call.1} parent=11 // pred_check_branch
          %698 = sbr.rel (%p696) target = $region68
        $region67: #{tpu_custom_call.1} parent=11 // pred_region
          _
        $region68: #{tpu_custom_call.1} parent=11 // pred_fallthru
          _
        // Predicated region
        $region69: #{tpu_custom_call.1} parent=11 // pred_check
          %p699 = pneg %p515
        $region70: #{tpu_custom_call.1} parent=11 // pred_check_branch
          %701 = sbr.rel (%p699) target = $region72
        $region71: #{tpu_custom_call.1} parent=11 // pred_region
          _
        $region72: #{tpu_custom_call.1} parent=11 // pred_fallthru
          _
        // Predicated region
        $region73: #{tpu_custom_call.1} parent=11 // pred_check
          %p702 = pneg %p536
        $region74: #{tpu_custom_call.1} parent=11 // pred_check_branch
          %704 = sbr.rel (%p702) target = $region76
        $region75: #{tpu_custom_call.1} parent=11 // pred_region
          _
        $region76: #{tpu_custom_call.1} parent=11 // pred_fallthru
          _
      $region12: #{tpu_custom_call.1} parent=5 // pred_fallthru
        _
      %p705 = scmp.lt.s32.totalorder %s44, 2
      // Predicated region
      $region77: #{tpu_custom_call.1} parent=5 // pred_check
        %p706 = pneg %p705
      $region78: #{tpu_custom_call.1} parent=5 // pred_check_branch
        %708 = sbr.rel (%p706) target = $region80
      $region79: #{tpu_custom_call.1} parent=5 // pred_region
        // Predicated region
        $region81: #{tpu_custom_call.1} parent=79 // pred_check
          %p709 = pneg %p64
        $region82: #{tpu_custom_call.1} parent=79 // pred_check_branch
          %711 = sbr.rel (%p709) target = $region84
        $region83: #{tpu_custom_call.1} parent=79 // pred_region
          %s712 = smul.u32 8, %s44
          %p713 = scmp.lt.s32.totalorder %s712, 15
          %s714 = scalar_select %p713, %s712, 15
          %s715 = smul.addr %s714, 2
          %s716 = smul.addr %s715, 8
          %s717 = scalar_lea.vmem %s0, %s716
          %s718 = smul.u32 8, %s44
        $region84: #{tpu_custom_call.1} parent=79 // pred_fallthru
          _
        // Predicated region
        $region85: #{tpu_custom_call.1} parent=79 // pred_check
          %p719 = pneg %p90
        $region86: #{tpu_custom_call.1} parent=79 // pred_check_branch
          %721 = sbr.rel (%p719) target = $region88
        $region87: #{tpu_custom_call.1} parent=79 // pred_region
          %s722 = sand.u32 %s80, 1
          %s723 = scalar_lea.sflag [#allocation4], %s722
          %s724 = sand.u32 %s80, 1
          %s725 = smul.addr %s724, 8
          %s726 = scalar_lea.vmem [#allocation3], %s725
          %s727 = smul.u32 8, %s44
          %s729 = ssub.s32 128, 128
          %730 = vsyncadd %s723, %s729
          %s731 = smul.addr %s727, 16
          %s732 = scalar_lea.hbm %s1, %s731
          %s733 = sshll.u32 %s726, 4
          %s734 = int_to_ptr.vmem [resolvable:$true] %s733
          %739 = dma.hbm_to_vmem [thread:$0]  %s732, 128, %s734, %s723, 16, 16, 1
        $region88: #{tpu_custom_call.1} parent=79 // pred_fallthru
          _
        // Predicated region
        $region89: #{tpu_custom_call.1} parent=79 // pred_check
          %p740 = pneg %p116
        $region90: #{tpu_custom_call.1} parent=79 // pred_check_branch
          %742 = sbr.rel (%p740) target = $region92
        $region91: #{tpu_custom_call.1} parent=79 // pred_region
          %s743 = smul.u32 8, %s44
          %p744 = scmp.lt.s32.totalorder %s743, 15
          %s745 = scalar_select %p744, %s743, 15
          %s746 = smul.addr %s745, 2
          %s747 = smul.addr %s746, 8
          %s748 = scalar_lea.vmem %s2, %s747
          %s749 = smul.u32 8, %s44
        $region92: #{tpu_custom_call.1} parent=79 // pred_fallthru
          _
        // Predicated region
        $region93: #{tpu_custom_call.1} parent=79 // pred_check
          %p750 = pneg %p142
        $region94: #{tpu_custom_call.1} parent=79 // pred_check_branch
          %752 = sbr.rel (%p750) target = $region96
        $region95: #{tpu_custom_call.1} parent=79 // pred_region
          %s753 = sand.u32 %s44, 1
          %s754 = scalar_lea.sflag [#allocation7], %s753
          %s755 = sand.u32 %s132, 1
          %s756 = smul.addr %s755, 64
          %s757 = scalar_lea.vmem [#allocation6], %s756
          %s758 = smul.u32 8, %s44
          %s760 = ssub.s32 1024, 1024
          %761 = vsyncadd %s754, %s760
          %s762 = smul.addr %s758, 128
          %s763 = scalar_lea.hbm %s3, %s762
          %s764 = sshll.u32 %s757, 4
          %s765 = int_to_ptr.vmem [resolvable:$true] %s764
          %770 = dma.hbm_to_vmem [thread:$0]  %s763, 1024, %s765, %s754, 128, 128, 8
        $region96: #{tpu_custom_call.1} parent=79 // pred_fallthru
          _
        // Predicated region
        $region97: #{tpu_custom_call.1} parent=79 // pred_check
          %p771 = pneg %p168
        $region98: #{tpu_custom_call.1} parent=79 // pred_check_branch
          %773 = sbr.rel (%p771) target = $region100
        $region99: #{tpu_custom_call.1} parent=79 // pred_region
          %s774 = smul.u32 8, %s44
          %p775 = scmp.lt.s32.totalorder %s774, 15
          %s776 = scalar_select %p775, %s774, 15
          %s777 = smul.addr %s776, 4
          %s778 = smul.addr %s777, 8
          %s779 = scalar_lea.vmem %s4, %s778
          %s780 = smul.u32 8, %s44
        $region100: #{tpu_custom_call.1} parent=79 // pred_fallthru
          _
        // Predicated region
        $region101: #{tpu_custom_call.1} parent=79 // pred_check
          %p781 = pneg %p194
        $region102: #{tpu_custom_call.1} parent=79 // pred_check_branch
          %783 = sbr.rel (%p781) target = $region104
        $region103: #{tpu_custom_call.1} parent=79 // pred_region
          %s784 = sand.u32 %s44, 1
          %s785 = scalar_lea.sflag [#allocation7], %s784
          %s786 = sand.u32 %s184, 1
          %s787 = smul.addr %s786, 8
          %s788 = scalar_lea.vmem [#allocation8], %s787
          %s790 = ssub.s32 128, 128
          %791 = vsyncadd %s785, %s790
          %s792 = smul.addr %s44, 128
          %s793 = scalar_lea.hbm %s5, %s792
          %s795 = sshll.u32 %s788, 4
          %s796 = int_to_ptr.vmem [resolvable:$true] %s795
          %798 = dma.hbm_to_vmem [thread:$0]  %s793, 128, %s796, %s785
        $region104: #{tpu_custom_call.1} parent=79 // pred_fallthru
          _
      $region80: #{tpu_custom_call.1} parent=5 // pred_fallthru
        _
      %p799 = scmp.le.s32.totalorder 1, %s44
      %p800 = scmp.lt.s32.totalorder %s44, 3
      %p801 = pnand %p799, %p800
      %p802 = pneg %p801
      // Predicated region
      $region105: #{tpu_custom_call.1} parent=5 // pred_check
        _
      $region106: #{tpu_custom_call.1} parent=5 // pred_check_branch
        %804 = sbr.rel (%p801) target = $region108
      $region107: #{tpu_custom_call.1} parent=5 // pred_region
        %s805 = ssub.s32 %s44, 1
        %s806 = sand.u32 %s83, 1
        %s807 = scalar_lea.sflag [#allocation4], %s806
        %s808 = sand.u32 %s83, 1
        %s809 = smul.addr %s808, 8
        %s810 = scalar_lea.vmem [#allocation3], %s809
        // Predicated region
        $region109: #{tpu_custom_call.1} parent=107 // pred_check
          %p811 = pneg %p96
        $region110: #{tpu_custom_call.1} parent=107 // pred_check_branch
          %813 = sbr.rel (%p811) target = $region112
        $region111: #{tpu_custom_call.1} parent=107 // pred_region
          %814 = dma.done %s807, 128
        $region112: #{tpu_custom_call.1} parent=107 // pred_fallthru
          _
        %s815 = sand.u32 %s49, 1
        %s816 = scalar_lea.sflag [#allocation7], %s815
        %s817 = sand.u32 %s135, 1
        %s818 = smul.addr %s817, 64
        %s819 = scalar_lea.vmem [#allocation6], %s818
        // Predicated region
        $region113: #{tpu_custom_call.1} parent=107 // pred_check
          %p820 = pneg %p148
        $region114: #{tpu_custom_call.1} parent=107 // pred_check_branch
          %822 = sbr.rel (%p820) target = $region116
        $region115: #{tpu_custom_call.1} parent=107 // pred_region
          %823 = dma.done %s816, 1024
        $region116: #{tpu_custom_call.1} parent=107 // pred_fallthru
          _
        %s824 = sand.u32 %s49, 1
        %s825 = scalar_lea.sflag [#allocation7], %s824
        %s826 = sand.u32 %s187, 1
        %s827 = smul.addr %s826, 8
        %s828 = scalar_lea.vmem [#allocation8], %s827
        // Predicated region
        $region117: #{tpu_custom_call.1} parent=107 // pred_check
          %p829 = pneg %p200
        $region118: #{tpu_custom_call.1} parent=107 // pred_check_branch
          %831 = sbr.rel (%p829) target = $region120
        $region119: #{tpu_custom_call.1} parent=107 // pred_region
          %832 = dma.done %s825, 128
        $region120: #{tpu_custom_call.1} parent=107 // pred_fallthru
          _
        // Predicated region
        $region121: #{tpu_custom_call.1} parent=107 // pred_check
          %p833 = pneg %p263
        $region122: #{tpu_custom_call.1} parent=107 // pred_check_branch
          %835 = sbr.rel (%p833) target = $region124
        $region123: #{tpu_custom_call.1} parent=107 // pred_region
          %836 = dma.done [#allocation10], 256
        $region124: #{tpu_custom_call.1} parent=107 // pred_fallthru
          _
        // Predicated region
        $region125: #{tpu_custom_call.1} parent=107 // pred_check
          %p837 = pneg %p284
        $region126: #{tpu_custom_call.1} parent=107 // pred_check_branch
          %839 = sbr.rel (%p837) target = $region128
        $region127: #{tpu_custom_call.1} parent=107 // pred_region
          %840 = dma.done [#allocation10], 832
        $region128: #{tpu_custom_call.1} parent=107 // pred_fallthru
          _
        // Predicated region
        $region129: #{tpu_custom_call.1} parent=107 // pred_check
          %p841 = pneg %p326
        $region130: #{tpu_custom_call.1} parent=107 // pred_check_branch
          %843 = sbr.rel (%p841) target = $region132
        $region131: #{tpu_custom_call.1} parent=107 // pred_region
          %844 = dma.done [#allocation13], 1024
        $region132: #{tpu_custom_call.1} parent=107 // pred_fallthru
          _
        // Predicated region
        $region133: #{tpu_custom_call.1} parent=107 // pred_check
          %p845 = pneg %p389
        $region134: #{tpu_custom_call.1} parent=107 // pred_check_branch
          %847 = sbr.rel (%p845) target = $region136
        $region135: #{tpu_custom_call.1} parent=107 // pred_region
          %848 = dma.done [#allocation13], 16
        $region136: #{tpu_custom_call.1} parent=107 // pred_fallthru
          _
        // Predicated region
        $region137: #{tpu_custom_call.1} parent=107 // pred_check
          %p849 = pneg %p410
        $region138: #{tpu_custom_call.1} parent=107 // pred_check_branch
          %851 = sbr.rel (%p849) target = $region140
        $region139: #{tpu_custom_call.1} parent=107 // pred_region
          %852 = dma.done [#allocation16], 16
        $region140: #{tpu_custom_call.1} parent=107 // pred_fallthru
          _
        // Predicated region
        $region141: #{tpu_custom_call.1} parent=107 // pred_check
          %p853 = pneg %p431
        $region142: #{tpu_custom_call.1} parent=107 // pred_check_branch
          %855 = sbr.rel (%p853) target = $region144
        $region143: #{tpu_custom_call.1} parent=107 // pred_region
          %856 = dma.done [#allocation16], 16
        $region144: #{tpu_custom_call.1} parent=107 // pred_fallthru
          _
        %s857 = smul.u32 8, %s49
        %p858 = scmp.lt.s32.totalorder %s857, 15
        %s859 = scalar_select %p858, %s857, 15
        %s860 = smul.addr %s859, 2
        %s861 = smul.addr %s860, 8
        %s862 = scalar_lea.vmem %s0, %s861
        %p863 = pneg %p70
        %p864 = pneg %p67
        %s865 = sand.u32 %s83, 1
        %s866 = scalar_lea.sflag [#allocation4], %s865
        %s867 = sand.u32 %s83, 1
        %s868 = smul.addr %s867, 8
        %s869 = scalar_lea.vmem [#allocation3], %s868
        %p870 = pneg %p96
        %p871 = pneg %p93
        %s872 = smul.u32 8, %s49
        %p873 = scmp.lt.s32.totalorder %s872, 15
        %s874 = scalar_select %p873, %s872, 15
        %s875 = smul.addr %s874, 2
        %s876 = smul.addr %s875, 8
        %s877 = scalar_lea.vmem %s2, %s876
        %p878 = pneg %p122
        %p879 = pneg %p119
        %s880 = sand.u32 %s49, 1
        %s881 = scalar_lea.sflag [#allocation7], %s880
        %s882 = sand.u32 %s135, 1
        %s883 = smul.addr %s882, 64
        %s884 = scalar_lea.vmem [#allocation6], %s883
        %p885 = pneg %p148
        %p886 = pneg %p145
        %s887 = smul.u32 8, %s49
        %p888 = scmp.lt.s32.totalorder %s887, 15
        %s889 = scalar_select %p888, %s887, 15
        %s890 = smul.addr %s889, 4
        %s891 = smul.addr %s890, 8
        %s892 = scalar_lea.vmem %s4, %s891
        %p893 = pneg %p174
        %p894 = pneg %p171
        %s895 = sand.u32 %s49, 1
        %s896 = scalar_lea.sflag [#allocation7], %s895
        %s897 = sand.u32 %s187, 1
        %s898 = smul.addr %s897, 8
        %s899 = scalar_lea.vmem [#allocation8], %s898
        %p900 = pneg %p200
        %p901 = pneg %p197
        %p902 = pneg %p221
        %p903 = pneg %p218
        %p904 = pneg %p242
        %p905 = pneg %p239
        %p906 = pneg %p263
        %p907 = pneg %p260
        %p908 = pneg %p284
        %p909 = pneg %p281
        %p910 = pneg %p305
        %p911 = pneg %p302
        %p912 = pneg %p326
        %p913 = pneg %p323
        %p914 = pneg %p347
        %p915 = pneg %p344
        %p916 = pneg %p368
        %p917 = pneg %p365
        %p918 = pneg %p389
        %p919 = pneg %p386
        %p920 = pneg %p410
        %p921 = pneg %p407
        %p922 = pneg %p431
        %p923 = pneg %p428
        %p924 = pneg %p452
        %p925 = pneg %p449
        %p926 = pneg %p473
        %p927 = pneg %p470
        %p928 = pneg %p494
        %p929 = pneg %p491
        %p930 = pneg %p515
        %p931 = pneg %p512
        %p932 = pneg %p536
        %p933 = pneg %p533
        %p934 = pneg %p562
        %p935 = pneg %p559
        %s936 = sand.u32 %s549, 1
        %s937 = scalar_lea.sflag [#allocation5], %s936
        %s938 = sand.u32 %s549, 1
        %s939 = smul.addr %s938, 32
        %s940 = scalar_lea.vmem [#allocation18], %s939
        %p941 = pneg %p588
        %p942 = pneg %p585
        %p943 = scmp.lt.s32.totalorder %s49, 1
        %s944 = scalar_select %p943, %s49, 1
        %s945 = smul.addr %s944, 8
        %s946 = scalar_lea.vmem %s23, %s945
        %s947 = smul.u32 8, %s49
        %p948 = scmp.lt.s32.totalorder %s947, 15
        %s949 = scalar_select %p948, %s947, 15
        %s950 = smul.addr %s949, 2
        %s951 = smul.addr %s950, 8
        %s952 = scalar_lea.vmem %s0, %s951
        %s953 = smul.u32 8, %s49
        %s954 = smul.u32 8, %s49
        %s955 = smul.u32 8, %s49
        %p956 = scmp.lt.s32.totalorder %s955, 15
        %s957 = scalar_select %p956, %s955, 15
        %s958 = smul.addr %s957, 2
        %s959 = smul.addr %s958, 8
        %s960 = scalar_lea.vmem %s2, %s959
        %s961 = smul.u32 8, %s49
        %s962 = smul.u32 8, %s49
        %s963 = smul.u32 8, %s49
        %p964 = scmp.lt.s32.totalorder %s963, 15
        %s965 = scalar_select %p964, %s963, 15
        %s966 = smul.addr %s965, 4
        %s967 = smul.addr %s966, 8
        %s968 = scalar_lea.vmem %s4, %s967
        %s969 = smul.u32 8, %s49
        %p970 = scmp.lt.s32.totalorder %s49, 1
        %s971 = scalar_select %p970, %s49, 1
        %s972 = smul.addr %s971, 8
        %s973 = scalar_lea.vmem %s23, %s972
        %v975 = vld [vmem:[%s952] sm:$0xff]
        %v976 = vld [vmem:[%s952 + $0x8] sm:$0xff]
        %v977 = vld [vmem:[%s952 + $0x10] sm:$0xff]
        %v978 = vld [vmem:[%s952 + $0x18] sm:$0xff]
        %v979 = vld [vmem:[%s952 + $0x20] sm:$0xff]
        %v980 = vld [vmem:[%s952 + $0x28] sm:$0xff]
        %v981 = vld [vmem:[%s952 + $0x30] sm:$0xff]
        %v982 = vld [vmem:[%s952 + $0x38] sm:$0xff]
        %v983 = vld [vmem:[%s952 + $0x40] sm:$0xff]
        %v984 = vld [vmem:[%s952 + $0x48] sm:$0xff]
        %v985 = vld [vmem:[%s952 + $0x50] sm:$0xff]
        %v986 = vld [vmem:[%s952 + $0x58] sm:$0xff]
        %v987 = vld [vmem:[%s952 + $0x60] sm:$0xff]
        %v988 = vld [vmem:[%s952 + $0x68] sm:$0xff]
        %v989 = vld [vmem:[%s952 + $0x70] sm:$0xff]
        %v990 = vld [vmem:[%s952 + $0x78] sm:$0xff]
        %v991 = vld [vmem:[%s810] sm:$0x1]
        %v992 = vld [vmem:[%s810 + $0x1] sm:$0x1]
        %v993 = vld [vmem:[%s810 + $0x2] sm:$0x1]
        %v994 = vld [vmem:[%s810 + $0x3] sm:$0x1]
        %v995 = vld [vmem:[%s810 + $0x4] sm:$0x1]
        %v996 = vld [vmem:[%s810 + $0x5] sm:$0x1]
        %v997 = vld [vmem:[%s810 + $0x6] sm:$0x1]
        %v998 = vld [vmem:[%s810 + $0x7] sm:$0x1]
        %v999 = vld [vmem:[%s819] sm:$0xff]
        %v1000 = vld [vmem:[%s819 + $0x8] sm:$0xff]
        %v1001 = vld [vmem:[%s819 + $0x10] sm:$0xff]
        %v1002 = vld [vmem:[%s819 + $0x18] sm:$0xff]
        %v1003 = vld [vmem:[%s819 + $0x20] sm:$0xff]
        %v1004 = vld [vmem:[%s819 + $0x28] sm:$0xff]
        %v1005 = vld [vmem:[%s819 + $0x30] sm:$0xff]
        %v1006 = vld [vmem:[%s819 + $0x38] sm:$0xff]
        %v1015 = vlaneseq
        %v1016 = vshrl.u32 %v1015, 7
        %v1017 = vsub.s32 0, %v1016
        %v1018 = vrot.slane %v991, %v1017
        %v1019 = vlaneseq
        %v1020 = vshrl.u32 %v1019, 7
        %v1021 = vsub.s32 0, %v1020
        %v1022 = vrot.slane %v992, %v1021
        %v1023 = vlaneseq
        %v1024 = vshrl.u32 %v1023, 7
        %v1025 = vsub.s32 0, %v1024
        %v1026 = vrot.slane %v993, %v1025
        %v1027 = vlaneseq
        %v1028 = vshrl.u32 %v1027, 7
        %v1029 = vsub.s32 0, %v1028
        %v1030 = vrot.slane %v994, %v1029
        %v1031 = vlaneseq
        %v1032 = vshrl.u32 %v1031, 7
        %v1033 = vsub.s32 0, %v1032
        %v1034 = vrot.slane %v995, %v1033
        %v1035 = vlaneseq
        %v1036 = vshrl.u32 %v1035, 7
        %v1037 = vsub.s32 0, %v1036
        %v1038 = vrot.slane %v996, %v1037
        %v1039 = vlaneseq
        %v1040 = vshrl.u32 %v1039, 7
        %v1041 = vsub.s32 0, %v1040
        %v1042 = vrot.slane %v997, %v1041
        %v1043 = vlaneseq
        %v1044 = vshrl.u32 %v1043, 7
        %v1045 = vsub.s32 0, %v1044
        %v1046 = vrot.slane %v998, %v1045
        %v1055 = vmul.f32 %v999, %v1018
        %v1056 = vmul.f32 %v1000, %v1022
        %v1057 = vmul.f32 %v1001, %v1026
        %v1058 = vmul.f32 %v1002, %v1030
        %v1059 = vmul.f32 %v1003, %v1034
        %v1060 = vmul.f32 %v1004, %v1038
        %v1061 = vmul.f32 %v1005, %v1042
        %v1062 = vmul.f32 %v1006, %v1046
        %vm1063 = vcmask 130048
        %v1065 = vsel %vm1063, %v1055, 0
        %1067 = vmatprep.subr.mxu0 0.0
        %1068 = vmatpush1.msra.mxu0 %v975
        %1069 = vmatprep.subr.mxu0 0.0
        %1070 = vmatpush1.msra.mxu0 %v976
        %1071 = vmatprep.subr.mxu0 0.0
        %1072 = vmatpush1.msra.mxu0 0.0
        %1073 = vmatprep.subr.mxu0 0.0
        %1074 = vmatpush1.msra.mxu0 0.0
        %1075 = vmatprep.subr.mxu0 0.0
        %1076 = vmatpush1.msra.mxu0 0.0
        %1077 = vmatprep.subr.mxu0 0.0
        %1078 = vmatpush1.msra.mxu0 0.0
        %1079 = vmatprep.subr.mxu0 0.0
        %1080 = vmatpush1.msra.mxu0 0.0
        %1081 = vmatprep.subr.mxu0 0.0
        %1082 = vmatpush1.msra.mxu0 0.0
        %1083 = vmatprep.subr.mxu0 0.0
        %1084 = vmatpush1.msra.mxu0 0.0
        %1085 = vmatprep.subr.mxu0 0.0
        %1086 = vmatpush1.msra.mxu0 0.0
        %1087 = vmatprep.subr.mxu0 0.0
        %1088 = vmatpush1.msra.mxu0 0.0
        %1089 = vmatprep.subr.mxu0 0.0
        %1090 = vmatpush1.msra.mxu0 0.0
        %1091 = vmatprep.subr.mxu0 0.0
        %1092 = vmatpush1.msra.mxu0 0.0
        %1093 = vmatprep.subr.mxu0 0.0
        %1094 = vmatpush1.msra.mxu0 0.0
        %1095 = vmatprep.subr.mxu0 0.0
        %1096 = vmatpush1.msra.mxu0 0.0
        %1097 = vmatprep.subr.mxu0 0.0
        %1098 = vmatpush1.msra.mxu0 0.0
        %1099 = vmatprep.subr.mxu0 0.0
        %1100 = vmatpush1.msra.mxu0 0.0
        %1101 = vmatprep.subr.mxu0 0.0
        %1102 = vmatpush1.msra.mxu0 0.0
        %1103 = vmatprep.subr.mxu0 0.0
        %1104 = vmatpush1.msra.mxu0 0.0
        %1105 = vmatprep.subr.mxu0 0.0
        %1106 = vmatpush1.msra.mxu0 0.0
        %1107 = vmatprep.subr.mxu0 0.0
        %1108 = vmatpush1.msra.mxu0 0.0
        %1109 = vmatprep.subr.mxu0 0.0
        %1110 = vmatpush1.msra.mxu0 0.0
        %1111 = vmatprep.subr.mxu0 0.0
        %1112 = vmatpush1.msra.mxu0 0.0
        %1113 = vmatprep.subr.mxu0 0.0
        %1114 = vmatpush1.msra.mxu0 0.0
        %1115 = vmatprep.subr.mxu0 0.0
        %1116 = vmatpush1.msra.mxu0 0.0
        %1117 = vmatprep.subr.mxu0 0.0
        %1118 = vmatpush1.msra.mxu0 0.0
        %1119 = vmatprep.subr.mxu0 0.0
        %1120 = vmatpush1.msra.mxu0 0.0
        %1121 = vmatprep.subr.mxu0 0.0
        %1122 = vmatpush1.msra.mxu0 0.0
        %1123 = vmatprep.subr.mxu0 0.0
        %1124 = vmatpush1.msra.mxu0 0.0
        %1125 = vmatprep.subr.mxu0 0.0
        %1126 = vmatpush1.msra.mxu0 0.0
        %1127 = vmatprep.subr.mxu0 0.0
        %1128 = vmatpush1.msra.mxu0 0.0
        %1129 = vmatprep.subr.mxu0 0.0
        %1130 = vmatpush1.msra.mxu0 0.0
        %1131 = vmatprep.mubr.f32.mxu0 0.0
        %1132 = vmatmul.mubr.f32.gmra.mrb[0].mxu0 %v1065
        %v1133 = vpop.f32.mrb[0].mxu0
        %v1134 = vadd.f32 0.0, %v1133
        %v1135 = vpop.f32.mrb[0].mxu0
        %1136 = vdwg.mxu0
        %v1138 = vsel %vm1063, %v1056, 0
        %1140 = vmatprep.subr.mxu0 0.0
        %1141 = vmatpush1.msra.mxu0 %v977
        %1142 = vmatprep.subr.mxu0 0.0
        %1143 = vmatpush1.msra.mxu0 %v978
        %1144 = vmatprep.subr.mxu0 0.0
        %1145 = vmatpush1.msra.mxu0 0.0
        %1146 = vmatprep.subr.mxu0 0.0
        %1147 = vmatpush1.msra.mxu0 0.0
        %1148 = vmatprep.subr.mxu0 0.0
        %1149 = vmatpush1.msra.mxu0 0.0
        %1150 = vmatprep.subr.mxu0 0.0
        %1151 = vmatpush1.msra.mxu0 0.0
        %1152 = vmatprep.subr.mxu0 0.0
        %1153 = vmatpush1.msra.mxu0 0.0
        %1154 = vmatprep.subr.mxu0 0.0
        %1155 = vmatpush1.msra.mxu0 0.0
        %1156 = vmatprep.subr.mxu0 0.0
        %1157 = vmatpush1.msra.mxu0 0.0
        %1158 = vmatprep.subr.mxu0 0.0
        %1159 = vmatpush1.msra.mxu0 0.0
        %1160 = vmatprep.subr.mxu0 0.0
        %1161 = vmatpush1.msra.mxu0 0.0
        %1162 = vmatprep.subr.mxu0 0.0
        %1163 = vmatpush1.msra.mxu0 0.0
        %1164 = vmatprep.subr.mxu0 0.0
        %1165 = vmatpush1.msra.mxu0 0.0
        %1166 = vmatprep.subr.mxu0 0.0
        %1167 = vmatpush1.msra.mxu0 0.0
        %1168 = vmatprep.subr.mxu0 0.0
        %1169 = vmatpush1.msra.mxu0 0.0
        %1170 = vmatprep.subr.mxu0 0.0
        %1171 = vmatpush1.msra.mxu0 0.0
        %1172 = vmatprep.subr.mxu0 0.0
        %1173 = vmatpush1.msra.mxu0 0.0
        %1174 = vmatprep.subr.mxu0 0.0
        %1175 = vmatpush1.msra.mxu0 0.0
        %1176 = vmatprep.subr.mxu0 0.0
        %1177 = vmatpush1.msra.mxu0 0.0
        %1178 = vmatprep.subr.mxu0 0.0
        %1179 = vmatpush1.msra.mxu0 0.0
        %1180 = vmatprep.subr.mxu0 0.0
        %1181 = vmatpush1.msra.mxu0 0.0
        %1182 = vmatprep.subr.mxu0 0.0
        %1183 = vmatpush1.msra.mxu0 0.0
        %1184 = vmatprep.subr.mxu0 0.0
        %1185 = vmatpush1.msra.mxu0 0.0
        %1186 = vmatprep.subr.mxu0 0.0
        %1187 = vmatpush1.msra.mxu0 0.0
        %1188 = vmatprep.subr.mxu0 0.0
        %1189 = vmatpush1.msra.mxu0 0.0
        %1190 = vmatprep.subr.mxu0 0.0
        %1191 = vmatpush1.msra.mxu0 0.0
        %1192 = vmatprep.subr.mxu0 0.0
        %1193 = vmatpush1.msra.mxu0 0.0
        %1194 = vmatprep.subr.mxu0 0.0
        %1195 = vmatpush1.msra.mxu0 0.0
        %1196 = vmatprep.subr.mxu0 0.0
        %1197 = vmatpush1.msra.mxu0 0.0
        %1198 = vmatprep.subr.mxu0 0.0
        %1199 = vmatpush1.msra.mxu0 0.0
        %1200 = vmatprep.subr.mxu0 0.0
        %1201 = vmatpush1.msra.mxu0 0.0
        %1202 = vmatprep.subr.mxu0 0.0
        %1203 = vmatpush1.msra.mxu0 0.0
        %1204 = vmatprep.mubr.f32.mxu0 0.0
        %1205 = vmatmul.mubr.f32.gmra.mrb[0].mxu0 %v1138
        %v1206 = vpop.f32.mrb[0].mxu0
        %v1207 = vadd.f32 0.0, %v1206
        %v1208 = vpop.f32.mrb[0].mxu0
        %1209 = vdwg.mxu0
        %v1211 = vsel %vm1063, %v1057, 0
        %1213 = vmatprep.subr.mxu0 0.0
        %1214 = vmatpush1.msra.mxu0 %v979
        %1215 = vmatprep.subr.mxu0 0.0
        %1216 = vmatpush1.msra.mxu0 %v980
        %1217 = vmatprep.subr.mxu0 0.0
        %1218 = vmatpush1.msra.mxu0 0.0
        %1219 = vmatprep.subr.mxu0 0.0
        %1220 = vmatpush1.msra.mxu0 0.0
        %1221 = vmatprep.subr.mxu0 0.0
        %1222 = vmatpush1.msra.mxu0 0.0
        %1223 = vmatprep.subr.mxu0 0.0
        %1224 = vmatpush1.msra.mxu0 0.0
        %1225 = vmatprep.subr.mxu0 0.0
        %1226 = vmatpush1.msra.mxu0 0.0
        %1227 = vmatprep.subr.mxu0 0.0
        %1228 = vmatpush1.msra.mxu0 0.0
        %1229 = vmatprep.subr.mxu0 0.0
        %1230 = vmatpush1.msra.mxu0 0.0
        %1231 = vmatprep.subr.mxu0 0.0
        %1232 = vmatpush1.msra.mxu0 0.0
        %1233 = vmatprep.subr.mxu0 0.0
        %1234 = vmatpush1.msra.mxu0 0.0
        %1235 = vmatprep.subr.mxu0 0.0
        %1236 = vmatpush1.msra.mxu0 0.0
        %1237 = vmatprep.subr.mxu0 0.0
        %1238 = vmatpush1.msra.mxu0 0.0
        %1239 = vmatprep.subr.mxu0 0.0
        %1240 = vmatpush1.msra.mxu0 0.0
        %1241 = vmatprep.subr.mxu0 0.0
        %1242 = vmatpush1.msra.mxu0 0.0
        %1243 = vmatprep.subr.mxu0 0.0
        %1244 = vmatpush1.msra.mxu0 0.0
        %1245 = vmatprep.subr.mxu0 0.0
        %1246 = vmatpush1.msra.mxu0 0.0
        %1247 = vmatprep.subr.mxu0 0.0
        %1248 = vmatpush1.msra.mxu0 0.0
        %1249 = vmatprep.subr.mxu0 0.0
        %1250 = vmatpush1.msra.mxu0 0.0
        %1251 = vmatprep.subr.mxu0 0.0
        %1252 = vmatpush1.msra.mxu0 0.0
        %1253 = vmatprep.subr.mxu0 0.0
        %1254 = vmatpush1.msra.mxu0 0.0
        %1255 = vmatprep.subr.mxu0 0.0
        %1256 = vmatpush1.msra.mxu0 0.0
        %1257 = vmatprep.subr.mxu0 0.0
        %1258 = vmatpush1.msra.mxu0 0.0
        %1259 = vmatprep.subr.mxu0 0.0
        %1260 = vmatpush1.msra.mxu0 0.0
        %1261 = vmatprep.subr.mxu0 0.0
        %1262 = vmatpush1.msra.mxu0 0.0
        %1263 = vmatprep.subr.mxu0 0.0
        %1264 = vmatpush1.msra.mxu0 0.0
        %1265 = vmatprep.subr.mxu0 0.0
        %1266 = vmatpush1.msra.mxu0 0.0
        %1267 = vmatprep.subr.mxu0 0.0
        %1268 = vmatpush1.msra.mxu0 0.0
        %1269 = vmatprep.subr.mxu0 0.0
        %1270 = vmatpush1.msra.mxu0 0.0
        %1271 = vmatprep.subr.mxu0 0.0
        %1272 = vmatpush1.msra.mxu0 0.0
        %1273 = vmatprep.subr.mxu0 0.0
        %1274 = vmatpush1.msra.mxu0 0.0
        %1275 = vmatprep.subr.mxu0 0.0
        %1276 = vmatpush1.msra.mxu0 0.0
        %1277 = vmatprep.mubr.f32.mxu0 0.0
        %1278 = vmatmul.mubr.f32.gmra.mrb[0].mxu0 %v1211
        %v1279 = vpop.f32.mrb[0].mxu0
        %v1280 = vadd.f32 0.0, %v1279
        %v1281 = vpop.f32.mrb[0].mxu0
        %1282 = vdwg.mxu0
        %v1284 = vsel %vm1063, %v1058, 0
        %1286 = vmatprep.subr.mxu0 0.0
        %1287 = vmatpush1.msra.mxu0 %v981
        %1288 = vmatprep.subr.mxu0 0.0
        %1289 = vmatpush1.msra.mxu0 %v982
        %1290 = vmatprep.subr.mxu0 0.0
        %1291 = vmatpush1.msra.mxu0 0.0
        %1292 = vmatprep.subr.mxu0 0.0
        %1293 = vmatpush1.msra.mxu0 0.0
        %1294 = vmatprep.subr.mxu0 0.0
        %1295 = vmatpush1.msra.mxu0 0.0
        %1296 = vmatprep.subr.mxu0 0.0
        %1297 = vmatpush1.msra.mxu0 0.0
        %1298 = vmatprep.subr.mxu0 0.0
        %1299 = vmatpush1.msra.mxu0 0.0
        %1300 = vmatprep.subr.mxu0 0.0
        %1301 = vmatpush1.msra.mxu0 0.0
        %1302 = vmatprep.subr.mxu0 0.0
        %1303 = vmatpush1.msra.mxu0 0.0
        %1304 = vmatprep.subr.mxu0 0.0
        %1305 = vmatpush1.msra.mxu0 0.0
        %1306 = vmatprep.subr.mxu0 0.0
        %1307 = vmatpush1.msra.mxu0 0.0
        %1308 = vmatprep.subr.mxu0 0.0
        %1309 = vmatpush1.msra.mxu0 0.0
        %1310 = vmatprep.subr.mxu0 0.0
        %1311 = vmatpush1.msra.mxu0 0.0
        %1312 = vmatprep.subr.mxu0 0.0
        %1313 = vmatpush1.msra.mxu0 0.0
        %1314 = vmatprep.subr.mxu0 0.0
        %1315 = vmatpush1.msra.mxu0 0.0
        %1316 = vmatprep.subr.mxu0 0.0
        %1317 = vmatpush1.msra.mxu0 0.0
        %1318 = vmatprep.subr.mxu0 0.0
        %1319 = vmatpush1.msra.mxu0 0.0
        %1320 = vmatprep.subr.mxu0 0.0
        %1321 = vmatpush1.msra.mxu0 0.0
        %1322 = vmatprep.subr.mxu0 0.0
        %1323 = vmatpush1.msra.mxu0 0.0
        %1324 = vmatprep.subr.mxu0 0.0
        %1325 = vmatpush1.msra.mxu0 0.0
        %1326 = vmatprep.subr.mxu0 0.0
        %1327 = vmatpush1.msra.mxu0 0.0
        %1328 = vmatprep.subr.mxu0 0.0
        %1329 = vmatpush1.msra.mxu0 0.0
        %1330 = vmatprep.subr.mxu0 0.0
        %1331 = vmatpush1.msra.mxu0 0.0
        %1332 = vmatprep.subr.mxu0 0.0
        %1333 = vmatpush1.msra.mxu0 0.0
        %1334 = vmatprep.subr.mxu0 0.0
        %1335 = vmatpush1.msra.mxu0 0.0
        %1336 = vmatprep.subr.mxu0 0.0
        %1337 = vmatpush1.msra.mxu0 0.0
        %1338 = vmatprep.subr.mxu0 0.0
        %1339 = vmatpush1.msra.mxu0 0.0
        %1340 = vmatprep.subr.mxu0 0.0
        %1341 = vmatpush1.msra.mxu0 0.0
        %1342 = vmatprep.subr.mxu0 0.0
        %1343 = vmatpush1.msra.mxu0 0.0
        %1344 = vmatprep.subr.mxu0 0.0
        %1345 = vmatpush1.msra.mxu0 0.0
        %1346 = vmatprep.subr.mxu0 0.0
        %1347 = vmatpush1.msra.mxu0 0.0
        %1348 = vmatprep.subr.mxu0 0.0
        %1349 = vmatpush1.msra.mxu0 0.0
        %1350 = vmatprep.mubr.f32.mxu0 0.0
        %1351 = vmatmul.mubr.f32.gmra.mrb[0].mxu0 %v1284
        %v1352 = vpop.f32.mrb[0].mxu0
        %v1353 = vadd.f32 0.0, %v1352
        %v1354 = vpop.f32.mrb[0].mxu0
        %1355 = vdwg.mxu0
        %v1357 = vsel %vm1063, %v1059, 0
        %1359 = vmatprep.subr.mxu0 0.0
        %1360 = vmatpush1.msra.mxu0 %v983
        %1361 = vmatprep.subr.mxu0 0.0
        %1362 = vmatpush1.msra.mxu0 %v984
        %1363 = vmatprep.subr.mxu0 0.0
        %1364 = vmatpush1.msra.mxu0 0.0
        %1365 = vmatprep.subr.mxu0 0.0
        %1366 = vmatpush1.msra.mxu0 0.0
        %1367 = vmatprep.subr.mxu0 0.0
        %1368 = vmatpush1.msra.mxu0 0.0
        %1369 = vmatprep.subr.mxu0 0.0
        %1370 = vmatpush1.msra.mxu0 0.0
        %1371 = vmatprep.subr.mxu0 0.0
        %1372 = vmatpush1.msra.mxu0 0.0
        %1373 = vmatprep.subr.mxu0 0.0
        %1374 = vmatpush1.msra.mxu0 0.0
        %1375 = vmatprep.subr.mxu0 0.0
        %1376 = vmatpush1.msra.mxu0 0.0
        %1377 = vmatprep.subr.mxu0 0.0
        %1378 = vmatpush1.msra.mxu0 0.0
        %1379 = vmatprep.subr.mxu0 0.0
        %1380 = vmatpush1.msra.mxu0 0.0
        %1381 = vmatprep.subr.mxu0 0.0
        %1382 = vmatpush1.msra.mxu0 0.0
        %1383 = vmatprep.subr.mxu0 0.0
        %1384 = vmatpush1.msra.mxu0 0.0
        %1385 = vmatprep.subr.mxu0 0.0
        %1386 = vmatpush1.msra.mxu0 0.0
        %1387 = vmatprep.subr.mxu0 0.0
        %1388 = vmatpush1.msra.mxu0 0.0
        %1389 = vmatprep.subr.mxu0 0.0
        %1390 = vmatpush1.msra.mxu0 0.0
        %1391 = vmatprep.subr.mxu0 0.0
        %1392 = vmatpush1.msra.mxu0 0.0
        %1393 = vmatprep.subr.mxu0 0.0
        %1394 = vmatpush1.msra.mxu0 0.0
        %1395 = vmatprep.subr.mxu0 0.0
        %1396 = vmatpush1.msra.mxu0 0.0
        %1397 = vmatprep.subr.mxu0 0.0
        %1398 = vmatpush1.msra.mxu0 0.0
        %1399 = vmatprep.subr.mxu0 0.0
        %1400 = vmatpush1.msra.mxu0 0.0
        %1401 = vmatprep.subr.mxu0 0.0
        %1402 = vmatpush1.msra.mxu0 0.0
        %1403 = vmatprep.subr.mxu0 0.0
        %1404 = vmatpush1.msra.mxu0 0.0
        %1405 = vmatprep.subr.mxu0 0.0
        %1406 = vmatpush1.msra.mxu0 0.0
        %1407 = vmatprep.subr.mxu0 0.0
        %1408 = vmatpush1.msra.mxu0 0.0
        %1409 = vmatprep.subr.mxu0 0.0
        %1410 = vmatpush1.msra.mxu0 0.0
        %1411 = vmatprep.subr.mxu0 0.0
        %1412 = vmatpush1.msra.mxu0 0.0
        %1413 = vmatprep.subr.mxu0 0.0
        %1414 = vmatpush1.msra.mxu0 0.0
        %1415 = vmatprep.subr.mxu0 0.0
        %1416 = vmatpush1.msra.mxu0 0.0
        %1417 = vmatprep.subr.mxu0 0.0
        %1418 = vmatpush1.msra.mxu0 0.0
        %1419 = vmatprep.subr.mxu0 0.0
        %1420 = vmatpush1.msra.mxu0 0.0
        %1421 = vmatprep.subr.mxu0 0.0
        %1422 = vmatpush1.msra.mxu0 0.0
        %1423 = vmatprep.mubr.f32.mxu0 0.0
        %1424 = vmatmul.mubr.f32.gmra.mrb[0].mxu0 %v1357
        %v1425 = vpop.f32.mrb[0].mxu0
        %v1426 = vadd.f32 0.0, %v1425
        %v1427 = vpop.f32.mrb[0].mxu0
        %1428 = vdwg.mxu0
        %v1430 = vsel %vm1063, %v1060, 0
        %1432 = vmatprep.subr.mxu0 0.0
        %1433 = vmatpush1.msra.mxu0 %v985
        %1434 = vmatprep.subr.mxu0 0.0
        %1435 = vmatpush1.msra.mxu0 %v986
        %1436 = vmatprep.subr.mxu0 0.0
        %1437 = vmatpush1.msra.mxu0 0.0
        %1438 = vmatprep.subr.mxu0 0.0
        %1439 = vmatpush1.msra.mxu0 0.0
        %1440 = vmatprep.subr.mxu0 0.0
        %1441 = vmatpush1.msra.mxu0 0.0
        %1442 = vmatprep.subr.mxu0 0.0
        %1443 = vmatpush1.msra.mxu0 0.0
        %1444 = vmatprep.subr.mxu0 0.0
        %1445 = vmatpush1.msra.mxu0 0.0
        %1446 = vmatprep.subr.mxu0 0.0
        %1447 = vmatpush1.msra.mxu0 0.0
        %1448 = vmatprep.subr.mxu0 0.0
        %1449 = vmatpush1.msra.mxu0 0.0
        %1450 = vmatprep.subr.mxu0 0.0
        %1451 = vmatpush1.msra.mxu0 0.0
        %1452 = vmatprep.subr.mxu0 0.0
        %1453 = vmatpush1.msra.mxu0 0.0
        %1454 = vmatprep.subr.mxu0 0.0
        %1455 = vmatpush1.msra.mxu0 0.0
        %1456 = vmatprep.subr.mxu0 0.0
        %1457 = vmatpush1.msra.mxu0 0.0
        %1458 = vmatprep.subr.mxu0 0.0
        %1459 = vmatpush1.msra.mxu0 0.0
        %1460 = vmatprep.subr.mxu0 0.0
        %1461 = vmatpush1.msra.mxu0 0.0
        %1462 = vmatprep.subr.mxu0 0.0
        %1463 = vmatpush1.msra.mxu0 0.0
        %1464 = vmatprep.subr.mxu0 0.0
        %1465 = vmatpush1.msra.mxu0 0.0
        %1466 = vmatprep.subr.mxu0 0.0
        %1467 = vmatpush1.msra.mxu0 0.0
        %1468 = vmatprep.subr.mxu0 0.0
        %1469 = vmatpush1.msra.mxu0 0.0
        %1470 = vmatprep.subr.mxu0 0.0
        %1471 = vmatpush1.msra.mxu0 0.0
        %1472 = vmatprep.subr.mxu0 0.0
        %1473 = vmatpush1.msra.mxu0 0.0
        %1474 = vmatprep.subr.mxu0 0.0
        %1475 = vmatpush1.msra.mxu0 0.0
        %1476 = vmatprep.subr.mxu0 0.0
        %1477 = vmatpush1.msra.mxu0 0.0
        %1478 = vmatprep.subr.mxu0 0.0
        %1479 = vmatpush1.msra.mxu0 0.0
        %1480 = vmatprep.subr.mxu0 0.0
        %1481 = vmatpush1.msra.mxu0 0.0
        %1482 = vmatprep.subr.mxu0 0.0
        %1483 = vmatpush1.msra.mxu0 0.0
        %1484 = vmatprep.subr.mxu0 0.0
        %1485 = vmatpush1.msra.mxu0 0.0
        %1486 = vmatprep.subr.mxu0 0.0
        %1487 = vmatpush1.msra.mxu0 0.0
        %1488 = vmatprep.subr.mxu0 0.0
        %1489 = vmatpush1.msra.mxu0 0.0
        %1490 = vmatprep.subr.mxu0 0.0
        %1491 = vmatpush1.msra.mxu0 0.0
        %1492 = vmatprep.subr.mxu0 0.0
        %1493 = vmatpush1.msra.mxu0 0.0
        %1494 = vmatprep.subr.mxu0 0.0
        %1495 = vmatpush1.msra.mxu0 0.0
        %1496 = vmatprep.mubr.f32.mxu0 0.0
        %1497 = vmatmul.mubr.f32.gmra.mrb[0].mxu0 %v1430
        %v1498 = vpop.f32.mrb[0].mxu0
        %v1499 = vadd.f32 0.0, %v1498
        %v1500 = vpop.f32.mrb[0].mxu0
        %1501 = vdwg.mxu0
        %v1503 = vsel %vm1063, %v1061, 0
        %1505 = vmatprep.subr.mxu0 0.0
        %1506 = vmatpush1.msra.mxu0 %v987
        %1507 = vmatprep.subr.mxu0 0.0
        %1508 = vmatpush1.msra.mxu0 %v988
        %1509 = vmatprep.subr.mxu0 0.0
        %1510 = vmatpush1.msra.mxu0 0.0
        %1511 = vmatprep.subr.mxu0 0.0
        %1512 = vmatpush1.msra.mxu0 0.0
        %1513 = vmatprep.subr.mxu0 0.0
        %1514 = vmatpush1.msra.mxu0 0.0
        %1515 = vmatprep.subr.mxu0 0.0
        %1516 = vmatpush1.msra.mxu0 0.0
        %1517 = vmatprep.subr.mxu0 0.0
        %1518 = vmatpush1.msra.mxu0 0.0
        %1519 = vmatprep.subr.mxu0 0.0
        %1520 = vmatpush1.msra.mxu0 0.0
        %1521 = vmatprep.subr.mxu0 0.0
        %1522 = vmatpush1.msra.mxu0 0.0
        %1523 = vmatprep.subr.mxu0 0.0
        %1524 = vmatpush1.msra.mxu0 0.0
        %1525 = vmatprep.subr.mxu0 0.0
        %1526 = vmatpush1.msra.mxu0 0.0
        %1527 = vmatprep.subr.mxu0 0.0
        %1528 = vmatpush1.msra.mxu0 0.0
        %1529 = vmatprep.subr.mxu0 0.0
        %1530 = vmatpush1.msra.mxu0 0.0
        %1531 = vmatprep.subr.mxu0 0.0
        %1532 = vmatpush1.msra.mxu0 0.0
        %1533 = vmatprep.subr.mxu0 0.0
        %1534 = vmatpush1.msra.mxu0 0.0
        %1535 = vmatprep.subr.mxu0 0.0
        %1536 = vmatpush1.msra.mxu0 0.0
        %1537 = vmatprep.subr.mxu0 0.0
        %1538 = vmatpush1.msra.mxu0 0.0
        %1539 = vmatprep.subr.mxu0 0.0
        %1540 = vmatpush1.msra.mxu0 0.0
        %1541 = vmatprep.subr.mxu0 0.0
        %1542 = vmatpush1.msra.mxu0 0.0
        %1543 = vmatprep.subr.mxu0 0.0
        %1544 = vmatpush1.msra.mxu0 0.0
        %1545 = vmatprep.subr.mxu0 0.0
        %1546 = vmatpush1.msra.mxu0 0.0
        %1547 = vmatprep.subr.mxu0 0.0
        %1548 = vmatpush1.msra.mxu0 0.0
        %1549 = vmatprep.subr.mxu0 0.0
        %1550 = vmatpush1.msra.mxu0 0.0
        %1551 = vmatprep.subr.mxu0 0.0
        %1552 = vmatpush1.msra.mxu0 0.0
        %1553 = vmatprep.subr.mxu0 0.0
        %1554 = vmatpush1.msra.mxu0 0.0
        %1555 = vmatprep.subr.mxu0 0.0
        %1556 = vmatpush1.msra.mxu0 0.0
        %1557 = vmatprep.subr.mxu0 0.0
        %1558 = vmatpush1.msra.mxu0 0.0
        %1559 = vmatprep.subr.mxu0 0.0
        %1560 = vmatpush1.msra.mxu0 0.0
        %1561 = vmatprep.subr.mxu0 0.0
        %1562 = vmatpush1.msra.mxu0 0.0
        %1563 = vmatprep.subr.mxu0 0.0
        %1564 = vmatpush1.msra.mxu0 0.0
        %1565 = vmatprep.subr.mxu0 0.0
        %1566 = vmatpush1.msra.mxu0 0.0
        %1567 = vmatprep.subr.mxu0 0.0
        %1568 = vmatpush1.msra.mxu0 0.0
        %1569 = vmatprep.mubr.f32.mxu0 0.0
        %1570 = vmatmul.mubr.f32.gmra.mrb[0].mxu0 %v1503
        %v1571 = vpop.f32.mrb[0].mxu0
        %v1572 = vadd.f32 0.0, %v1571
        %v1573 = vpop.f32.mrb[0].mxu0
        %1574 = vdwg.mxu0
        %v1576 = vsel %vm1063, %v1062, 0
        %1578 = vmatprep.subr.mxu0 0.0
        %1579 = vmatpush1.msra.mxu0 %v989
        %1580 = vmatprep.subr.mxu0 0.0
        %1581 = vmatpush1.msra.mxu0 %v990
        %1582 = vmatprep.subr.mxu0 0.0
        %1583 = vmatpush1.msra.mxu0 0.0
        %1584 = vmatprep.subr.mxu0 0.0
        %1585 = vmatpush1.msra.mxu0 0.0
        %1586 = vmatprep.subr.mxu0 0.0
        %1587 = vmatpush1.msra.mxu0 0.0
        %1588 = vmatprep.subr.mxu0 0.0
        %1589 = vmatpush1.msra.mxu0 0.0
        %1590 = vmatprep.subr.mxu0 0.0
        %1591 = vmatpush1.msra.mxu0 0.0
        %1592 = vmatprep.subr.mxu0 0.0
        %1593 = vmatpush1.msra.mxu0 0.0
        %1594 = vmatprep.subr.mxu0 0.0
        %1595 = vmatpush1.msra.mxu0 0.0
        %1596 = vmatprep.subr.mxu0 0.0
        %1597 = vmatpush1.msra.mxu0 0.0
        %1598 = vmatprep.subr.mxu0 0.0
        %1599 = vmatpush1.msra.mxu0 0.0
        %1600 = vmatprep.subr.mxu0 0.0
        %1601 = vmatpush1.msra.mxu0 0.0
        %1602 = vmatprep.subr.mxu0 0.0
        %1603 = vmatpush1.msra.mxu0 0.0
        %1604 = vmatprep.subr.mxu0 0.0
        %1605 = vmatpush1.msra.mxu0 0.0
        %1606 = vmatprep.subr.mxu0 0.0
        %1607 = vmatpush1.msra.mxu0 0.0
        %1608 = vmatprep.subr.mxu0 0.0
        %1609 = vmatpush1.msra.mxu0 0.0
        %1610 = vmatprep.subr.mxu0 0.0
        %1611 = vmatpush1.msra.mxu0 0.0
        %1612 = vmatprep.subr.mxu0 0.0
        %1613 = vmatpush1.msra.mxu0 0.0
        %1614 = vmatprep.subr.mxu0 0.0
        %1615 = vmatpush1.msra.mxu0 0.0
        %1616 = vmatprep.subr.mxu0 0.0
        %1617 = vmatpush1.msra.mxu0 0.0
        %1618 = vmatprep.subr.mxu0 0.0
        %1619 = vmatpush1.msra.mxu0 0.0
        %1620 = vmatprep.subr.mxu0 0.0
        %1621 = vmatpush1.msra.mxu0 0.0
        %1622 = vmatprep.subr.mxu0 0.0
        %1623 = vmatpush1.msra.mxu0 0.0
        %1624 = vmatprep.subr.mxu0 0.0
        %1625 = vmatpush1.msra.mxu0 0.0
        %1626 = vmatprep.subr.mxu0 0.0
        %1627 = vmatpush1.msra.mxu0 0.0
        %1628 = vmatprep.subr.mxu0 0.0
        %1629 = vmatpush1.msra.mxu0 0.0
        %1630 = vmatprep.subr.mxu0 0.0
        %1631 = vmatpush1.msra.mxu0 0.0
        %1632 = vmatprep.subr.mxu0 0.0
        %1633 = vmatpush1.msra.mxu0 0.0
        %1634 = vmatprep.subr.mxu0 0.0
        %1635 = vmatpush1.msra.mxu0 0.0
        %1636 = vmatprep.subr.mxu0 0.0
        %1637 = vmatpush1.msra.mxu0 0.0
        %1638 = vmatprep.subr.mxu0 0.0
        %1639 = vmatpush1.msra.mxu0 0.0
        %1640 = vmatprep.subr.mxu0 0.0
        %1641 = vmatpush1.msra.mxu0 0.0
        %1642 = vmatprep.mubr.f32.mxu0 0.0
        %1643 = vmatmul.mubr.f32.gmra.mrb[0].mxu0 %v1576
        %v1644 = vpop.f32.mrb[0].mxu0
        %v1645 = vadd.f32 0.0, %v1644
        %v1646 = vpop.f32.mrb[0].mxu0
        %1647 = vdwg.mxu0
        %v1648 = vsel %vm1063, %v1055, 0.0
        %1649 = vadd.xlane.f32.xlu0 %v1648
        %v1650 = vpop.xlane.xlu0 %1649
        %v1651 = vsel %vm1063, %v1056, 0.0
        %1652 = vadd.xlane.f32.xlu0 %v1651
        %v1653 = vpop.xlane.xlu0 %1652
        %v1654 = vsel %vm1063, %v1057, 0.0
        %1655 = vadd.xlane.f32.xlu0 %v1654
        %v1656 = vpop.xlane.xlu0 %1655
        %v1657 = vsel %vm1063, %v1058, 0.0
        %1658 = vadd.xlane.f32.xlu0 %v1657
        %v1659 = vpop.xlane.xlu0 %1658
        %v1660 = vsel %vm1063, %v1059, 0.0
        %1661 = vadd.xlane.f32.xlu0 %v1660
        %v1662 = vpop.xlane.xlu0 %1661
        %v1663 = vsel %vm1063, %v1060, 0.0
        %1664 = vadd.xlane.f32.xlu0 %v1663
        %v1665 = vpop.xlane.xlu0 %1664
        %v1666 = vsel %vm1063, %v1061, 0.0
        %1667 = vadd.xlane.f32.xlu0 %v1666
        %v1668 = vpop.xlane.xlu0 %1667
        %v1669 = vsel %vm1063, %v1062, 0.0
        %1670 = vadd.xlane.f32.xlu0 %v1669
        %v1671 = vpop.xlane.xlu0 %1670
        %v1672 = vadd.f32 %v1650, 0.0001
        %v1673 = vadd.f32 %v1653, 0.0001
        %v1674 = vadd.f32 %v1656, 0.0001
        %v1675 = vadd.f32 %v1659, 0.0001
        %v1676 = vadd.f32 %v1662, 0.0001
        %v1677 = vadd.f32 %v1665, 0.0001
        %v1678 = vadd.f32 %v1668, 0.0001
        %v1679 = vadd.f32 %v1671, 0.0001
        %v1680 = vrcp.pop %v1672
        %v1681 = vmul.f32 %v1134, %v1680
        %v1682 = vrcp.pop %v1673
        %v1683 = vmul.f32 %v1207, %v1682
        %v1684 = vrcp.pop %v1674
        %v1685 = vmul.f32 %v1280, %v1684
        %v1686 = vrcp.pop %v1675
        %v1687 = vmul.f32 %v1353, %v1686
        %v1688 = vrcp.pop %v1676
        %v1689 = vmul.f32 %v1426, %v1688
        %v1690 = vrcp.pop %v1677
        %v1691 = vmul.f32 %v1499, %v1690
        %v1692 = vrcp.pop %v1678
        %v1693 = vmul.f32 %v1572, %v1692
        %v1694 = vrcp.pop %v1679
        %v1695 = vmul.f32 %v1645, %v1694
        %vm1696 = vcmask 261120
        %v1697 = vsel %vm1696, %v1681, 0.0
        %1698 = vadd.xlane.f32.xlu0 %v1697
        %v1699 = vpop.xlane.xlu0 %1698
        %v1700 = vsel %vm1696, %v1683, 0.0
        %1701 = vadd.xlane.f32.xlu0 %v1700
        %v1702 = vpop.xlane.xlu0 %1701
        %v1703 = vsel %vm1696, %v1685, 0.0
        %1704 = vadd.xlane.f32.xlu0 %v1703
        %v1705 = vpop.xlane.xlu0 %1704
        %v1706 = vsel %vm1696, %v1687, 0.0
        %1707 = vadd.xlane.f32.xlu0 %v1706
        %v1708 = vpop.xlane.xlu0 %1707
        %v1709 = vsel %vm1696, %v1689, 0.0
        %1710 = vadd.xlane.f32.xlu0 %v1709
        %v1711 = vpop.xlane.xlu0 %1710
        %v1712 = vsel %vm1696, %v1691, 0.0
        %1713 = vadd.xlane.f32.xlu0 %v1712
        %v1714 = vpop.xlane.xlu0 %1713
        %v1715 = vsel %vm1696, %v1693, 0.0
        %1716 = vadd.xlane.f32.xlu0 %v1715
        %v1717 = vpop.xlane.xlu0 %1716
        %v1718 = vsel %vm1696, %v1695, 0.0
        %1719 = vadd.xlane.f32.xlu0 %v1718
        %v1720 = vpop.xlane.xlu0 %1719
        %v1721 = vrcp.pop 32.0
        %v1722 = vmul.f32 %v1699, %v1721
        %v1723 = vmul.f32 %v1702, %v1721
        %v1724 = vmul.f32 %v1705, %v1721
        %v1725 = vmul.f32 %v1708, %v1721
        %v1726 = vmul.f32 %v1711, %v1721
        %v1727 = vmul.f32 %v1714, %v1721
        %v1728 = vmul.f32 %v1717, %v1721
        %v1729 = vmul.f32 %v1720, %v1721
        %v1730 = vsub.f32 %v1681, %v1722
        %v1731 = vsub.f32 %v1683, %v1723
        %v1732 = vsub.f32 %v1685, %v1724
        %v1733 = vsub.f32 %v1687, %v1725
        %v1734 = vsub.f32 %v1689, %v1726
        %v1735 = vsub.f32 %v1691, %v1727
        %v1736 = vsub.f32 %v1693, %v1728
        %v1737 = vsub.f32 %v1695, %v1729
        %v1738 = vmul.f32 %v1730, %v1730
        %v1739 = vmul.f32 %v1731, %v1731
        %v1740 = vmul.f32 %v1732, %v1732
        %v1741 = vmul.f32 %v1733, %v1733
        %v1742 = vmul.f32 %v1734, %v1734
        %v1743 = vmul.f32 %v1735, %v1735
        %v1744 = vmul.f32 %v1736, %v1736
        %v1745 = vmul.f32 %v1737, %v1737
        %v1746 = vsel %vm1696, %v1738, 0.0
        %1747 = vadd.xlane.f32.xlu0 %v1746
        %v1748 = vpop.xlane.xlu0 %1747
        %v1749 = vsel %vm1696, %v1739, 0.0
        %1750 = vadd.xlane.f32.xlu0 %v1749
        %v1751 = vpop.xlane.xlu0 %1750
        %v1752 = vsel %vm1696, %v1740, 0.0
        %1753 = vadd.xlane.f32.xlu0 %v1752
        %v1754 = vpop.xlane.xlu0 %1753
        %v1755 = vsel %vm1696, %v1741, 0.0
        %1756 = vadd.xlane.f32.xlu0 %v1755
        %v1757 = vpop.xlane.xlu0 %1756
        %v1758 = vsel %vm1696, %v1742, 0.0
        %1759 = vadd.xlane.f32.xlu0 %v1758
        %v1760 = vpop.xlane.xlu0 %1759
        %v1761 = vsel %vm1696, %v1743, 0.0
        %1762 = vadd.xlane.f32.xlu0 %v1761
        %v1763 = vpop.xlane.xlu0 %1762
        %v1764 = vsel %vm1696, %v1744, 0.0
        %1765 = vadd.xlane.f32.xlu0 %v1764
        %v1766 = vpop.xlane.xlu0 %1765
        %v1767 = vsel %vm1696, %v1745, 0.0
        %1768 = vadd.xlane.f32.xlu0 %v1767
        %v1769 = vpop.xlane.xlu0 %1768
        %v1770 = vmul.f32 %v1748, %v1721
        %v1771 = vmul.f32 %v1751, %v1721
        %v1772 = vmul.f32 %v1754, %v1721
        %v1773 = vmul.f32 %v1757, %v1721
        %v1774 = vmul.f32 %v1760, %v1721
        %v1775 = vmul.f32 %v1763, %v1721
        %v1776 = vmul.f32 %v1766, %v1721
        %v1777 = vmul.f32 %v1769, %v1721
        %v1778 = vadd.f32 %v1770, 1e-05
        %v1779 = vadd.f32 %v1771, 1e-05
        %v1780 = vadd.f32 %v1772, 1e-05
        %v1781 = vadd.f32 %v1773, 1e-05
        %v1782 = vadd.f32 %v1774, 1e-05
        %v1783 = vadd.f32 %v1775, 1e-05
        %v1784 = vadd.f32 %v1776, 1e-05
        %v1785 = vadd.f32 %v1777, 1e-05
        %v1786 = vrsqrt.pop %v1778
        %v1787 = vrsqrt.pop %v1779
        %v1788 = vrsqrt.pop %v1780
        %v1789 = vrsqrt.pop %v1781
        %v1790 = vrsqrt.pop %v1782
        %v1791 = vrsqrt.pop %v1783
        %v1792 = vrsqrt.pop %v1784
        %v1793 = vrsqrt.pop %v1785
        %v1794 = vmul.f32 %v1730, %v1786
        %v1795 = vmul.f32 %v1731, %v1787
        %v1796 = vmul.f32 %v1732, %v1788
        %v1797 = vmul.f32 %v1733, %v1789
        %v1798 = vmul.f32 %v1734, %v1790
        %v1799 = vmul.f32 %v1735, %v1791
        %v1800 = vmul.f32 %v1736, %v1792
        %v1801 = vmul.f32 %v1737, %v1793
        %v1802 = vld [vmem:[%s6] sm:$0x1]
        %v1804 = vlaneseq
        %v1805 = vshrl.u32 %v1804, 7
        %v1806 = vsub.s32 0, %v1805
        %v1807 = vrot.slane %v1802, %v1806
        %v1809 = vmul.f32 %v1794, %v1807
        %v1810 = vmul.f32 %v1795, %v1807
        %v1811 = vmul.f32 %v1796, %v1807
        %v1812 = vmul.f32 %v1797, %v1807
        %v1813 = vmul.f32 %v1798, %v1807
        %v1814 = vmul.f32 %v1799, %v1807
        %v1815 = vmul.f32 %v1800, %v1807
        %v1816 = vmul.f32 %v1801, %v1807
        %v1817 = vld [vmem:[%s7] sm:$0x1]
        %v1819 = vlaneseq
        %v1820 = vshrl.u32 %v1819, 7
        %v1821 = vsub.s32 0, %v1820
        %v1822 = vrot.slane %v1817, %v1821
        %v1824 = vadd.f32 %v1809, %v1822
        %v1825 = vadd.f32 %v1810, %v1822
        %v1826 = vadd.f32 %v1811, %v1822
        %v1827 = vadd.f32 %v1812, %v1822
        %v1828 = vadd.f32 %v1813, %v1822
        %v1829 = vadd.f32 %v1814, %v1822
        %v1830 = vadd.f32 %v1815, %v1822
        %v1831 = vadd.f32 %v1816, %v1822
        %v1832 = vld [vmem:[%s960] sm:$0xff]
        %v1833 = vld [vmem:[%s960 + $0x8] sm:$0xff]
        %v1834 = vld [vmem:[%s960 + $0x10] sm:$0xff]
        %v1835 = vld [vmem:[%s960 + $0x18] sm:$0xff]
        %v1836 = vld [vmem:[%s960 + $0x20] sm:$0xff]
        %v1837 = vld [vmem:[%s960 + $0x28] sm:$0xff]
        %v1838 = vld [vmem:[%s960 + $0x30] sm:$0xff]
        %v1839 = vld [vmem:[%s960 + $0x38] sm:$0xff]
        %v1840 = vld [vmem:[%s960 + $0x40] sm:$0xff]
        %v1841 = vld [vmem:[%s960 + $0x48] sm:$0xff]
        %v1842 = vld [vmem:[%s960 + $0x50] sm:$0xff]
        %v1843 = vld [vmem:[%s960 + $0x58] sm:$0xff]
        %v1844 = vld [vmem:[%s960 + $0x60] sm:$0xff]
        %v1845 = vld [vmem:[%s960 + $0x68] sm:$0xff]
        %v1846 = vld [vmem:[%s960 + $0x70] sm:$0xff]
        %v1847 = vld [vmem:[%s960 + $0x78] sm:$0xff]
        %v1849 = vsel %vm1063, %v999, 0
        %1851 = vmatprep.subr.mxu0 0.0
        %1852 = vmatpush1.msra.mxu0 %v1832
        %1853 = vmatprep.subr.mxu0 0.0
        %1854 = vmatpush1.msra.mxu0 %v1833
        %1855 = vmatprep.subr.mxu0 0.0
        %1856 = vmatpush1.msra.mxu0 0.0
        %1857 = vmatprep.subr.mxu0 0.0
        %1858 = vmatpush1.msra.mxu0 0.0
        %1859 = vmatprep.subr.mxu0 0.0
        %1860 = vmatpush1.msra.mxu0 0.0
        %1861 = vmatprep.subr.mxu0 0.0
        %1862 = vmatpush1.msra.mxu0 0.0
        %1863 = vmatprep.subr.mxu0 0.0
        %1864 = vmatpush1.msra.mxu0 0.0
        %1865 = vmatprep.subr.mxu0 0.0
        %1866 = vmatpush1.msra.mxu0 0.0
        %1867 = vmatprep.subr.mxu0 0.0
        %1868 = vmatpush1.msra.mxu0 0.0
        %1869 = vmatprep.subr.mxu0 0.0
        %1870 = vmatpush1.msra.mxu0 0.0
        %1871 = vmatprep.subr.mxu0 0.0
        %1872 = vmatpush1.msra.mxu0 0.0
        %1873 = vmatprep.subr.mxu0 0.0
        %1874 = vmatpush1.msra.mxu0 0.0
        %1875 = vmatprep.subr.mxu0 0.0
        %1876 = vmatpush1.msra.mxu0 0.0
        %1877 = vmatprep.subr.mxu0 0.0
        %1878 = vmatpush1.msra.mxu0 0.0
        %1879 = vmatprep.subr.mxu0 0.0
        %1880 = vmatpush1.msra.mxu0 0.0
        %1881 = vmatprep.subr.mxu0 0.0
        %1882 = vmatpush1.msra.mxu0 0.0
        %1883 = vmatprep.subr.mxu0 0.0
        %1884 = vmatpush1.msra.mxu0 0.0
        %1885 = vmatprep.subr.mxu0 0.0
        %1886 = vmatpush1.msra.mxu0 0.0
        %1887 = vmatprep.subr.mxu0 0.0
        %1888 = vmatpush1.msra.mxu0 0.0
        %1889 = vmatprep.subr.mxu0 0.0
        %1890 = vmatpush1.msra.mxu0 0.0
        %1891 = vmatprep.subr.mxu0 0.0
        %1892 = vmatpush1.msra.mxu0 0.0
        %1893 = vmatprep.subr.mxu0 0.0
        %1894 = vmatpush1.msra.mxu0 0.0
        %1895 = vmatprep.subr.mxu0 0.0
        %1896 = vmatpush1.msra.mxu0 0.0
        %1897 = vmatprep.subr.mxu0 0.0
        %1898 = vmatpush1.msra.mxu0 0.0
        %1899 = vmatprep.subr.mxu0 0.0
        %1900 = vmatpush1.msra.mxu0 0.0
        %1901 = vmatprep.subr.mxu0 0.0
        %1902 = vmatpush1.msra.mxu0 0.0
        %1903 = vmatprep.subr.mxu0 0.0
        %1904 = vmatpush1.msra.mxu0 0.0
        %1905 = vmatprep.subr.mxu0 0.0
        %1906 = vmatpush1.msra.mxu0 0.0
        %1907 = vmatprep.subr.mxu0 0.0
        %1908 = vmatpush1.msra.mxu0 0.0
        %1909 = vmatprep.subr.mxu0 0.0
        %1910 = vmatpush1.msra.mxu0 0.0
        %1911 = vmatprep.subr.mxu0 0.0
        %1912 = vmatpush1.msra.mxu0 0.0
        %1913 = vmatprep.subr.mxu0 0.0
        %1914 = vmatpush1.msra.mxu0 0.0
        %1915 = vmatprep.mubr.f32.mxu0 0.0
        %1916 = vmatmul.mubr.f32.gmra.mrb[0].mxu0 %v1849
        %v1917 = vpop.f32.mrb[0].mxu0
        %v1918 = vadd.f32 0.0, %v1917
        %v1919 = vpop.f32.mrb[0].mxu0
        %1920 = vdwg.mxu0
        %v1922 = vsel %vm1063, %v1000, 0
        %1924 = vmatprep.subr.mxu0 0.0
        %1925 = vmatpush1.msra.mxu0 %v1834
        %1926 = vmatprep.subr.mxu0 0.0
        %1927 = vmatpush1.msra.mxu0 %v1835
        %1928 = vmatprep.subr.mxu0 0.0
        %1929 = vmatpush1.msra.mxu0 0.0
        %1930 = vmatprep.subr.mxu0 0.0
        %1931 = vmatpush1.msra.mxu0 0.0
        %1932 = vmatprep.subr.mxu0 0.0
        %1933 = vmatpush1.msra.mxu0 0.0
        %1934 = vmatprep.subr.mxu0 0.0
        %1935 = vmatpush1.msra.mxu0 0.0
        %1936 = vmatprep.subr.mxu0 0.0
        %1937 = vmatpush1.msra.mxu0 0.0
        %1938 = vmatprep.subr.mxu0 0.0
        %1939 = vmatpush1.msra.mxu0 0.0
        %1940 = vmatprep.subr.mxu0 0.0
        %1941 = vmatpush1.msra.mxu0 0.0
        %1942 = vmatprep.subr.mxu0 0.0
        %1943 = vmatpush1.msra.mxu0 0.0
        %1944 = vmatprep.subr.mxu0 0.0
        %1945 = vmatpush1.msra.mxu0 0.0
        %1946 = vmatprep.subr.mxu0 0.0
        %1947 = vmatpush1.msra.mxu0 0.0
        %1948 = vmatprep.subr.mxu0 0.0
        %1949 = vmatpush1.msra.mxu0 0.0
        %1950 = vmatprep.subr.mxu0 0.0
        %1951 = vmatpush1.msra.mxu0 0.0
        %1952 = vmatprep.subr.mxu0 0.0
        %1953 = vmatpush1.msra.mxu0 0.0
        %1954 = vmatprep.subr.mxu0 0.0
        %1955 = vmatpush1.msra.mxu0 0.0
        %1956 = vmatprep.subr.mxu0 0.0
        %1957 = vmatpush1.msra.mxu0 0.0
        %1958 = vmatprep.subr.mxu0 0.0
        %1959 = vmatpush1.msra.mxu0 0.0
        %1960 = vmatprep.subr.mxu0 0.0
        %1961 = vmatpush1.msra.mxu0 0.0
        %1962 = vmatprep.subr.mxu0 0.0
        %1963 = vmatpush1.msra.mxu0 0.0
        %1964 = vmatprep.subr.mxu0 0.0
        %1965 = vmatpush1.msra.mxu0 0.0
        %1966 = vmatprep.subr.mxu0 0.0
        %1967 = vmatpush1.msra.mxu0 0.0
        %1968 = vmatprep.subr.mxu0 0.0
        %1969 = vmatpush1.msra.mxu0 0.0
        %1970 = vmatprep.subr.mxu0 0.0
        %1971 = vmatpush1.msra.mxu0 0.0
        %1972 = vmatprep.subr.mxu0 0.0
        %1973 = vmatpush1.msra.mxu0 0.0
        %1974 = vmatprep.subr.mxu0 0.0
        %1975 = vmatpush1.msra.mxu0 0.0
        %1976 = vmatprep.subr.mxu0 0.0
        %1977 = vmatpush1.msra.mxu0 0.0
        %1978 = vmatprep.subr.mxu0 0.0
        %1979 = vmatpush1.msra.mxu0 0.0
        %1980 = vmatprep.subr.mxu0 0.0
        %1981 = vmatpush1.msra.mxu0 0.0
        %1982 = vmatprep.subr.mxu0 0.0
        %1983 = vmatpush1.msra.mxu0 0.0
        %1984 = vmatprep.subr.mxu0 0.0
        %1985 = vmatpush1.msra.mxu0 0.0
        %1986 = vmatprep.subr.mxu0 0.0
        %1987 = vmatpush1.msra.mxu0 0.0
        %1988 = vmatprep.mubr.f32.mxu0 0.0
        %1989 = vmatmul.mubr.f32.gmra.mrb[0].mxu0 %v1922
        %v1990 = vpop.f32.mrb[0].mxu0
        %v1991 = vadd.f32 0.0, %v1990
        %v1992 = vpop.f32.mrb[0].mxu0
        %1993 = vdwg.mxu0
        %v1995 = vsel %vm1063, %v1001, 0
        %1997 = vmatprep.subr.mxu0 0.0
        %1998 = vmatpush1.msra.mxu0 %v1836
        %1999 = vmatprep.subr.mxu0 0.0
        %2000 = vmatpush1.msra.mxu0 %v1837
        %2001 = vmatprep.subr.mxu0 0.0
        %2002 = vmatpush1.msra.mxu0 0.0
        %2003 = vmatprep.subr.mxu0 0.0
        %2004 = vmatpush1.msra.mxu0 0.0
        %2005 = vmatprep.subr.mxu0 0.0
        %2006 = vmatpush1.msra.mxu0 0.0
        %2007 = vmatprep.subr.mxu0 0.0
        %2008 = vmatpush1.msra.mxu0 0.0
        %2009 = vmatprep.subr.mxu0 0.0
        %2010 = vmatpush1.msra.mxu0 0.0
        %2011 = vmatprep.subr.mxu0 0.0
        %2012 = vmatpush1.msra.mxu0 0.0
        %2013 = vmatprep.subr.mxu0 0.0
        %2014 = vmatpush1.msra.mxu0 0.0
        %2015 = vmatprep.subr.mxu0 0.0
        %2016 = vmatpush1.msra.mxu0 0.0
        %2017 = vmatprep.subr.mxu0 0.0
        %2018 = vmatpush1.msra.mxu0 0.0
        %2019 = vmatprep.subr.mxu0 0.0
        %2020 = vmatpush1.msra.mxu0 0.0
        %2021 = vmatprep.subr.mxu0 0.0
        %2022 = vmatpush1.msra.mxu0 0.0
        %2023 = vmatprep.subr.mxu0 0.0
        %2024 = vmatpush1.msra.mxu0 0.0
        %2025 = vmatprep.subr.mxu0 0.0
        %2026 = vmatpush1.msra.mxu0 0.0
        %2027 = vmatprep.subr.mxu0 0.0
        %2028 = vmatpush1.msra.mxu0 0.0
        %2029 = vmatprep.subr.mxu0 0.0
        %2030 = vmatpush1.msra.mxu0 0.0
        %2031 = vmatprep.subr.mxu0 0.0
        %2032 = vmatpush1.msra.mxu0 0.0
        %2033 = vmatprep.subr.mxu0 0.0
        %2034 = vmatpush1.msra.mxu0 0.0
        %2035 = vmatprep.subr.mxu0 0.0
        %2036 = vmatpush1.msra.mxu0 0.0
        %2037 = vmatprep.subr.mxu0 0.0
        %2038 = vmatpush1.msra.mxu0 0.0
        %2039 = vmatprep.subr.mxu0 0.0
        %2040 = vmatpush1.msra.mxu0 0.0
        %2041 = vmatprep.subr.mxu0 0.0
        %2042 = vmatpush1.msra.mxu0 0.0
        %2043 = vmatprep.subr.mxu0 0.0
        %2044 = vmatpush1.msra.mxu0 0.0
        %2045 = vmatprep.subr.mxu0 0.0
        %2046 = vmatpush1.msra.mxu0 0.0
        %2047 = vmatprep.subr.mxu0 0.0
        %2048 = vmatpush1.msra.mxu0 0.0
        %2049 = vmatprep.subr.mxu0 0.0
        %2050 = vmatpush1.msra.mxu0 0.0
        %2051 = vmatprep.subr.mxu0 0.0
        %2052 = vmatpush1.msra.mxu0 0.0
        %2053 = vmatprep.subr.mxu0 0.0
        %2054 = vmatpush1.msra.mxu0 0.0
        %2055 = vmatprep.subr.mxu0 0.0
        %2056 = vmatpush1.msra.mxu0 0.0
        %2057 = vmatprep.subr.mxu0 0.0
        %2058 = vmatpush1.msra.mxu0 0.0
        %2059 = vmatprep.subr.mxu0 0.0
        %2060 = vmatpush1.msra.mxu0 0.0
        %2061 = vmatprep.mubr.f32.mxu0 0.0
        %2062 = vmatmul.mubr.f32.gmra.mrb[0].mxu0 %v1995
        %v2063 = vpop.f32.mrb[0].mxu0
        %v2064 = vadd.f32 0.0, %v2063
        %v2065 = vpop.f32.mrb[0].mxu0
        %2066 = vdwg.mxu0
        %v2068 = vsel %vm1063, %v1002, 0
        %2070 = vmatprep.subr.mxu0 0.0
        %2071 = vmatpush1.msra.mxu0 %v1838
        %2072 = vmatprep.subr.mxu0 0.0
        %2073 = vmatpush1.msra.mxu0 %v1839
        %2074 = vmatprep.subr.mxu0 0.0
        %2075 = vmatpush1.msra.mxu0 0.0
        %2076 = vmatprep.subr.mxu0 0.0
        %2077 = vmatpush1.msra.mxu0 0.0
        %2078 = vmatprep.subr.mxu0 0.0
        %2079 = vmatpush1.msra.mxu0 0.0
        %2080 = vmatprep.subr.mxu0 0.0
        %2081 = vmatpush1.msra.mxu0 0.0
        %2082 = vmatprep.subr.mxu0 0.0
        %2083 = vmatpush1.msra.mxu0 0.0
        %2084 = vmatprep.subr.mxu0 0.0
        %2085 = vmatpush1.msra.mxu0 0.0
        %2086 = vmatprep.subr.mxu0 0.0
        %2087 = vmatpush1.msra.mxu0 0.0
        %2088 = vmatprep.subr.mxu0 0.0
        %2089 = vmatpush1.msra.mxu0 0.0
        %2090 = vmatprep.subr.mxu0 0.0
        %2091 = vmatpush1.msra.mxu0 0.0
        %2092 = vmatprep.subr.mxu0 0.0
        %2093 = vmatpush1.msra.mxu0 0.0
        %2094 = vmatprep.subr.mxu0 0.0
        %2095 = vmatpush1.msra.mxu0 0.0
        %2096 = vmatprep.subr.mxu0 0.0
        %2097 = vmatpush1.msra.mxu0 0.0
        %2098 = vmatprep.subr.mxu0 0.0
        %2099 = vmatpush1.msra.mxu0 0.0
        %2100 = vmatprep.subr.mxu0 0.0
        %2101 = vmatpush1.msra.mxu0 0.0
        %2102 = vmatprep.subr.mxu0 0.0
        %2103 = vmatpush1.msra.mxu0 0.0
        %2104 = vmatprep.subr.mxu0 0.0
        %2105 = vmatpush1.msra.mxu0 0.0
        %2106 = vmatprep.subr.mxu0 0.0
        %2107 = vmatpush1.msra.mxu0 0.0
        %2108 = vmatprep.subr.mxu0 0.0
        %2109 = vmatpush1.msra.mxu0 0.0
        %2110 = vmatprep.subr.mxu0 0.0
        %2111 = vmatpush1.msra.mxu0 0.0
        %2112 = vmatprep.subr.mxu0 0.0
        %2113 = vmatpush1.msra.mxu0 0.0
        %2114 = vmatprep.subr.mxu0 0.0
        %2115 = vmatpush1.msra.mxu0 0.0
        %2116 = vmatprep.subr.mxu0 0.0
        %2117 = vmatpush1.msra.mxu0 0.0
        %2118 = vmatprep.subr.mxu0 0.0
        %2119 = vmatpush1.msra.mxu0 0.0
        %2120 = vmatprep.subr.mxu0 0.0
        %2121 = vmatpush1.msra.mxu0 0.0
        %2122 = vmatprep.subr.mxu0 0.0
        %2123 = vmatpush1.msra.mxu0 0.0
        %2124 = vmatprep.subr.mxu0 0.0
        %2125 = vmatpush1.msra.mxu0 0.0
        %2126 = vmatprep.subr.mxu0 0.0
        %2127 = vmatpush1.msra.mxu0 0.0
        %2128 = vmatprep.subr.mxu0 0.0
        %2129 = vmatpush1.msra.mxu0 0.0
        %2130 = vmatprep.subr.mxu0 0.0
        %2131 = vmatpush1.msra.mxu0 0.0
        %2132 = vmatprep.subr.mxu0 0.0
        %2133 = vmatpush1.msra.mxu0 0.0
        %2134 = vmatprep.mubr.f32.mxu0 0.0
        %2135 = vmatmul.mubr.f32.gmra.mrb[0].mxu0 %v2068
        %v2136 = vpop.f32.mrb[0].mxu0
        %v2137 = vadd.f32 0.0, %v2136
        %v2138 = vpop.f32.mrb[0].mxu0
        %2139 = vdwg.mxu0
        %v2141 = vsel %vm1063, %v1003, 0
        %2143 = vmatprep.subr.mxu0 0.0
        %2144 = vmatpush1.msra.mxu0 %v1840
        %2145 = vmatprep.subr.mxu0 0.0
        %2146 = vmatpush1.msra.mxu0 %v1841
        %2147 = vmatprep.subr.mxu0 0.0
        %2148 = vmatpush1.msra.mxu0 0.0
        %2149 = vmatprep.subr.mxu0 0.0
        %2150 = vmatpush1.msra.mxu0 0.0
        %2151 = vmatprep.subr.mxu0 0.0
        %2152 = vmatpush1.msra.mxu0 0.0
        %2153 = vmatprep.subr.mxu0 0.0
        %2154 = vmatpush1.msra.mxu0 0.0
        %2155 = vmatprep.subr.mxu0 0.0
        %2156 = vmatpush1.msra.mxu0 0.0
        %2157 = vmatprep.subr.mxu0 0.0
        %2158 = vmatpush1.msra.mxu0 0.0
        %2159 = vmatprep.subr.mxu0 0.0
        %2160 = vmatpush1.msra.mxu0 0.0
        %2161 = vmatprep.subr.mxu0 0.0
        %2162 = vmatpush1.msra.mxu0 0.0
        %2163 = vmatprep.subr.mxu0 0.0
        %2164 = vmatpush1.msra.mxu0 0.0
        %2165 = vmatprep.subr.mxu0 0.0
        %2166 = vmatpush1.msra.mxu0 0.0
        %2167 = vmatprep.subr.mxu0 0.0
        %2168 = vmatpush1.msra.mxu0 0.0
        %2169 = vmatprep.subr.mxu0 0.0
        %2170 = vmatpush1.msra.mxu0 0.0
        %2171 = vmatprep.subr.mxu0 0.0
        %2172 = vmatpush1.msra.mxu0 0.0
        %2173 = vmatprep.subr.mxu0 0.0
        %2174 = vmatpush1.msra.mxu0 0.0
        %2175 = vmatprep.subr.mxu0 0.0
        %2176 = vmatpush1.msra.mxu0 0.0
        %2177 = vmatprep.subr.mxu0 0.0
        %2178 = vmatpush1.msra.mxu0 0.0
        %2179 = vmatprep.subr.mxu0 0.0
        %2180 = vmatpush1.msra.mxu0 0.0
        %2181 = vmatprep.subr.mxu0 0.0
        %2182 = vmatpush1.msra.mxu0 0.0
        %2183 = vmatprep.subr.mxu0 0.0
        %2184 = vmatpush1.msra.mxu0 0.0
        %2185 = vmatprep.subr.mxu0 0.0
        %2186 = vmatpush1.msra.mxu0 0.0
        %2187 = vmatprep.subr.mxu0 0.0
        %2188 = vmatpush1.msra.mxu0 0.0
        %2189 = vmatprep.subr.mxu0 0.0
        %2190 = vmatpush1.msra.mxu0 0.0
        %2191 = vmatprep.subr.mxu0 0.0
        %2192 = vmatpush1.msra.mxu0 0.0
        %2193 = vmatprep.subr.mxu0 0.0
        %2194 = vmatpush1.msra.mxu0 0.0
        %2195 = vmatprep.subr.mxu0 0.0
        %2196 = vmatpush1.msra.mxu0 0.0
        %2197 = vmatprep.subr.mxu0 0.0
        %2198 = vmatpush1.msra.mxu0 0.0
        %2199 = vmatprep.subr.mxu0 0.0
        %2200 = vmatpush1.msra.mxu0 0.0
        %2201 = vmatprep.subr.mxu0 0.0
        %2202 = vmatpush1.msra.mxu0 0.0
        %2203 = vmatprep.subr.mxu0 0.0
        %2204 = vmatpush1.msra.mxu0 0.0
        %2205 = vmatprep.subr.mxu0 0.0
        %2206 = vmatpush1.msra.mxu0 0.0
        %2207 = vmatprep.mubr.f32.mxu0 0.0
        %2208 = vmatmul.mubr.f32.gmra.mrb[0].mxu0 %v2141
        %v2209 = vpop.f32.mrb[0].mxu0
        %v2210 = vadd.f32 0.0, %v2209
        %v2211 = vpop.f32.mrb[0].mxu0
        %2212 = vdwg.mxu0
        %v2214 = vsel %vm1063, %v1004, 0
        %2216 = vmatprep.subr.mxu0 0.0
        %2217 = vmatpush1.msra.mxu0 %v1842
        %2218 = vmatprep.subr.mxu0 0.0
        %2219 = vmatpush1.msra.mxu0 %v1843
        %2220 = vmatprep.subr.mxu0 0.0
        %2221 = vmatpush1.msra.mxu0 0.0
        %2222 = vmatprep.subr.mxu0 0.0
        %2223 = vmatpush1.msra.mxu0 0.0
        %2224 = vmatprep.subr.mxu0 0.0
        %2225 = vmatpush1.msra.mxu0 0.0
        %2226 = vmatprep.subr.mxu0 0.0
        %2227 = vmatpush1.msra.mxu0 0.0
        %2228 = vmatprep.subr.mxu0 0.0
        %2229 = vmatpush1.msra.mxu0 0.0
        %2230 = vmatprep.subr.mxu0 0.0
        %2231 = vmatpush1.msra.mxu0 0.0
        %2232 = vmatprep.subr.mxu0 0.0
        %2233 = vmatpush1.msra.mxu0 0.0
        %2234 = vmatprep.subr.mxu0 0.0
        %2235 = vmatpush1.msra.mxu0 0.0
        %2236 = vmatprep.subr.mxu0 0.0
        %2237 = vmatpush1.msra.mxu0 0.0
        %2238 = vmatprep.subr.mxu0 0.0
        %2239 = vmatpush1.msra.mxu0 0.0
        %2240 = vmatprep.subr.mxu0 0.0
        %2241 = vmatpush1.msra.mxu0 0.0
        %2242 = vmatprep.subr.mxu0 0.0
        %2243 = vmatpush1.msra.mxu0 0.0
        %2244 = vmatprep.subr.mxu0 0.0
        %2245 = vmatpush1.msra.mxu0 0.0
        %2246 = vmatprep.subr.mxu0 0.0
        %2247 = vmatpush1.msra.mxu0 0.0
        %2248 = vmatprep.subr.mxu0 0.0
        %2249 = vmatpush1.msra.mxu0 0.0
        %2250 = vmatprep.subr.mxu0 0.0
        %2251 = vmatpush1.msra.mxu0 0.0
        %2252 = vmatprep.subr.mxu0 0.0
        %2253 = vmatpush1.msra.mxu0 0.0
        %2254 = vmatprep.subr.mxu0 0.0
        %2255 = vmatpush1.msra.mxu0 0.0
        %2256 = vmatprep.subr.mxu0 0.0
        %2257 = vmatpush1.msra.mxu0 0.0
        %2258 = vmatprep.subr.mxu0 0.0
        %2259 = vmatpush1.msra.mxu0 0.0
        %2260 = vmatprep.subr.mxu0 0.0
        %2261 = vmatpush1.msra.mxu0 0.0
        %2262 = vmatprep.subr.mxu0 0.0
        %2263 = vmatpush1.msra.mxu0 0.0
        %2264 = vmatprep.subr.mxu0 0.0
        %2265 = vmatpush1.msra.mxu0 0.0
        %2266 = vmatprep.subr.mxu0 0.0
        %2267 = vmatpush1.msra.mxu0 0.0
        %2268 = vmatprep.subr.mxu0 0.0
        %2269 = vmatpush1.msra.mxu0 0.0
        %2270 = vmatprep.subr.mxu0 0.0
        %2271 = vmatpush1.msra.mxu0 0.0
        %2272 = vmatprep.subr.mxu0 0.0
        %2273 = vmatpush1.msra.mxu0 0.0
        %2274 = vmatprep.subr.mxu0 0.0
        %2275 = vmatpush1.msra.mxu0 0.0
        %2276 = vmatprep.subr.mxu0 0.0
        %2277 = vmatpush1.msra.mxu0 0.0
        %2278 = vmatprep.subr.mxu0 0.0
        %2279 = vmatpush1.msra.mxu0 0.0
        %2280 = vmatprep.mubr.f32.mxu0 0.0
        %2281 = vmatmul.mubr.f32.gmra.mrb[0].mxu0 %v2214
        %v2282 = vpop.f32.mrb[0].mxu0
        %v2283 = vadd.f32 0.0, %v2282
        %v2284 = vpop.f32.mrb[0].mxu0
        %2285 = vdwg.mxu0
        %v2287 = vsel %vm1063, %v1005, 0
        %2289 = vmatprep.subr.mxu0 0.0
        %2290 = vmatpush1.msra.mxu0 %v1844
        %2291 = vmatprep.subr.mxu0 0.0
        %2292 = vmatpush1.msra.mxu0 %v1845
        %2293 = vmatprep.subr.mxu0 0.0
        %2294 = vmatpush1.msra.mxu0 0.0
        %2295 = vmatprep.subr.mxu0 0.0
        %2296 = vmatpush1.msra.mxu0 0.0
        %2297 = vmatprep.subr.mxu0 0.0
        %2298 = vmatpush1.msra.mxu0 0.0
        %2299 = vmatprep.subr.mxu0 0.0
        %2300 = vmatpush1.msra.mxu0 0.0
        %2301 = vmatprep.subr.mxu0 0.0
        %2302 = vmatpush1.msra.mxu0 0.0
        %2303 = vmatprep.subr.mxu0 0.0
        %2304 = vmatpush1.msra.mxu0 0.0
        %2305 = vmatprep.subr.mxu0 0.0
        %2306 = vmatpush1.msra.mxu0 0.0
        %2307 = vmatprep.subr.mxu0 0.0
        %2308 = vmatpush1.msra.mxu0 0.0
        %2309 = vmatprep.subr.mxu0 0.0
        %2310 = vmatpush1.msra.mxu0 0.0
        %2311 = vmatprep.subr.mxu0 0.0
        %2312 = vmatpush1.msra.mxu0 0.0
        %2313 = vmatprep.subr.mxu0 0.0
        %2314 = vmatpush1.msra.mxu0 0.0
        %2315 = vmatprep.subr.mxu0 0.0
        %2316 = vmatpush1.msra.mxu0 0.0
        %2317 = vmatprep.subr.mxu0 0.0
        %2318 = vmatpush1.msra.mxu0 0.0
        %2319 = vmatprep.subr.mxu0 0.0
        %2320 = vmatpush1.msra.mxu0 0.0
        %2321 = vmatprep.subr.mxu0 0.0
        %2322 = vmatpush1.msra.mxu0 0.0
        %2323 = vmatprep.subr.mxu0 0.0
        %2324 = vmatpush1.msra.mxu0 0.0
        %2325 = vmatprep.subr.mxu0 0.0
        %2326 = vmatpush1.msra.mxu0 0.0
        %2327 = vmatprep.subr.mxu0 0.0
        %2328 = vmatpush1.msra.mxu0 0.0
        %2329 = vmatprep.subr.mxu0 0.0
        %2330 = vmatpush1.msra.mxu0 0.0
        %2331 = vmatprep.subr.mxu0 0.0
        %2332 = vmatpush1.msra.mxu0 0.0
        %2333 = vmatprep.subr.mxu0 0.0
        %2334 = vmatpush1.msra.mxu0 0.0
        %2335 = vmatprep.subr.mxu0 0.0
        %2336 = vmatpush1.msra.mxu0 0.0
        %2337 = vmatprep.subr.mxu0 0.0
        %2338 = vmatpush1.msra.mxu0 0.0
        %2339 = vmatprep.subr.mxu0 0.0
        %2340 = vmatpush1.msra.mxu0 0.0
        %2341 = vmatprep.subr.mxu0 0.0
        %2342 = vmatpush1.msra.mxu0 0.0
        %2343 = vmatprep.subr.mxu0 0.0
        %2344 = vmatpush1.msra.mxu0 0.0
        %2345 = vmatprep.subr.mxu0 0.0
        %2346 = vmatpush1.msra.mxu0 0.0
        %2347 = vmatprep.subr.mxu0 0.0
        %2348 = vmatpush1.msra.mxu0 0.0
        %2349 = vmatprep.subr.mxu0 0.0
        %2350 = vmatpush1.msra.mxu0 0.0
        %2351 = vmatprep.subr.mxu0 0.0
        %2352 = vmatpush1.msra.mxu0 0.0
        %2353 = vmatprep.mubr.f32.mxu0 0.0
        %2354 = vmatmul.mubr.f32.gmra.mrb[0].mxu0 %v2287
        %v2355 = vpop.f32.mrb[0].mxu0
        %v2356 = vadd.f32 0.0, %v2355
        %v2357 = vpop.f32.mrb[0].mxu0
        %2358 = vdwg.mxu0
        %v2360 = vsel %vm1063, %v1006, 0
        %2362 = vmatprep.subr.mxu0 0.0
        %2363 = vmatpush1.msra.mxu0 %v1846
        %2364 = vmatprep.subr.mxu0 0.0
        %2365 = vmatpush1.msra.mxu0 %v1847
        %2366 = vmatprep.subr.mxu0 0.0
        %2367 = vmatpush1.msra.mxu0 0.0
        %2368 = vmatprep.subr.mxu0 0.0
        %2369 = vmatpush1.msra.mxu0 0.0
        %2370 = vmatprep.subr.mxu0 0.0
        %2371 = vmatpush1.msra.mxu0 0.0
        %2372 = vmatprep.subr.mxu0 0.0
        %2373 = vmatpush1.msra.mxu0 0.0
        %2374 = vmatprep.subr.mxu0 0.0
        %2375 = vmatpush1.msra.mxu0 0.0
        %2376 = vmatprep.subr.mxu0 0.0
        %2377 = vmatpush1.msra.mxu0 0.0
        %2378 = vmatprep.subr.mxu0 0.0
        %2379 = vmatpush1.msra.mxu0 0.0
        %2380 = vmatprep.subr.mxu0 0.0
        %2381 = vmatpush1.msra.mxu0 0.0
        %2382 = vmatprep.subr.mxu0 0.0
        %2383 = vmatpush1.msra.mxu0 0.0
        %2384 = vmatprep.subr.mxu0 0.0
        %2385 = vmatpush1.msra.mxu0 0.0
        %2386 = vmatprep.subr.mxu0 0.0
        %2387 = vmatpush1.msra.mxu0 0.0
        %2388 = vmatprep.subr.mxu0 0.0
        %2389 = vmatpush1.msra.mxu0 0.0
        %2390 = vmatprep.subr.mxu0 0.0
        %2391 = vmatpush1.msra.mxu0 0.0
        %2392 = vmatprep.subr.mxu0 0.0
        %2393 = vmatpush1.msra.mxu0 0.0
        %2394 = vmatprep.subr.mxu0 0.0
        %2395 = vmatpush1.msra.mxu0 0.0
        %2396 = vmatprep.subr.mxu0 0.0
        %2397 = vmatpush1.msra.mxu0 0.0
        %2398 = vmatprep.subr.mxu0 0.0
        %2399 = vmatpush1.msra.mxu0 0.0
        %2400 = vmatprep.subr.mxu0 0.0
        %2401 = vmatpush1.msra.mxu0 0.0
        %2402 = vmatprep.subr.mxu0 0.0
        %2403 = vmatpush1.msra.mxu0 0.0
        %2404 = vmatprep.subr.mxu0 0.0
        %2405 = vmatpush1.msra.mxu0 0.0
        %2406 = vmatprep.subr.mxu0 0.0
        %2407 = vmatpush1.msra.mxu0 0.0
        %2408 = vmatprep.subr.mxu0 0.0
        %2409 = vmatpush1.msra.mxu0 0.0
        %2410 = vmatprep.subr.mxu0 0.0
        %2411 = vmatpush1.msra.mxu0 0.0
        %2412 = vmatprep.subr.mxu0 0.0
        %2413 = vmatpush1.msra.mxu0 0.0
        %2414 = vmatprep.subr.mxu0 0.0
        %2415 = vmatpush1.msra.mxu0 0.0
        %2416 = vmatprep.subr.mxu0 0.0
        %2417 = vmatpush1.msra.mxu0 0.0
        %2418 = vmatprep.subr.mxu0 0.0
        %2419 = vmatpush1.msra.mxu0 0.0
        %2420 = vmatprep.subr.mxu0 0.0
        %2421 = vmatpush1.msra.mxu0 0.0
        %2422 = vmatprep.subr.mxu0 0.0
        %2423 = vmatpush1.msra.mxu0 0.0
        %2424 = vmatprep.subr.mxu0 0.0
        %2425 = vmatpush1.msra.mxu0 0.0
        %2426 = vmatprep.mubr.f32.mxu0 0.0
        %2427 = vmatmul.mubr.f32.gmra.mrb[0].mxu0 %v2360
        %v2428 = vpop.f32.mrb[0].mxu0
        %v2429 = vadd.f32 0.0, %v2428
        %v2430 = vpop.f32.mrb[0].mxu0
        %2431 = vdwg.mxu0
        %v2432 = vld [vmem:[%s20] sm:$0x1]
        %v2434 = vlaneseq
        %v2435 = vshrl.u32 %v2434, 7
        %v2436 = vsub.s32 0, %v2435
        %v2437 = vrot.slane %v2432, %v2436
        %v2439 = vmin.f32 %v1918, %v2437
        %v2440 = vmin.f32 %v1991, %v2437
        %v2441 = vmin.f32 %v2064, %v2437
        %v2442 = vmin.f32 %v2137, %v2437
        %v2443 = vmin.f32 %v2210, %v2437
        %v2444 = vmin.f32 %v2283, %v2437
        %v2445 = vmin.f32 %v2356, %v2437
        %v2446 = vmin.f32 %v2429, %v2437
        %v2447 = vld [vmem:[%s19] sm:$0x1]
        %v2449 = vlaneseq
        %v2450 = vshrl.u32 %v2449, 7
        %v2451 = vsub.s32 0, %v2450
        %v2452 = vrot.slane %v2447, %v2451
        %vm2454 = vcmp.ge.f32.partialorder %v2452, %v2439
        %vm2455 = vcmp.ge.f32.partialorder %v2452, %v2440
        %vm2456 = vcmp.ge.f32.partialorder %v2452, %v2441
        %vm2457 = vcmp.ge.f32.partialorder %v2452, %v2442
        %vm2458 = vcmp.ge.f32.partialorder %v2452, %v2443
        %vm2459 = vcmp.ge.f32.partialorder %v2452, %v2444
        %vm2460 = vcmp.ge.f32.partialorder %v2452, %v2445
        %vm2461 = vcmp.ge.f32.partialorder %v2452, %v2446
        %v2462 = vsel %vm2454, 1, 0
        %v2463 = vsel %vm2455, 1, 0
        %v2464 = vsel %vm2456, 1, 0
        %v2465 = vsel %vm2457, 1, 0
        %v2466 = vsel %vm2458, 1, 0
        %v2467 = vsel %vm2459, 1, 0
        %v2468 = vsel %vm2460, 1, 0
        %v2469 = vsel %vm2461, 1, 0
        %v2470 = vcvt.s32.f32 %v2462
        %v2471 = vcvt.s32.f32 %v2463
        %v2472 = vcvt.s32.f32 %v2464
        %v2473 = vcvt.s32.f32 %v2465
        %v2474 = vcvt.s32.f32 %v2466
        %v2475 = vcvt.s32.f32 %v2467
        %v2476 = vcvt.s32.f32 %v2468
        %v2477 = vcvt.s32.f32 %v2469
        %v2478 = vpack.c.bf16 %v1825, %v1824
        %v2479 = vpack.c.bf16 %v1827, %v1826
        %v2480 = vpack.c.bf16 %v1829, %v1828
        %v2481 = vpack.c.bf16 %v1831, %v1830
        %v2482 = vld [vmem:[#allocation9] sm:$0xf]
        %v2483 = vld [vmem:[#allocation9 + $0x4] sm:$0xf]
        %v2484 = vld [vmem:[#allocation9 + $0x8] sm:$0xf]
        %v2485 = vld [vmem:[#allocation9 + $0xc] sm:$0xf]
        %v2486 = vpack.c.bf16 %v2471, %v2470
        %v2487 = vpack.c.bf16 %v2473, %v2472
        %v2488 = vpack.c.bf16 %v2475, %v2474
        %v2489 = vpack.c.bf16 %v2477, %v2476
        %v2490 = vld [vmem:[#allocation11] sm:$0xf]
        %v2491 = vld [vmem:[#allocation11 + $0x4] sm:$0xf]
        %v2492 = vld [vmem:[#allocation11 + $0x8] sm:$0xf]
        %v2493 = vld [vmem:[#allocation11 + $0xc] sm:$0xf]
        %v2494 = vld [vmem:[#allocation11 + $0x10] sm:$0xf]
        %v2495 = vld [vmem:[#allocation11 + $0x14] sm:$0xf]
        %v2496 = vld [vmem:[#allocation11 + $0x18] sm:$0xf]
        %v2497 = vld [vmem:[#allocation11 + $0x1c] sm:$0xf]
        %v2498 = vld [vmem:[#allocation11 + $0x20] sm:$0xf]
        %v2499 = vld [vmem:[#allocation11 + $0x24] sm:$0xf]
        %v2500 = vld [vmem:[#allocation11 + $0x28] sm:$0xf]
        %v2501 = vld [vmem:[#allocation11 + $0x2c] sm:$0xf]
        %v2502 = vld [vmem:[#allocation11 + $0x30] sm:$0x3]
        %v2516 = vunpack.c.l.b16 %v2490
        %v2517 = vunpack.c.l.b16 %v2491
        %v2518 = vunpack.c.l.b16 %v2492
        %v2519 = vunpack.c.l.b16 %v2493
        %v2520 = vunpack.c.l.b16 %v2494
        %v2521 = vunpack.c.l.b16 %v2495
        %v2522 = vunpack.c.l.b16 %v2496
        %v2523 = vunpack.c.l.b16 %v2497
        %v2524 = vunpack.c.l.b16 %v2498
        %v2525 = vunpack.c.l.b16 %v2499
        %v2526 = vunpack.c.l.b16 %v2500
        %v2527 = vunpack.c.l.b16 %v2501
        %v2528 = vunpack.c.l.b16 %v2502
        %v2529 = vpack.c.b16 %v2517, %v2516
        %v2530 = vpack.c.b16 %v2519, %v2518
        %v2531 = vpack.c.b16 %v2521, %v2520
        %v2532 = vpack.c.b16 %v2523, %v2522
        %v2533 = vpack.c.b16 %v2525, %v2524
        %v2534 = vpack.c.b16 %v2527, %v2526
        %v2535 = vpack.c.b16 %v2528, %v2528
        %vm2542 = vcmask 818176
        %v2544 = vsel %vm2542, %v2486, 0
        %v2547 = vsel %vm2542, %v2487, 0
        %v2550 = vsel %vm2542, %v2488, 0
        %v2553 = vsel %vm2542, %v2489, 0
        %vm2555 = vcmask 1041408
        %v2557 = vsel %vm2555, %v2535, 0
        %2559 = vmatprep.subr.bf16.mxu0 0
        %2560 = vmatpush1.bf16.msra.mxu0 %v2529
        %2561 = vmatprep.subr.bf16.mxu0 0
        %2562 = vmatpush1.bf16.msra.mxu0 %v2530
        %2563 = vmatprep.subr.bf16.mxu0 0
        %2564 = vmatpush1.bf16.msra.mxu0 %v2531
        %2565 = vmatprep.subr.bf16.mxu0 0
        %2566 = vmatpush1.bf16.msra.mxu0 %v2532
        %2567 = vmatprep.subr.bf16.mxu0 0
        %2568 = vmatpush1.bf16.msra.mxu0 %v2533
        %2569 = vmatprep.subr.bf16.mxu0 0
        %2570 = vmatpush1.bf16.msra.mxu0 %v2534
        %2571 = vmatprep.subr.bf16.mxu0 0
        %2572 = vmatpush1.bf16.msra.mxu0 %v2557
        %2573 = vmatprep.subr.bf16.mxu0 0
        %2574 = vmatpush1.bf16.msra.mxu0 0
        %2575 = vmatprep.subr.bf16.mxu0 0
        %2576 = vmatpush1.bf16.msra.mxu0 0
        %2577 = vmatprep.subr.bf16.mxu0 0
        %2578 = vmatpush1.bf16.msra.mxu0 0
        %2579 = vmatprep.subr.bf16.mxu0 0
        %2580 = vmatpush1.bf16.msra.mxu0 0
        %2581 = vmatprep.subr.bf16.mxu0 0
        %2582 = vmatpush1.bf16.msra.mxu0 0
        %2583 = vmatprep.subr.bf16.mxu0 0
        %2584 = vmatpush1.bf16.msra.mxu0 0
        %2585 = vmatprep.subr.bf16.mxu0 0
        %2586 = vmatpush1.bf16.msra.mxu0 0
        %2587 = vmatprep.subr.bf16.mxu0 0
        %2588 = vmatpush1.bf16.msra.mxu0 0
        %2589 = vmatprep.subr.bf16.mxu0 0
        %2590 = vmatpush1.bf16.msra.mxu0 0
        %2591 = vmatprep.mubr.bf16.mxu0 0
        %2592 = vmatmul.mubr.bf16.gmra.mrb[0].mxu0 %v2544
        %v2593 = vpop.f32.mrb[0].mxu0
        %v2594 = vadd.f32 0.0, %v2593
        %v2595 = vpop.f32.mrb[0].mxu0
        %v2596 = vpop.f32.mrb[0].mxu0
        %v2597 = vadd.f32 0.0, %v2596
        %v2598 = vpop.f32.mrb[0].mxu0
        %2599 = vmatprep.mubr.bf16.mxu0 0
        %2600 = vmatmul.mubr.bf16.gmra.mrb[0].mxu0 %v2547
        %v2601 = vpop.f32.mrb[0].mxu0
        %v2602 = vadd.f32 0.0, %v2601
        %v2603 = vpop.f32.mrb[0].mxu0
        %v2604 = vpop.f32.mrb[0].mxu0
        %v2605 = vadd.f32 0.0, %v2604
        %v2606 = vpop.f32.mrb[0].mxu0
        %2607 = vmatprep.mubr.bf16.mxu0 0
        %2608 = vmatmul.mubr.bf16.gmra.mrb[0].mxu0 %v2550
        %v2609 = vpop.f32.mrb[0].mxu0
        %v2610 = vadd.f32 0.0, %v2609
        %v2611 = vpop.f32.mrb[0].mxu0
        %v2612 = vpop.f32.mrb[0].mxu0
        %v2613 = vadd.f32 0.0, %v2612
        %v2614 = vpop.f32.mrb[0].mxu0
        %2615 = vmatprep.mubr.bf16.mxu0 0
        %2616 = vmatmul.mubr.bf16.gmra.mrb[0].mxu0 %v2553
        %v2617 = vpop.f32.mrb[0].mxu0
        %v2618 = vadd.f32 0.0, %v2617
        %v2619 = vpop.f32.mrb[0].mxu0
        %v2620 = vpop.f32.mrb[0].mxu0
        %v2621 = vadd.f32 0.0, %v2620
        %v2622 = vpop.f32.mrb[0].mxu0
        %2623 = vdwg.mxu0
        %v2628 = vunpack.c.l.b16 %v2482
        %v2629 = vunpack.c.l.b16 %v2483
        %v2630 = vunpack.c.l.b16 %v2484
        %v2631 = vunpack.c.l.b16 %v2485
        %v2632 = vpack.c.b16 %v2629, %v2628
        %v2633 = vpack.c.b16 %v2631, %v2630
        %v2637 = vsel %vm1696, %v2478, 0
        %v2640 = vsel %vm1696, %v2479, 0
        %v2643 = vsel %vm1696, %v2480, 0
        %v2646 = vsel %vm1696, %v2481, 0
        %2648 = vmatprep.subr.bf16.mxu0 0
        %2649 = vmatpush1.bf16.msra.mxu0 %v2632
        %2650 = vmatprep.subr.bf16.mxu0 0
        %2651 = vmatpush1.bf16.msra.mxu0 %v2633
        %2652 = vmatprep.subr.bf16.mxu0 0
        %2653 = vmatpush1.bf16.msra.mxu0 0
        %2654 = vmatprep.subr.bf16.mxu0 0
        %2655 = vmatpush1.bf16.msra.mxu0 0
        %2656 = vmatprep.subr.bf16.mxu0 0
        %2657 = vmatpush1.bf16.msra.mxu0 0
        %2658 = vmatprep.subr.bf16.mxu0 0
        %2659 = vmatpush1.bf16.msra.mxu0 0
        %2660 = vmatprep.subr.bf16.mxu0 0
        %2661 = vmatpush1.bf16.msra.mxu0 0
        %2662 = vmatprep.subr.bf16.mxu0 0
        %2663 = vmatpush1.bf16.msra.mxu0 0
        %2664 = vmatprep.subr.bf16.mxu0 0
        %2665 = vmatpush1.bf16.msra.mxu0 0
        %2666 = vmatprep.subr.bf16.mxu0 0
        %2667 = vmatpush1.bf16.msra.mxu0 0
        %2668 = vmatprep.subr.bf16.mxu0 0
        %2669 = vmatpush1.bf16.msra.mxu0 0
        %2670 = vmatprep.subr.bf16.mxu0 0
        %2671 = vmatpush1.bf16.msra.mxu0 0
        %2672 = vmatprep.subr.bf16.mxu0 0
        %2673 = vmatpush1.bf16.msra.mxu0 0
        %2674 = vmatprep.subr.bf16.mxu0 0
        %2675 = vmatpush1.bf16.msra.mxu0 0
        %2676 = vmatprep.subr.bf16.mxu0 0
        %2677 = vmatpush1.bf16.msra.mxu0 0
        %2678 = vmatprep.subr.bf16.mxu0 0
        %2679 = vmatpush1.bf16.msra.mxu0 0
        %2680 = vmatprep.mubr.bf16.mxu0 0
        %2681 = vmatmul.mubr.bf16.gmra.mrb[0].mxu0 %v2637
        %v2682 = vpop.f32.mrb[0].mxu0
        %v2683 = vadd.f32 %v2594, %v2682
        %v2684 = vpop.f32.mrb[0].mxu0
        %v2685 = vpop.f32.mrb[0].mxu0
        %v2686 = vadd.f32 %v2597, %v2685
        %v2687 = vpop.f32.mrb[0].mxu0
        %2688 = vmatprep.mubr.bf16.mxu0 0
        %2689 = vmatmul.mubr.bf16.gmra.mrb[0].mxu0 %v2640
        %v2690 = vpop.f32.mrb[0].mxu0
        %v2691 = vadd.f32 %v2602, %v2690
        %v2692 = vpop.f32.mrb[0].mxu0
        %v2693 = vpop.f32.mrb[0].mxu0
        %v2694 = vadd.f32 %v2605, %v2693
        %v2695 = vpop.f32.mrb[0].mxu0
        %2696 = vmatprep.mubr.bf16.mxu0 0
        %2697 = vmatmul.mubr.bf16.gmra.mrb[0].mxu0 %v2643
        %v2698 = vpop.f32.mrb[0].mxu0
        %v2699 = vadd.f32 %v2610, %v2698
        %v2700 = vpop.f32.mrb[0].mxu0
        %v2701 = vpop.f32.mrb[0].mxu0
        %v2702 = vadd.f32 %v2613, %v2701
        %v2703 = vpop.f32.mrb[0].mxu0
        %2704 = vmatprep.mubr.bf16.mxu0 0
        %2705 = vmatmul.mubr.bf16.gmra.mrb[0].mxu0 %v2646
        %v2706 = vpop.f32.mrb[0].mxu0
        %v2707 = vadd.f32 %v2618, %v2706
        %v2708 = vpop.f32.mrb[0].mxu0
        %v2709 = vpop.f32.mrb[0].mxu0
        %v2710 = vadd.f32 %v2621, %v2709
        %v2711 = vpop.f32.mrb[0].mxu0
        %2712 = vdwg.mxu0
        %v2713 = vld [vmem:[%s10] sm:$0x1]
        %v2715 = vlaneseq
        %v2716 = vshrl.u32 %v2715, 7
        %v2717 = vsub.s32 0, %v2716
        %v2718 = vrot.slane %v2713, %v2717
        %v2720 = vadd.f32 %v2683, %v2718
        %v2721 = vadd.f32 %v2686, %v2718
        %v2722 = vadd.f32 %v2691, %v2718
        %v2723 = vadd.f32 %v2694, %v2718
        %v2724 = vadd.f32 %v2699, %v2718
        %v2725 = vadd.f32 %v2702, %v2718
        %v2726 = vadd.f32 %v2707, %v2718
        %v2727 = vadd.f32 %v2710, %v2718
        %v2728 = vmax.f32 %v2720, 0.0
        %v2729 = vmax.f32 %v2721, 0.0
        %v2730 = vmax.f32 %v2722, 0.0
        %v2731 = vmax.f32 %v2723, 0.0
        %v2732 = vmax.f32 %v2724, 0.0
        %v2733 = vmax.f32 %v2725, 0.0
        %v2734 = vmax.f32 %v2726, 0.0
        %v2735 = vmax.f32 %v2727, 0.0
        %v2736 = vpack.c.bf16 %v2729, %v2728
        %v2737 = vpack.c.bf16 %v2731, %v2730
        %v2738 = vpack.c.bf16 %v2733, %v2732
        %v2739 = vpack.c.bf16 %v2735, %v2734
        %v2740 = vld [vmem:[#allocation12] sm:$0xf]
        %v2741 = vld [vmem:[#allocation12 + $0x4] sm:$0xf]
        %v2742 = vld [vmem:[#allocation12 + $0x8] sm:$0xf]
        %v2743 = vld [vmem:[#allocation12 + $0xc] sm:$0xf]
        %v2744 = vld [vmem:[#allocation12 + $0x10] sm:$0xf]
        %v2745 = vld [vmem:[#allocation12 + $0x14] sm:$0xf]
        %v2746 = vld [vmem:[#allocation12 + $0x18] sm:$0xf]
        %v2747 = vld [vmem:[#allocation12 + $0x1c] sm:$0xf]
        %v2748 = vld [vmem:[#allocation12 + $0x20] sm:$0xf]
        %v2749 = vld [vmem:[#allocation12 + $0x24] sm:$0xf]
        %v2750 = vld [vmem:[#allocation12 + $0x28] sm:$0xf]
        %v2751 = vld [vmem:[#allocation12 + $0x2c] sm:$0xf]
        %v2752 = vld [vmem:[#allocation12 + $0x30] sm:$0xf]
        %v2753 = vld [vmem:[#allocation12 + $0x34] sm:$0xf]
        %v2754 = vld [vmem:[#allocation12 + $0x38] sm:$0xf]
        %v2755 = vld [vmem:[#allocation12 + $0x3c] sm:$0xf]
        %v2756 = vld [vmem:[%s12] sm:$0x1]
        %v2758 = vlaneseq
        %v2759 = vshrl.u32 %v2758, 7
        %v2760 = vsub.s32 0, %v2759
        %v2761 = vrot.slane %v2756, %v2760
        %v2779 = vunpack.c.l.b16 %v2740
        %v2780 = vunpack.c.l.b16 %v2741
        %v2781 = vunpack.c.l.b16 %v2742
        %v2782 = vunpack.c.l.b16 %v2743
        %v2783 = vunpack.c.l.b16 %v2744
        %v2784 = vunpack.c.l.b16 %v2745
        %v2785 = vunpack.c.l.b16 %v2746
        %v2786 = vunpack.c.l.b16 %v2747
        %v2787 = vunpack.c.l.b16 %v2748
        %v2788 = vunpack.c.l.b16 %v2749
        %v2789 = vunpack.c.l.b16 %v2750
        %v2790 = vunpack.c.l.b16 %v2751
        %v2791 = vunpack.c.l.b16 %v2752
        %v2792 = vunpack.c.l.b16 %v2753
        %v2793 = vunpack.c.l.b16 %v2754
        %v2794 = vunpack.c.l.b16 %v2755
        %v2795 = vpack.c.b16 %v2780, %v2779
        %v2796 = vpack.c.b16 %v2782, %v2781
        %v2797 = vpack.c.b16 %v2784, %v2783
        %v2798 = vpack.c.b16 %v2786, %v2785
        %v2799 = vpack.c.b16 %v2788, %v2787
        %v2800 = vpack.c.b16 %v2790, %v2789
        %v2801 = vpack.c.b16 %v2792, %v2791
        %v2802 = vpack.c.b16 %v2794, %v2793
        %2811 = vmatprep.subr.bf16.mxu0 0
        %2812 = vmatpush1.bf16.msra.mxu0 %v2795
        %2813 = vmatprep.subr.bf16.mxu0 0
        %2814 = vmatpush1.bf16.msra.mxu0 %v2796
        %2815 = vmatprep.subr.bf16.mxu0 0
        %2816 = vmatpush1.bf16.msra.mxu0 %v2797
        %2817 = vmatprep.subr.bf16.mxu0 0
        %2818 = vmatpush1.bf16.msra.mxu0 %v2798
        %2819 = vmatprep.subr.bf16.mxu0 0
        %2820 = vmatpush1.bf16.msra.mxu0 %v2799
        %2821 = vmatprep.subr.bf16.mxu0 0
        %2822 = vmatpush1.bf16.msra.mxu0 %v2800
        %2823 = vmatprep.subr.bf16.mxu0 0
        %2824 = vmatpush1.bf16.msra.mxu0 %v2801
        %2825 = vmatprep.subr.bf16.mxu0 0
        %2826 = vmatpush1.bf16.msra.mxu0 %v2802
        %2827 = vmatprep.subr.bf16.mxu0 0
        %2828 = vmatpush1.bf16.msra.mxu0 0
        %2829 = vmatprep.subr.bf16.mxu0 0
        %2830 = vmatpush1.bf16.msra.mxu0 0
        %2831 = vmatprep.subr.bf16.mxu0 0
        %2832 = vmatpush1.bf16.msra.mxu0 0
        %2833 = vmatprep.subr.bf16.mxu0 0
        %2834 = vmatpush1.bf16.msra.mxu0 0
        %2835 = vmatprep.subr.bf16.mxu0 0
        %2836 = vmatpush1.bf16.msra.mxu0 0
        %2837 = vmatprep.subr.bf16.mxu0 0
        %2838 = vmatpush1.bf16.msra.mxu0 0
        %2839 = vmatprep.subr.bf16.mxu0 0
        %2840 = vmatpush1.bf16.msra.mxu0 0
        %2841 = vmatprep.subr.bf16.mxu0 0
        %2842 = vmatpush1.bf16.msra.mxu0 0
        %2843 = vmatprep.mubr.bf16.mxu0 0
        %2844 = vmatmul.mubr.bf16.gmra.mrb[0].mxu0 %v2736
        %v2845 = vpop.f32.mrb[0].mxu0
        %v2846 = vadd.f32 %v2761, %v2845
        %v2847 = vpop.f32.mrb[0].mxu0
        %v2848 = vpop.f32.mrb[0].mxu0
        %v2849 = vadd.f32 %v2761, %v2848
        %v2850 = vpop.f32.mrb[0].mxu0
        %2851 = vmatprep.mubr.bf16.mxu0 0
        %2852 = vmatmul.mubr.bf16.gmra.mrb[0].mxu0 %v2737
        %v2853 = vpop.f32.mrb[0].mxu0
        %v2854 = vadd.f32 %v2761, %v2853
        %v2855 = vpop.f32.mrb[0].mxu0
        %v2856 = vpop.f32.mrb[0].mxu0
        %v2857 = vadd.f32 %v2761, %v2856
        %v2858 = vpop.f32.mrb[0].mxu0
        %2859 = vmatprep.mubr.bf16.mxu0 0
        %2860 = vmatmul.mubr.bf16.gmra.mrb[0].mxu0 %v2738
        %v2861 = vpop.f32.mrb[0].mxu0
        %v2862 = vadd.f32 %v2761, %v2861
        %v2863 = vpop.f32.mrb[0].mxu0
        %v2864 = vpop.f32.mrb[0].mxu0
        %v2865 = vadd.f32 %v2761, %v2864
        %v2866 = vpop.f32.mrb[0].mxu0
        %2867 = vmatprep.mubr.bf16.mxu0 0
        %2868 = vmatmul.mubr.bf16.gmra.mrb[0].mxu0 %v2739
        %v2869 = vpop.f32.mrb[0].mxu0
        %v2870 = vadd.f32 %v2761, %v2869
        %v2871 = vpop.f32.mrb[0].mxu0
        %v2872 = vpop.f32.mrb[0].mxu0
        %v2873 = vadd.f32 %v2761, %v2872
        %v2874 = vpop.f32.mrb[0].mxu0
        %2875 = vdwg.mxu0
        %v2876 = vmax.f32 %v2846, 0.0
        %v2877 = vmax.f32 %v2849, 0.0
        %v2878 = vmax.f32 %v2854, 0.0
        %v2879 = vmax.f32 %v2857, 0.0
        %v2880 = vmax.f32 %v2862, 0.0
        %v2881 = vmax.f32 %v2865, 0.0
        %v2882 = vmax.f32 %v2870, 0.0
        %v2883 = vmax.f32 %v2873, 0.0
        %v2884 = vpack.c.bf16 %v2877, %v2876
        %v2885 = vpack.c.bf16 %v2879, %v2878
        %v2886 = vpack.c.bf16 %v2881, %v2880
        %v2887 = vpack.c.bf16 %v2883, %v2882
        %v2888 = vld [vmem:[%s13] sm:$0xf]
        %v2889 = vld [vmem:[%s13 + $0x4] sm:$0xf]
        %v2890 = vld [vmem:[%s13 + $0x8] sm:$0xf]
        %v2891 = vld [vmem:[%s13 + $0xc] sm:$0xf]
        %v2892 = vld [vmem:[%s13 + $0x10] sm:$0xf]
        %v2893 = vld [vmem:[%s13 + $0x14] sm:$0xf]
        %v2894 = vld [vmem:[%s13 + $0x18] sm:$0xf]
        %v2895 = vld [vmem:[%s13 + $0x1c] sm:$0xf]
        %v2896 = vld [vmem:[%s13 + $0x20] sm:$0xf]
        %v2897 = vld [vmem:[%s13 + $0x24] sm:$0xf]
        %v2898 = vld [vmem:[%s13 + $0x28] sm:$0xf]
        %v2899 = vld [vmem:[%s13 + $0x2c] sm:$0xf]
        %v2900 = vld [vmem:[%s13 + $0x30] sm:$0xf]
        %v2901 = vld [vmem:[%s13 + $0x34] sm:$0xf]
        %v2902 = vld [vmem:[%s13 + $0x38] sm:$0xf]
        %v2903 = vld [vmem:[%s13 + $0x3c] sm:$0xf]
        %v2904 = vld [vmem:[#allocation14] sm:$0x1]
        %v2906 = vlaneseq
        %v2907 = vshrl.u32 %v2906, 7
        %v2908 = vsub.s32 0, %v2907
        %v2909 = vrot.slane %v2904, %v2908
        %v2927 = vunpack.c.l.b16 %v2888
        %v2928 = vunpack.c.l.b16 %v2889
        %v2929 = vunpack.c.l.b16 %v2890
        %v2930 = vunpack.c.l.b16 %v2891
        %v2931 = vunpack.c.l.b16 %v2892
        %v2932 = vunpack.c.l.b16 %v2893
        %v2933 = vunpack.c.l.b16 %v2894
        %v2934 = vunpack.c.l.b16 %v2895
        %v2935 = vunpack.c.l.b16 %v2896
        %v2936 = vunpack.c.l.b16 %v2897
        %v2937 = vunpack.c.l.b16 %v2898
        %v2938 = vunpack.c.l.b16 %v2899
        %v2939 = vunpack.c.l.b16 %v2900
        %v2940 = vunpack.c.l.b16 %v2901
        %v2941 = vunpack.c.l.b16 %v2902
        %v2942 = vunpack.c.l.b16 %v2903
        %v2943 = vpack.c.b16 %v2928, %v2927
        %v2944 = vpack.c.b16 %v2930, %v2929
        %v2945 = vpack.c.b16 %v2932, %v2931
        %v2946 = vpack.c.b16 %v2934, %v2933
        %v2947 = vpack.c.b16 %v2936, %v2935
        %v2948 = vpack.c.b16 %v2938, %v2937
        %v2949 = vpack.c.b16 %v2940, %v2939
        %v2950 = vpack.c.b16 %v2942, %v2941
        %2959 = vmatprep.subr.bf16.mxu0 0
        %2960 = vmatpush1.bf16.msra.mxu0 %v2943
        %2961 = vmatprep.subr.bf16.mxu0 0
        %2962 = vmatpush1.bf16.msra.mxu0 %v2944
        %2963 = vmatprep.subr.bf16.mxu0 0
        %2964 = vmatpush1.bf16.msra.mxu0 %v2945
        %2965 = vmatprep.subr.bf16.mxu0 0
        %2966 = vmatpush1.bf16.msra.mxu0 %v2946
        %2967 = vmatprep.subr.bf16.mxu0 0
        %2968 = vmatpush1.bf16.msra.mxu0 %v2947
        %2969 = vmatprep.subr.bf16.mxu0 0
        %2970 = vmatpush1.bf16.msra.mxu0 %v2948
        %2971 = vmatprep.subr.bf16.mxu0 0
        %2972 = vmatpush1.bf16.msra.mxu0 %v2949
        %2973 = vmatprep.subr.bf16.mxu0 0
        %2974 = vmatpush1.bf16.msra.mxu0 %v2950
        %2975 = vmatprep.subr.bf16.mxu0 0
        %2976 = vmatpush1.bf16.msra.mxu0 0
        %2977 = vmatprep.subr.bf16.mxu0 0
        %2978 = vmatpush1.bf16.msra.mxu0 0
        %2979 = vmatprep.subr.bf16.mxu0 0
        %2980 = vmatpush1.bf16.msra.mxu0 0
        %2981 = vmatprep.subr.bf16.mxu0 0
        %2982 = vmatpush1.bf16.msra.mxu0 0
        %2983 = vmatprep.subr.bf16.mxu0 0
        %2984 = vmatpush1.bf16.msra.mxu0 0
        %2985 = vmatprep.subr.bf16.mxu0 0
        %2986 = vmatpush1.bf16.msra.mxu0 0
        %2987 = vmatprep.subr.bf16.mxu0 0
        %2988 = vmatpush1.bf16.msra.mxu0 0
        %2989 = vmatprep.subr.bf16.mxu0 0
        %2990 = vmatpush1.bf16.msra.mxu0 0
        %2991 = vmatprep.mubr.bf16.mxu0 0
        %2992 = vmatmul.mubr.bf16.gmra.mrb[0].mxu0 %v2884
        %v2993 = vpop.f32.mrb[0].mxu0
        %v2994 = vadd.f32 %v2909, %v2993
        %v2995 = vpop.f32.mrb[0].mxu0
        %v2996 = vpop.f32.mrb[0].mxu0
        %v2997 = vadd.f32 %v2909, %v2996
        %v2998 = vpop.f32.mrb[0].mxu0
        %2999 = vmatprep.mubr.bf16.mxu0 0
        %3000 = vmatmul.mubr.bf16.gmra.mrb[0].mxu0 %v2885
        %v3001 = vpop.f32.mrb[0].mxu0
        %v3002 = vadd.f32 %v2909, %v3001
        %v3003 = vpop.f32.mrb[0].mxu0
        %v3004 = vpop.f32.mrb[0].mxu0
        %v3005 = vadd.f32 %v2909, %v3004
        %v3006 = vpop.f32.mrb[0].mxu0
        %3007 = vmatprep.mubr.bf16.mxu0 0
        %3008 = vmatmul.mubr.bf16.gmra.mrb[0].mxu0 %v2886
        %v3009 = vpop.f32.mrb[0].mxu0
        %v3010 = vadd.f32 %v2909, %v3009
        %v3011 = vpop.f32.mrb[0].mxu0
        %v3012 = vpop.f32.mrb[0].mxu0
        %v3013 = vadd.f32 %v2909, %v3012
        %v3014 = vpop.f32.mrb[0].mxu0
        %3015 = vmatprep.mubr.bf16.mxu0 0
        %3016 = vmatmul.mubr.bf16.gmra.mrb[0].mxu0 %v2887
        %v3017 = vpop.f32.mrb[0].mxu0
        %v3018 = vadd.f32 %v2909, %v3017
        %v3019 = vpop.f32.mrb[0].mxu0
        %v3020 = vpop.f32.mrb[0].mxu0
        %v3021 = vadd.f32 %v2909, %v3020
        %v3022 = vpop.f32.mrb[0].mxu0
        %3023 = vdwg.mxu0
        %v3024 = vmax.f32 %v2994, 0.0
        %v3025 = vmax.f32 %v2997, 0.0
        %v3026 = vmax.f32 %v3002, 0.0
        %v3027 = vmax.f32 %v3005, 0.0
        %v3028 = vmax.f32 %v3010, 0.0
        %v3029 = vmax.f32 %v3013, 0.0
        %v3030 = vmax.f32 %v3018, 0.0
        %v3031 = vmax.f32 %v3021, 0.0
        %3032 = vadd.xlane.f32.xlu0 %v3024
        %v3033 = vpop.xlane.xlu0 %3032
        %3034 = vadd.xlane.f32.xlu0 %v3025
        %v3035 = vpop.xlane.xlu0 %3034
        %3036 = vadd.xlane.f32.xlu0 %v3026
        %v3037 = vpop.xlane.xlu0 %3036
        %3038 = vadd.xlane.f32.xlu0 %v3027
        %v3039 = vpop.xlane.xlu0 %3038
        %3040 = vadd.xlane.f32.xlu0 %v3028
        %v3041 = vpop.xlane.xlu0 %3040
        %3042 = vadd.xlane.f32.xlu0 %v3029
        %v3043 = vpop.xlane.xlu0 %3042
        %3044 = vadd.xlane.f32.xlu0 %v3030
        %v3045 = vpop.xlane.xlu0 %3044
        %3046 = vadd.xlane.f32.xlu0 %v3031
        %v3047 = vpop.xlane.xlu0 %3046
        %v3048 = vrcp.pop 128.0
        %v3049 = vmul.f32 %v3033, %v3048
        %v3050 = vmul.f32 %v3035, %v3048
        %v3051 = vmul.f32 %v3037, %v3048
        %v3052 = vmul.f32 %v3039, %v3048
        %v3053 = vmul.f32 %v3041, %v3048
        %v3054 = vmul.f32 %v3043, %v3048
        %v3055 = vmul.f32 %v3045, %v3048
        %v3056 = vmul.f32 %v3047, %v3048
        %v3057 = vsub.f32 %v3024, %v3049
        %v3058 = vsub.f32 %v3025, %v3050
        %v3059 = vsub.f32 %v3026, %v3051
        %v3060 = vsub.f32 %v3027, %v3052
        %v3061 = vsub.f32 %v3028, %v3053
        %v3062 = vsub.f32 %v3029, %v3054
        %v3063 = vsub.f32 %v3030, %v3055
        %v3064 = vsub.f32 %v3031, %v3056
        %v3065 = vmul.f32 %v3057, %v3057
        %v3066 = vmul.f32 %v3058, %v3058
        %v3067 = vmul.f32 %v3059, %v3059
        %v3068 = vmul.f32 %v3060, %v3060
        %v3069 = vmul.f32 %v3061, %v3061
        %v3070 = vmul.f32 %v3062, %v3062
        %v3071 = vmul.f32 %v3063, %v3063
        %v3072 = vmul.f32 %v3064, %v3064
        %3073 = vadd.xlane.f32.xlu0 %v3065
        %v3074 = vpop.xlane.xlu0 %3073
        %3075 = vadd.xlane.f32.xlu0 %v3066
        %v3076 = vpop.xlane.xlu0 %3075
        %3077 = vadd.xlane.f32.xlu0 %v3067
        %v3078 = vpop.xlane.xlu0 %3077
        %3079 = vadd.xlane.f32.xlu0 %v3068
        %v3080 = vpop.xlane.xlu0 %3079
        %3081 = vadd.xlane.f32.xlu0 %v3069
        %v3082 = vpop.xlane.xlu0 %3081
        %3083 = vadd.xlane.f32.xlu0 %v3070
        %v3084 = vpop.xlane.xlu0 %3083
        %3085 = vadd.xlane.f32.xlu0 %v3071
        %v3086 = vpop.xlane.xlu0 %3085
        %3087 = vadd.xlane.f32.xlu0 %v3072
        %v3088 = vpop.xlane.xlu0 %3087
        %v3089 = vmul.f32 %v3074, %v3048
        %v3090 = vmul.f32 %v3076, %v3048
        %v3091 = vmul.f32 %v3078, %v3048
        %v3092 = vmul.f32 %v3080, %v3048
        %v3093 = vmul.f32 %v3082, %v3048
        %v3094 = vmul.f32 %v3084, %v3048
        %v3095 = vmul.f32 %v3086, %v3048
        %v3096 = vmul.f32 %v3088, %v3048
        %v3097 = vadd.f32 %v3089, 1e-05
        %v3098 = vadd.f32 %v3090, 1e-05
        %v3099 = vadd.f32 %v3091, 1e-05
        %v3100 = vadd.f32 %v3092, 1e-05
        %v3101 = vadd.f32 %v3093, 1e-05
        %v3102 = vadd.f32 %v3094, 1e-05
        %v3103 = vadd.f32 %v3095, 1e-05
        %v3104 = vadd.f32 %v3096, 1e-05
        %v3105 = vrsqrt.pop %v3097
        %v3106 = vrsqrt.pop %v3098
        %v3107 = vrsqrt.pop %v3099
        %v3108 = vrsqrt.pop %v3100
        %v3109 = vrsqrt.pop %v3101
        %v3110 = vrsqrt.pop %v3102
        %v3111 = vrsqrt.pop %v3103
        %v3112 = vrsqrt.pop %v3104
        %v3113 = vmul.f32 %v3057, %v3105
        %v3114 = vmul.f32 %v3058, %v3106
        %v3115 = vmul.f32 %v3059, %v3107
        %v3116 = vmul.f32 %v3060, %v3108
        %v3117 = vmul.f32 %v3061, %v3109
        %v3118 = vmul.f32 %v3062, %v3110
        %v3119 = vmul.f32 %v3063, %v3111
        %v3120 = vmul.f32 %v3064, %v3112
        %v3121 = vld [vmem:[#allocation15] sm:$0x1]
        %v3123 = vlaneseq
        %v3124 = vshrl.u32 %v3123, 7
        %v3125 = vsub.s32 0, %v3124
        %v3126 = vrot.slane %v3121, %v3125
        %v3128 = vmul.f32 %v3113, %v3126
        %v3129 = vmul.f32 %v3114, %v3126
        %v3130 = vmul.f32 %v3115, %v3126
        %v3131 = vmul.f32 %v3116, %v3126
        %v3132 = vmul.f32 %v3117, %v3126
        %v3133 = vmul.f32 %v3118, %v3126
        %v3134 = vmul.f32 %v3119, %v3126
        %v3135 = vmul.f32 %v3120, %v3126
        %v3136 = vld [vmem:[#allocation17] sm:$0x1]
        %v3138 = vlaneseq
        %v3139 = vshrl.u32 %v3138, 7
        %v3140 = vsub.s32 0, %v3139
        %v3141 = vrot.slane %v3136, %v3140
        %v3143 = vadd.f32 %v3128, %v3141
        %v3144 = vadd.f32 %v3129, %v3141
        %v3145 = vadd.f32 %v3130, %v3141
        %v3146 = vadd.f32 %v3131, %v3141
        %v3147 = vadd.f32 %v3132, %v3141
        %v3148 = vadd.f32 %v3133, %v3141
        %v3149 = vadd.f32 %v3134, %v3141
        %v3150 = vadd.f32 %v3135, %v3141
        %v3151 = vld [vmem:[%s17] sm:$0x1]
        %v3153 = vlaneseq
        %v3154 = vshrl.u32 %v3153, 7
        %v3155 = vsub.s32 0, %v3154
        %v3156 = vrot.slane %v3151, %v3155
        %v3158 = vmul.f32 %v3143, %v3156
        %v3159 = vmul.f32 %v3144, %v3156
        %v3160 = vmul.f32 %v3145, %v3156
        %v3161 = vmul.f32 %v3146, %v3156
        %v3162 = vmul.f32 %v3147, %v3156
        %v3163 = vmul.f32 %v3148, %v3156
        %v3164 = vmul.f32 %v3149, %v3156
        %v3165 = vmul.f32 %v3150, %v3156
        %3166 = vadd.xlane.f32.xlu0 %v3158
        %v3167 = vpop.xlane.xlu0 %3166
        %3168 = vadd.xlane.f32.xlu0 %v3159
        %v3169 = vpop.xlane.xlu0 %3168
        %3170 = vadd.xlane.f32.xlu0 %v3160
        %v3171 = vpop.xlane.xlu0 %3170
        %3172 = vadd.xlane.f32.xlu0 %v3161
        %v3173 = vpop.xlane.xlu0 %3172
        %3174 = vadd.xlane.f32.xlu0 %v3162
        %v3175 = vpop.xlane.xlu0 %3174
        %3176 = vadd.xlane.f32.xlu0 %v3163
        %v3177 = vpop.xlane.xlu0 %3176
        %3178 = vadd.xlane.f32.xlu0 %v3164
        %v3179 = vpop.xlane.xlu0 %3178
        %3180 = vadd.xlane.f32.xlu0 %v3165
        %v3181 = vpop.xlane.xlu0 %3180
        %v3182 = vld [vmem:[#allocation2] sm:$0x1]
        %v3184 = vlaneseq
        %v3185 = vshrl.u32 %v3184, 7
        %v3186 = vsub.s32 0, %v3185
        %v3187 = vrot.slane %v3182, %v3186
        %3188 = vset.pattern.permute.xlu0 0
        %3189 = vperm.xlu0 %3188, %v3187
        %v3190 = vpop.permute.xlu0 %3189
        %v3192 = vadd.f32 %v3167, %v3190
        %v3193 = vadd.f32 %v3169, %v3190
        %v3194 = vadd.f32 %v3171, %v3190
        %v3195 = vadd.f32 %v3173, %v3190
        %v3196 = vadd.f32 %v3175, %v3190
        %v3197 = vadd.f32 %v3177, %v3190
        %v3198 = vadd.f32 %v3179, %v3190
        %v3199 = vadd.f32 %v3181, %v3190
        %v3208 = vlaneseq
        %v3209 = vand.u32 %v3208, 127
        %v3210 = vlaneseq
        %v3211 = vshrl.u32 %v3210, 7
        %v3212 = vsub.s32 %v3209, %v3211
        %v3213 = vrot.slane %v3192, %v3212
        %v3214 = vlaneseq
        %v3215 = vshrl.u32 %v3214, 7
        %v3216 = vsub.s32 %v3209, %v3215
        %v3217 = vrot.slane %v3193, %v3216
        %v3218 = vlaneseq
        %v3219 = vshrl.u32 %v3218, 7
        %v3220 = vsub.s32 %v3209, %v3219
        %v3221 = vrot.slane %v3194, %v3220
        %v3222 = vlaneseq
        %v3223 = vshrl.u32 %v3222, 7
        %v3224 = vsub.s32 %v3209, %v3223
        %v3225 = vrot.slane %v3195, %v3224
        %v3226 = vlaneseq
        %v3227 = vshrl.u32 %v3226, 7
        %v3228 = vsub.s32 %v3209, %v3227
        %v3229 = vrot.slane %v3196, %v3228
        %v3230 = vlaneseq
        %v3231 = vshrl.u32 %v3230, 7
        %v3232 = vsub.s32 %v3209, %v3231
        %v3233 = vrot.slane %v3197, %v3232
        %v3234 = vlaneseq
        %v3235 = vshrl.u32 %v3234, 7
        %v3236 = vsub.s32 %v3209, %v3235
        %v3237 = vrot.slane %v3198, %v3236
        %v3238 = vlaneseq
        %v3239 = vshrl.u32 %v3238, 7
        %v3240 = vsub.s32 %v3209, %v3239
        %v3241 = vrot.slane %v3199, %v3240
        %vm3242 = vcmask 1041409
        %v3243 = vsel %vm3242, %v3217, %v3213
        %vm3244 = vcmask 1042434
        %v3245 = vsel %vm3244, %v3221, %v3243
        %vm3246 = vcmask 1043459
        %v3247 = vsel %vm3246, %v3225, %v3245
        %vm3248 = vcmask 1044484
        %v3249 = vsel %vm3248, %v3229, %v3247
        %vm3250 = vcmask 1045509
        %v3251 = vsel %vm3250, %v3233, %v3249
        %vm3252 = vcmask 1046534
        %v3253 = vsel %vm3252, %v3237, %v3251
        %vm3254 = vcmask 1047559
        %v3255 = vsel %vm3254, %v3241, %v3253
        %vm3257 = vcmask 64512
        %v3258 = vsel %vm3257, %v3255, -inf
        %3259 = vmax.xlane.f32.xlu0 %v3258
        %v3260 = vpop.xlane.xlu0 %3259
        %v3262 = vlaneseq
        %v3263 = vshrl.u32 %v3262, 7
        %v3264 = vsub.s32 0, %v3263
        %v3265 = vrot.slane %v3260, %v3264
        %v3266 = vlaneseq
        %v3267 = vshrl.u32 %v3266, 7
        %v3268 = vsub.s32 1, %v3267
        %v3269 = vrot.slane %v3260, %v3268
        %v3270 = vlaneseq
        %v3271 = vshrl.u32 %v3270, 7
        %v3272 = vsub.s32 2, %v3271
        %v3273 = vrot.slane %v3260, %v3272
        %v3274 = vlaneseq
        %v3275 = vshrl.u32 %v3274, 7
        %v3276 = vsub.s32 3, %v3275
        %v3277 = vrot.slane %v3260, %v3276
        %v3278 = vlaneseq
        %v3279 = vshrl.u32 %v3278, 7
        %v3280 = vsub.s32 4, %v3279
        %v3281 = vrot.slane %v3260, %v3280
        %v3282 = vlaneseq
        %v3283 = vshrl.u32 %v3282, 7
        %v3284 = vsub.s32 5, %v3283
        %v3285 = vrot.slane %v3260, %v3284
        %v3286 = vlaneseq
        %v3287 = vshrl.u32 %v3286, 7
        %v3288 = vsub.s32 6, %v3287
        %v3289 = vrot.slane %v3260, %v3288
        %v3290 = vlaneseq
        %v3291 = vshrl.u32 %v3290, 7
        %v3292 = vsub.s32 7, %v3291
        %v3293 = vrot.slane %v3260, %v3292
        %v3302 = vsub.f32 %v3192, %v3265
        %v3303 = vsub.f32 %v3193, %v3269
        %v3304 = vsub.f32 %v3194, %v3273
        %v3305 = vsub.f32 %v3195, %v3277
        %v3306 = vsub.f32 %v3196, %v3281
        %v3307 = vsub.f32 %v3197, %v3285
        %v3308 = vsub.f32 %v3198, %v3289
        %v3309 = vsub.f32 %v3199, %v3293
        %v3310 = vmul.f32 %v3302, 1.442695
        %v3311 = vpow.pop %v3310
        %v3312 = vmul.f32 %v3303, 1.442695
        %v3313 = vpow.pop %v3312
        %v3314 = vmul.f32 %v3304, 1.442695
        %v3315 = vpow.pop %v3314
        %v3316 = vmul.f32 %v3305, 1.442695
        %v3317 = vpow.pop %v3316
        %v3318 = vmul.f32 %v3306, 1.442695
        %v3319 = vpow.pop %v3318
        %v3320 = vmul.f32 %v3307, 1.442695
        %v3321 = vpow.pop %v3320
        %v3322 = vmul.f32 %v3308, 1.442695
        %v3323 = vpow.pop %v3322
        %v3324 = vmul.f32 %v3309, 1.442695
        %v3325 = vpow.pop %v3324
        %3334 = vset.pattern.permute.xlu0 0
        %3335 = vperm.xlu0 %3334, %v3311
        %v3336 = vpop.permute.xlu0 %3335
        %3337 = vset.pattern.permute.xlu0 0
        %3338 = vperm.xlu0 %3337, %v3313
        %v3339 = vpop.permute.xlu0 %3338
        %3340 = vset.pattern.permute.xlu0 0
        %3341 = vperm.xlu0 %3340, %v3315
        %v3342 = vpop.permute.xlu0 %3341
        %3343 = vset.pattern.permute.xlu0 0
        %3344 = vperm.xlu0 %3343, %v3317
        %v3345 = vpop.permute.xlu0 %3344
        %3346 = vset.pattern.permute.xlu0 0
        %3347 = vperm.xlu0 %3346, %v3319
        %v3348 = vpop.permute.xlu0 %3347
        %3349 = vset.pattern.permute.xlu0 0
        %3350 = vperm.xlu0 %3349, %v3321
        %v3351 = vpop.permute.xlu0 %3350
        %3352 = vset.pattern.permute.xlu0 0
        %3353 = vperm.xlu0 %3352, %v3323
        %v3354 = vpop.permute.xlu0 %3353
        %3355 = vset.pattern.permute.xlu0 0
        %3356 = vperm.xlu0 %3355, %v3325
        %v3357 = vpop.permute.xlu0 %3356
        %v3358 = vlaneseq
        %v3359 = vshrl.u32 %v3358, 7
        %v3360 = vsub.s32 %v3209, %v3359
        %v3361 = vrot.slane %v3336, %v3360
        %v3362 = vlaneseq
        %v3363 = vshrl.u32 %v3362, 7
        %v3364 = vsub.s32 %v3209, %v3363
        %v3365 = vrot.slane %v3339, %v3364
        %v3366 = vlaneseq
        %v3367 = vshrl.u32 %v3366, 7
        %v3368 = vsub.s32 %v3209, %v3367
        %v3369 = vrot.slane %v3342, %v3368
        %v3370 = vlaneseq
        %v3371 = vshrl.u32 %v3370, 7
        %v3372 = vsub.s32 %v3209, %v3371
        %v3373 = vrot.slane %v3345, %v3372
        %v3374 = vlaneseq
        %v3375 = vshrl.u32 %v3374, 7
        %v3376 = vsub.s32 %v3209, %v3375
        %v3377 = vrot.slane %v3348, %v3376
        %v3378 = vlaneseq
        %v3379 = vshrl.u32 %v3378, 7
        %v3380 = vsub.s32 %v3209, %v3379
        %v3381 = vrot.slane %v3351, %v3380
        %v3382 = vlaneseq
        %v3383 = vshrl.u32 %v3382, 7
        %v3384 = vsub.s32 %v3209, %v3383
        %v3385 = vrot.slane %v3354, %v3384
        %v3386 = vlaneseq
        %v3387 = vshrl.u32 %v3386, 7
        %v3388 = vsub.s32 %v3209, %v3387
        %v3389 = vrot.slane %v3357, %v3388
        %v3390 = vsel %vm3242, %v3365, %v3361
        %v3391 = vsel %vm3244, %v3369, %v3390
        %v3392 = vsel %vm3246, %v3373, %v3391
        %v3393 = vsel %vm3248, %v3377, %v3392
        %v3394 = vsel %vm3250, %v3381, %v3393
        %v3395 = vsel %vm3252, %v3385, %v3394
        %v3396 = vsel %vm3254, %v3389, %v3395
        %v3398 = vsel %vm3257, %v3396, 0.0
        %3399 = vadd.xlane.f32.xlu0 %v3398
        %v3400 = vpop.xlane.xlu0 %3399
        %v3402 = vlaneseq
        %v3403 = vshrl.u32 %v3402, 7
        %v3404 = vsub.s32 0, %v3403
        %v3405 = vrot.slane %v3400, %v3404
        %v3406 = vlaneseq
        %v3407 = vshrl.u32 %v3406, 7
        %v3408 = vsub.s32 1, %v3407
        %v3409 = vrot.slane %v3400, %v3408
        %v3410 = vlaneseq
        %v3411 = vshrl.u32 %v3410, 7
        %v3412 = vsub.s32 2, %v3411
        %v3413 = vrot.slane %v3400, %v3412
        %v3414 = vlaneseq
        %v3415 = vshrl.u32 %v3414, 7
        %v3416 = vsub.s32 3, %v3415
        %v3417 = vrot.slane %v3400, %v3416
        %v3418 = vlaneseq
        %v3419 = vshrl.u32 %v3418, 7
        %v3420 = vsub.s32 4, %v3419
        %v3421 = vrot.slane %v3400, %v3420
        %v3422 = vlaneseq
        %v3423 = vshrl.u32 %v3422, 7
        %v3424 = vsub.s32 5, %v3423
        %v3425 = vrot.slane %v3400, %v3424
        %v3426 = vlaneseq
        %v3427 = vshrl.u32 %v3426, 7
        %v3428 = vsub.s32 6, %v3427
        %v3429 = vrot.slane %v3400, %v3428
        %v3430 = vlaneseq
        %v3431 = vshrl.u32 %v3430, 7
        %v3432 = vsub.s32 7, %v3431
        %v3433 = vrot.slane %v3400, %v3432
        %v3442 = vrcp.pop %v3405
        %v3443 = vmul.f32 %v3311, %v3442
        %v3444 = vrcp.pop %v3409
        %v3445 = vmul.f32 %v3313, %v3444
        %v3446 = vrcp.pop %v3413
        %v3447 = vmul.f32 %v3315, %v3446
        %v3448 = vrcp.pop %v3417
        %v3449 = vmul.f32 %v3317, %v3448
        %v3450 = vrcp.pop %v3421
        %v3451 = vmul.f32 %v3319, %v3450
        %v3452 = vrcp.pop %v3425
        %v3453 = vmul.f32 %v3321, %v3452
        %v3454 = vrcp.pop %v3429
        %v3455 = vmul.f32 %v3323, %v3454
        %v3456 = vrcp.pop %v3433
        %v3457 = vmul.f32 %v3325, %v3456
        %3466 = vset.pattern.permute.xlu0 0
        %3467 = vperm.xlu0 %3466, %v3443
        %v3468 = vpop.permute.xlu0 %3467
        %3469 = vset.pattern.permute.xlu0 0
        %3470 = vperm.xlu0 %3469, %v3445
        %v3471 = vpop.permute.xlu0 %3470
        %3472 = vset.pattern.permute.xlu0 0
        %3473 = vperm.xlu0 %3472, %v3447
        %v3474 = vpop.permute.xlu0 %3473
        %3475 = vset.pattern.permute.xlu0 0
        %3476 = vperm.xlu0 %3475, %v3449
        %v3477 = vpop.permute.xlu0 %3476
        %3478 = vset.pattern.permute.xlu0 0
        %3479 = vperm.xlu0 %3478, %v3451
        %v3480 = vpop.permute.xlu0 %3479
        %3481 = vset.pattern.permute.xlu0 0
        %3482 = vperm.xlu0 %3481, %v3453
        %v3483 = vpop.permute.xlu0 %3482
        %3484 = vset.pattern.permute.xlu0 0
        %3485 = vperm.xlu0 %3484, %v3455
        %v3486 = vpop.permute.xlu0 %3485
        %3487 = vset.pattern.permute.xlu0 0
        %3488 = vperm.xlu0 %3487, %v3457
        %v3489 = vpop.permute.xlu0 %3488
        %v3490 = vlaneseq
        %v3491 = vshrl.u32 %v3490, 7
        %v3492 = vsub.s32 %v3209, %v3491
        %v3493 = vrot.slane %v3468, %v3492
        %v3494 = vlaneseq
        %v3495 = vshrl.u32 %v3494, 7
        %v3496 = vsub.s32 %v3209, %v3495
        %v3497 = vrot.slane %v3471, %v3496
        %v3498 = vlaneseq
        %v3499 = vshrl.u32 %v3498, 7
        %v3500 = vsub.s32 %v3209, %v3499
        %v3501 = vrot.slane %v3474, %v3500
        %v3502 = vlaneseq
        %v3503 = vshrl.u32 %v3502, 7
        %v3504 = vsub.s32 %v3209, %v3503
        %v3505 = vrot.slane %v3477, %v3504
        %v3506 = vlaneseq
        %v3507 = vshrl.u32 %v3506, 7
        %v3508 = vsub.s32 %v3209, %v3507
        %v3509 = vrot.slane %v3480, %v3508
        %v3510 = vlaneseq
        %v3511 = vshrl.u32 %v3510, 7
        %v3512 = vsub.s32 %v3209, %v3511
        %v3513 = vrot.slane %v3483, %v3512
        %v3514 = vlaneseq
        %v3515 = vshrl.u32 %v3514, 7
        %v3516 = vsub.s32 %v3209, %v3515
        %v3517 = vrot.slane %v3486, %v3516
        %v3518 = vlaneseq
        %v3519 = vshrl.u32 %v3518, 7
        %v3520 = vsub.s32 %v3209, %v3519
        %v3521 = vrot.slane %v3489, %v3520
        %v3522 = vsel %vm3242, %v3497, %v3493
        %v3523 = vsel %vm3244, %v3501, %v3522
        %v3524 = vsel %vm3246, %v3505, %v3523
        %v3525 = vsel %vm3248, %v3509, %v3524
        %v3526 = vsel %vm3250, %v3513, %v3525
        %v3527 = vsel %vm3252, %v3517, %v3526
        %v3528 = vsel %vm3254, %v3521, %v3527
        %3530 = vst.msk [vmem:[%s973] sm:$0xff] %vm3257, %v3528
        %v3531 = vld [vmem:[%s21] sm:$0xff]
        %v3532 = vsel %vm3257, %v3528, 0
        %3534 = vmatprep.subr.mxu0 0.0
        %3535 = vmatpush1.msra.mxu0 %v3531
        %3536 = vmatprep.subr.mxu0 0.0
        %3537 = vmatpush1.msra.mxu0 0.0
        %3538 = vmatprep.subr.mxu0 0.0
        %3539 = vmatpush1.msra.mxu0 0.0
        %3540 = vmatprep.subr.mxu0 0.0
        %3541 = vmatpush1.msra.mxu0 0.0
        %3542 = vmatprep.subr.mxu0 0.0
        %3543 = vmatpush1.msra.mxu0 0.0
        %3544 = vmatprep.subr.mxu0 0.0
        %3545 = vmatpush1.msra.mxu0 0.0
        %3546 = vmatprep.subr.mxu0 0.0
        %3547 = vmatpush1.msra.mxu0 0.0
        %3548 = vmatprep.subr.mxu0 0.0
        %3549 = vmatpush1.msra.mxu0 0.0
        %3550 = vmatprep.subr.mxu0 0.0
        %3551 = vmatpush1.msra.mxu0 0.0
        %3552 = vmatprep.subr.mxu0 0.0
        %3553 = vmatpush1.msra.mxu0 0.0
        %3554 = vmatprep.subr.mxu0 0.0
        %3555 = vmatpush1.msra.mxu0 0.0
        %3556 = vmatprep.subr.mxu0 0.0
        %3557 = vmatpush1.msra.mxu0 0.0
        %3558 = vmatprep.subr.mxu0 0.0
        %3559 = vmatpush1.msra.mxu0 0.0
        %3560 = vmatprep.subr.mxu0 0.0
        %3561 = vmatpush1.msra.mxu0 0.0
        %3562 = vmatprep.subr.mxu0 0.0
        %3563 = vmatpush1.msra.mxu0 0.0
        %3564 = vmatprep.subr.mxu0 0.0
        %3565 = vmatpush1.msra.mxu0 0.0
        %3566 = vmatprep.subr.mxu0 0.0
        %3567 = vmatpush1.msra.mxu0 0.0
        %3568 = vmatprep.subr.mxu0 0.0
        %3569 = vmatpush1.msra.mxu0 0.0
        %3570 = vmatprep.subr.mxu0 0.0
        %3571 = vmatpush1.msra.mxu0 0.0
        %3572 = vmatprep.subr.mxu0 0.0
        %3573 = vmatpush1.msra.mxu0 0.0
        %3574 = vmatprep.subr.mxu0 0.0
        %3575 = vmatpush1.msra.mxu0 0.0
        %3576 = vmatprep.subr.mxu0 0.0
        %3577 = vmatpush1.msra.mxu0 0.0
        %3578 = vmatprep.subr.mxu0 0.0
        %3579 = vmatpush1.msra.mxu0 0.0
        %3580 = vmatprep.subr.mxu0 0.0
        %3581 = vmatpush1.msra.mxu0 0.0
        %3582 = vmatprep.subr.mxu0 0.0
        %3583 = vmatpush1.msra.mxu0 0.0
        %3584 = vmatprep.subr.mxu0 0.0
        %3585 = vmatpush1.msra.mxu0 0.0
        %3586 = vmatprep.subr.mxu0 0.0
        %3587 = vmatpush1.msra.mxu0 0.0
        %3588 = vmatprep.subr.mxu0 0.0
        %3589 = vmatpush1.msra.mxu0 0.0
        %3590 = vmatprep.subr.mxu0 0.0
        %3591 = vmatpush1.msra.mxu0 0.0
        %3592 = vmatprep.subr.mxu0 0.0
        %3593 = vmatpush1.msra.mxu0 0.0
        %3594 = vmatprep.subr.mxu0 0.0
        %3595 = vmatpush1.msra.mxu0 0.0
        %3596 = vmatprep.subr.mxu0 0.0
        %3597 = vmatpush1.msra.mxu0 0.0
        %3598 = vmatprep.mubr.f32.mxu0 0.0
        %3599 = vmatmul.mubr.f32.gmra.mrb[0].mxu0 %v3532
        %v3600 = vpop.f32.mrb[0].mxu0
        %v3601 = vadd.f32 0.0, %v3600
        %v3602 = vpop.f32.mrb[0].mxu0
        %3603 = vdwg.mxu0
        %v3604 = vld [vmem:[%s828] sm:$0xff]
        %v3605 = vmul.f32 %v3601, %v3604
        %v3606 = vadd.s32 %v3209, 128
        %v3607 = vadd.s32 %v3209, 256
        %v3608 = vadd.s32 %v3209, 384
        %v3609 = vld [vmem:[%s968] sm:$0xff]
        %v3610 = vld [vmem:[%s968 + $0x8] sm:$0xff]
        %v3611 = vld [vmem:[%s968 + $0x10] sm:$0xff]
        %v3612 = vld [vmem:[%s968 + $0x18] sm:$0xff]
        %v3613 = vld [vmem:[%s968 + $0x20] sm:$0xff]
        %v3614 = vld [vmem:[%s968 + $0x28] sm:$0xff]
        %v3615 = vld [vmem:[%s968 + $0x30] sm:$0xff]
        %v3616 = vld [vmem:[%s968 + $0x38] sm:$0xff]
        %v3617 = vld [vmem:[%s968 + $0x40] sm:$0xff]
        %v3618 = vld [vmem:[%s968 + $0x48] sm:$0xff]
        %v3619 = vld [vmem:[%s968 + $0x50] sm:$0xff]
        %v3620 = vld [vmem:[%s968 + $0x58] sm:$0xff]
        %v3621 = vld [vmem:[%s968 + $0x60] sm:$0xff]
        %v3622 = vld [vmem:[%s968 + $0x68] sm:$0xff]
        %v3623 = vld [vmem:[%s968 + $0x70] sm:$0xff]
        %v3624 = vld [vmem:[%s968 + $0x78] sm:$0xff]
        %v3625 = vld [vmem:[%s968 + $0x80] sm:$0xff]
        %v3626 = vld [vmem:[%s968 + $0x88] sm:$0xff]
        %v3627 = vld [vmem:[%s968 + $0x90] sm:$0xff]
        %v3628 = vld [vmem:[%s968 + $0x98] sm:$0xff]
        %v3629 = vld [vmem:[%s968 + $0xa0] sm:$0xff]
        %v3630 = vld [vmem:[%s968 + $0xa8] sm:$0xff]
        %v3631 = vld [vmem:[%s968 + $0xb0] sm:$0xff]
        %v3632 = vld [vmem:[%s968 + $0xb8] sm:$0xff]
        %v3633 = vld [vmem:[%s968 + $0xc0] sm:$0xff]
        %v3634 = vld [vmem:[%s968 + $0xc8] sm:$0xff]
        %v3635 = vld [vmem:[%s968 + $0xd0] sm:$0xff]
        %v3636 = vld [vmem:[%s968 + $0xd8] sm:$0xff]
        %v3637 = vld [vmem:[%s968 + $0xe0] sm:$0xff]
        %v3638 = vld [vmem:[%s968 + $0xe8] sm:$0xff]
        %v3639 = vld [vmem:[%s968 + $0xf0] sm:$0xff]
        %v3640 = vld [vmem:[%s968 + $0xf8] sm:$0xff]
        %3641 = vset.pattern.permute.xlu0 0
        %3642 = vperm.xlu0 %3641, %v3609
        %v3643 = vpop.permute.xlu0 %3642
        %3644 = vset.pattern.permute.xlu0 0
        %3645 = vperm.xlu0 %3644, %v3610
        %v3646 = vpop.permute.xlu0 %3645
        %3647 = vset.pattern.permute.xlu0 0
        %3648 = vperm.xlu0 %3647, %v3611
        %v3649 = vpop.permute.xlu0 %3648
        %3650 = vset.pattern.permute.xlu0 0
        %3651 = vperm.xlu0 %3650, %v3612
        %v3652 = vpop.permute.xlu0 %3651
        %3653 = vset.pattern.permute.xlu0 0
        %3654 = vperm.xlu0 %3653, %v3613
        %v3655 = vpop.permute.xlu0 %3654
        %3656 = vset.pattern.permute.xlu0 0
        %3657 = vperm.xlu0 %3656, %v3614
        %v3658 = vpop.permute.xlu0 %3657
        %3659 = vset.pattern.permute.xlu0 0
        %3660 = vperm.xlu0 %3659, %v3615
        %v3661 = vpop.permute.xlu0 %3660
        %3662 = vset.pattern.permute.xlu0 0
        %3663 = vperm.xlu0 %3662, %v3616
        %v3664 = vpop.permute.xlu0 %3663
        %3665 = vset.pattern.permute.xlu0 0
        %3666 = vperm.xlu0 %3665, %v3617
        %v3667 = vpop.permute.xlu0 %3666
        %3668 = vset.pattern.permute.xlu0 0
        %3669 = vperm.xlu0 %3668, %v3618
        %v3670 = vpop.permute.xlu0 %3669
        %3671 = vset.pattern.permute.xlu0 0
        %3672 = vperm.xlu0 %3671, %v3619
        %v3673 = vpop.permute.xlu0 %3672
        %3674 = vset.pattern.permute.xlu0 0
        %3675 = vperm.xlu0 %3674, %v3620
        %v3676 = vpop.permute.xlu0 %3675
        %3677 = vset.pattern.permute.xlu0 0
        %3678 = vperm.xlu0 %3677, %v3621
        %v3679 = vpop.permute.xlu0 %3678
        %3680 = vset.pattern.permute.xlu0 0
        %3681 = vperm.xlu0 %3680, %v3622
        %v3682 = vpop.permute.xlu0 %3681
        %3683 = vset.pattern.permute.xlu0 0
        %3684 = vperm.xlu0 %3683, %v3623
        %v3685 = vpop.permute.xlu0 %3684
        %3686 = vset.pattern.permute.xlu0 0
        %3687 = vperm.xlu0 %3686, %v3624
        %v3688 = vpop.permute.xlu0 %3687
        %3689 = vset.pattern.permute.xlu0 0
        %3690 = vperm.xlu0 %3689, %v3625
        %v3691 = vpop.permute.xlu0 %3690
        %3692 = vset.pattern.permute.xlu0 0
        %3693 = vperm.xlu0 %3692, %v3626
        %v3694 = vpop.permute.xlu0 %3693
        %3695 = vset.pattern.permute.xlu0 0
        %3696 = vperm.xlu0 %3695, %v3627
        %v3697 = vpop.permute.xlu0 %3696
        %3698 = vset.pattern.permute.xlu0 0
        %3699 = vperm.xlu0 %3698, %v3628
        %v3700 = vpop.permute.xlu0 %3699
        %3701 = vset.pattern.permute.xlu0 0
        %3702 = vperm.xlu0 %3701, %v3629
        %v3703 = vpop.permute.xlu0 %3702
        %3704 = vset.pattern.permute.xlu0 0
        %3705 = vperm.xlu0 %3704, %v3630
        %v3706 = vpop.permute.xlu0 %3705
        %3707 = vset.pattern.permute.xlu0 0
        %3708 = vperm.xlu0 %3707, %v3631
        %v3709 = vpop.permute.xlu0 %3708
        %3710 = vset.pattern.permute.xlu0 0
        %3711 = vperm.xlu0 %3710, %v3632
        %v3712 = vpop.permute.xlu0 %3711
        %3713 = vset.pattern.permute.xlu0 0
        %3714 = vperm.xlu0 %3713, %v3633
        %v3715 = vpop.permute.xlu0 %3714
        %3716 = vset.pattern.permute.xlu0 0
        %3717 = vperm.xlu0 %3716, %v3634
        %v3718 = vpop.permute.xlu0 %3717
        %3719 = vset.pattern.permute.xlu0 0
        %3720 = vperm.xlu0 %3719, %v3635
        %v3721 = vpop.permute.xlu0 %3720
        %3722 = vset.pattern.permute.xlu0 0
        %3723 = vperm.xlu0 %3722, %v3636
        %v3724 = vpop.permute.xlu0 %3723
        %3725 = vset.pattern.permute.xlu0 0
        %3726 = vperm.xlu0 %3725, %v3637
        %v3727 = vpop.permute.xlu0 %3726
        %3728 = vset.pattern.permute.xlu0 0
        %3729 = vperm.xlu0 %3728, %v3638
        %v3730 = vpop.permute.xlu0 %3729
        %3731 = vset.pattern.permute.xlu0 0
        %3732 = vperm.xlu0 %3731, %v3639
        %v3733 = vpop.permute.xlu0 %3732
        %3734 = vset.pattern.permute.xlu0 0
        %3735 = vperm.xlu0 %3734, %v3640
        %v3736 = vpop.permute.xlu0 %3735
        %vm3737 = vcmp.eq.s32.totalorder %v3643, %v3209
        %vm3738 = vcmp.eq.s32.totalorder %v3643, %v3606
        %vm3739 = vcmp.eq.s32.totalorder %v3643, %v3607
        %vm3740 = vcmp.eq.s32.totalorder %v3643, %v3608
        %vm3741 = vcmp.eq.s32.totalorder %v3646, %v3209
        %vm3742 = vcmp.eq.s32.totalorder %v3646, %v3606
        %vm3743 = vcmp.eq.s32.totalorder %v3646, %v3607
        %vm3744 = vcmp.eq.s32.totalorder %v3646, %v3608
        %vm3745 = vcmp.eq.s32.totalorder %v3649, %v3209
        %vm3746 = vcmp.eq.s32.totalorder %v3649, %v3606
        %vm3747 = vcmp.eq.s32.totalorder %v3649, %v3607
        %vm3748 = vcmp.eq.s32.totalorder %v3649, %v3608
        %vm3749 = vcmp.eq.s32.totalorder %v3652, %v3209
        %vm3750 = vcmp.eq.s32.totalorder %v3652, %v3606
        %vm3751 = vcmp.eq.s32.totalorder %v3652, %v3607
        %vm3752 = vcmp.eq.s32.totalorder %v3652, %v3608
        %vm3753 = vcmp.eq.s32.totalorder %v3655, %v3209
        %vm3754 = vcmp.eq.s32.totalorder %v3655, %v3606
        %vm3755 = vcmp.eq.s32.totalorder %v3655, %v3607
        %vm3756 = vcmp.eq.s32.totalorder %v3655, %v3608
        %vm3757 = vcmp.eq.s32.totalorder %v3658, %v3209
        %vm3758 = vcmp.eq.s32.totalorder %v3658, %v3606
        %vm3759 = vcmp.eq.s32.totalorder %v3658, %v3607
        %vm3760 = vcmp.eq.s32.totalorder %v3658, %v3608
        %vm3761 = vcmp.eq.s32.totalorder %v3661, %v3209
        %vm3762 = vcmp.eq.s32.totalorder %v3661, %v3606
        %vm3763 = vcmp.eq.s32.totalorder %v3661, %v3607
        %vm3764 = vcmp.eq.s32.totalorder %v3661, %v3608
        %vm3765 = vcmp.eq.s32.totalorder %v3664, %v3209
        %vm3766 = vcmp.eq.s32.totalorder %v3664, %v3606
        %vm3767 = vcmp.eq.s32.totalorder %v3664, %v3607
        %vm3768 = vcmp.eq.s32.totalorder %v3664, %v3608
        %vm3769 = vcmp.eq.s32.totalorder %v3667, %v3209
        %vm3770 = vcmp.eq.s32.totalorder %v3667, %v3606
        %vm3771 = vcmp.eq.s32.totalorder %v3667, %v3607
        %vm3772 = vcmp.eq.s32.totalorder %v3667, %v3608
        %vm3773 = vcmp.eq.s32.totalorder %v3670, %v3209
        %vm3774 = vcmp.eq.s32.totalorder %v3670, %v3606
        %vm3775 = vcmp.eq.s32.totalorder %v3670, %v3607
        %vm3776 = vcmp.eq.s32.totalorder %v3670, %v3608
        %vm3777 = vcmp.eq.s32.totalorder %v3673, %v3209
        %vm3778 = vcmp.eq.s32.totalorder %v3673, %v3606
        %vm3779 = vcmp.eq.s32.totalorder %v3673, %v3607
        %vm3780 = vcmp.eq.s32.totalorder %v3673, %v3608
        %vm3781 = vcmp.eq.s32.totalorder %v3676, %v3209
        %vm3782 = vcmp.eq.s32.totalorder %v3676, %v3606
        %vm3783 = vcmp.eq.s32.totalorder %v3676, %v3607
        %vm3784 = vcmp.eq.s32.totalorder %v3676, %v3608
        %vm3785 = vcmp.eq.s32.totalorder %v3679, %v3209
        %vm3786 = vcmp.eq.s32.totalorder %v3679, %v3606
        %vm3787 = vcmp.eq.s32.totalorder %v3679, %v3607
        %vm3788 = vcmp.eq.s32.totalorder %v3679, %v3608
        %vm3789 = vcmp.eq.s32.totalorder %v3682, %v3209
        %vm3790 = vcmp.eq.s32.totalorder %v3682, %v3606
        %vm3791 = vcmp.eq.s32.totalorder %v3682, %v3607
        %vm3792 = vcmp.eq.s32.totalorder %v3682, %v3608
        %vm3793 = vcmp.eq.s32.totalorder %v3685, %v3209
        %vm3794 = vcmp.eq.s32.totalorder %v3685, %v3606
        %vm3795 = vcmp.eq.s32.totalorder %v3685, %v3607
        %vm3796 = vcmp.eq.s32.totalorder %v3685, %v3608
        %vm3797 = vcmp.eq.s32.totalorder %v3688, %v3209
        %vm3798 = vcmp.eq.s32.totalorder %v3688, %v3606
        %vm3799 = vcmp.eq.s32.totalorder %v3688, %v3607
        %vm3800 = vcmp.eq.s32.totalorder %v3688, %v3608
        %vm3801 = vcmp.eq.s32.totalorder %v3691, %v3209
        %vm3802 = vcmp.eq.s32.totalorder %v3691, %v3606
        %vm3803 = vcmp.eq.s32.totalorder %v3691, %v3607
        %vm3804 = vcmp.eq.s32.totalorder %v3691, %v3608
        %vm3805 = vcmp.eq.s32.totalorder %v3694, %v3209
        %vm3806 = vcmp.eq.s32.totalorder %v3694, %v3606
        %vm3807 = vcmp.eq.s32.totalorder %v3694, %v3607
        %vm3808 = vcmp.eq.s32.totalorder %v3694, %v3608
        %vm3809 = vcmp.eq.s32.totalorder %v3697, %v3209
        %vm3810 = vcmp.eq.s32.totalorder %v3697, %v3606
        %vm3811 = vcmp.eq.s32.totalorder %v3697, %v3607
        %vm3812 = vcmp.eq.s32.totalorder %v3697, %v3608
        %vm3813 = vcmp.eq.s32.totalorder %v3700, %v3209
        %vm3814 = vcmp.eq.s32.totalorder %v3700, %v3606
        %vm3815 = vcmp.eq.s32.totalorder %v3700, %v3607
        %vm3816 = vcmp.eq.s32.totalorder %v3700, %v3608
        %vm3817 = vcmp.eq.s32.totalorder %v3703, %v3209
        %vm3818 = vcmp.eq.s32.totalorder %v3703, %v3606
        %vm3819 = vcmp.eq.s32.totalorder %v3703, %v3607
        %vm3820 = vcmp.eq.s32.totalorder %v3703, %v3608
        %vm3821 = vcmp.eq.s32.totalorder %v3706, %v3209
        %vm3822 = vcmp.eq.s32.totalorder %v3706, %v3606
        %vm3823 = vcmp.eq.s32.totalorder %v3706, %v3607
        %vm3824 = vcmp.eq.s32.totalorder %v3706, %v3608
        %vm3825 = vcmp.eq.s32.totalorder %v3709, %v3209
        %vm3826 = vcmp.eq.s32.totalorder %v3709, %v3606
        %vm3827 = vcmp.eq.s32.totalorder %v3709, %v3607
        %vm3828 = vcmp.eq.s32.totalorder %v3709, %v3608
        %vm3829 = vcmp.eq.s32.totalorder %v3712, %v3209
        %vm3830 = vcmp.eq.s32.totalorder %v3712, %v3606
        %vm3831 = vcmp.eq.s32.totalorder %v3712, %v3607
        %vm3832 = vcmp.eq.s32.totalorder %v3712, %v3608
        %vm3833 = vcmp.eq.s32.totalorder %v3715, %v3209
        %vm3834 = vcmp.eq.s32.totalorder %v3715, %v3606
        %vm3835 = vcmp.eq.s32.totalorder %v3715, %v3607
        %vm3836 = vcmp.eq.s32.totalorder %v3715, %v3608
        %vm3837 = vcmp.eq.s32.totalorder %v3718, %v3209
        %vm3838 = vcmp.eq.s32.totalorder %v3718, %v3606
        %vm3839 = vcmp.eq.s32.totalorder %v3718, %v3607
        %vm3840 = vcmp.eq.s32.totalorder %v3718, %v3608
        %vm3841 = vcmp.eq.s32.totalorder %v3721, %v3209
        %vm3842 = vcmp.eq.s32.totalorder %v3721, %v3606
        %vm3843 = vcmp.eq.s32.totalorder %v3721, %v3607
        %vm3844 = vcmp.eq.s32.totalorder %v3721, %v3608
        %vm3845 = vcmp.eq.s32.totalorder %v3724, %v3209
        %vm3846 = vcmp.eq.s32.totalorder %v3724, %v3606
        %vm3847 = vcmp.eq.s32.totalorder %v3724, %v3607
        %vm3848 = vcmp.eq.s32.totalorder %v3724, %v3608
        %vm3849 = vcmp.eq.s32.totalorder %v3727, %v3209
        %vm3850 = vcmp.eq.s32.totalorder %v3727, %v3606
        %vm3851 = vcmp.eq.s32.totalorder %v3727, %v3607
        %vm3852 = vcmp.eq.s32.totalorder %v3727, %v3608
        %vm3853 = vcmp.eq.s32.totalorder %v3730, %v3209
        %vm3854 = vcmp.eq.s32.totalorder %v3730, %v3606
        %vm3855 = vcmp.eq.s32.totalorder %v3730, %v3607
        %vm3856 = vcmp.eq.s32.totalorder %v3730, %v3608
        %vm3857 = vcmp.eq.s32.totalorder %v3733, %v3209
        %vm3858 = vcmp.eq.s32.totalorder %v3733, %v3606
        %vm3859 = vcmp.eq.s32.totalorder %v3733, %v3607
        %vm3860 = vcmp.eq.s32.totalorder %v3733, %v3608
        %vm3861 = vcmp.eq.s32.totalorder %v3736, %v3209
        %vm3862 = vcmp.eq.s32.totalorder %v3736, %v3606
        %vm3863 = vcmp.eq.s32.totalorder %v3736, %v3607
        %vm3864 = vcmp.eq.s32.totalorder %v3736, %v3608
        %v3865 = vsel %vm3737, 1, 0
        %v3866 = vsel %vm3738, 1, 0
        %v3867 = vsel %vm3739, 1, 0
        %v3868 = vsel %vm3740, 1, 0
        %v3869 = vsel %vm3741, 1, 0
        %v3870 = vsel %vm3742, 1, 0
        %v3871 = vsel %vm3743, 1, 0
        %v3872 = vsel %vm3744, 1, 0
        %v3873 = vsel %vm3745, 1, 0
        %v3874 = vsel %vm3746, 1, 0
        %v3875 = vsel %vm3747, 1, 0
        %v3876 = vsel %vm3748, 1, 0
        %v3877 = vsel %vm3749, 1, 0
        %v3878 = vsel %vm3750, 1, 0
        %v3879 = vsel %vm3751, 1, 0
        %v3880 = vsel %vm3752, 1, 0
        %v3881 = vsel %vm3753, 1, 0
        %v3882 = vsel %vm3754, 1, 0
        %v3883 = vsel %vm3755, 1, 0
        %v3884 = vsel %vm3756, 1, 0
        %v3885 = vsel %vm3757, 1, 0
        %v3886 = vsel %vm3758, 1, 0
        %v3887 = vsel %vm3759, 1, 0
        %v3888 = vsel %vm3760, 1, 0
        %v3889 = vsel %vm3761, 1, 0
        %v3890 = vsel %vm3762, 1, 0
        %v3891 = vsel %vm3763, 1, 0
        %v3892 = vsel %vm3764, 1, 0
        %v3893 = vsel %vm3765, 1, 0
        %v3894 = vsel %vm3766, 1, 0
        %v3895 = vsel %vm3767, 1, 0
        %v3896 = vsel %vm3768, 1, 0
        %v3897 = vsel %vm3769, 1, 0
        %v3898 = vsel %vm3770, 1, 0
        %v3899 = vsel %vm3771, 1, 0
        %v3900 = vsel %vm3772, 1, 0
        %v3901 = vsel %vm3773, 1, 0
        %v3902 = vsel %vm3774, 1, 0
        %v3903 = vsel %vm3775, 1, 0
        %v3904 = vsel %vm3776, 1, 0
        %v3905 = vsel %vm3777, 1, 0
        %v3906 = vsel %vm3778, 1, 0
        %v3907 = vsel %vm3779, 1, 0
        %v3908 = vsel %vm3780, 1, 0
        %v3909 = vsel %vm3781, 1, 0
        %v3910 = vsel %vm3782, 1, 0
        %v3911 = vsel %vm3783, 1, 0
        %v3912 = vsel %vm3784, 1, 0
        %v3913 = vsel %vm3785, 1, 0
        %v3914 = vsel %vm3786, 1, 0
        %v3915 = vsel %vm3787, 1, 0
        %v3916 = vsel %vm3788, 1, 0
        %v3917 = vsel %vm3789, 1, 0
        %v3918 = vsel %vm3790, 1, 0
        %v3919 = vsel %vm3791, 1, 0
        %v3920 = vsel %vm3792, 1, 0
        %v3921 = vsel %vm3793, 1, 0
        %v3922 = vsel %vm3794, 1, 0
        %v3923 = vsel %vm3795, 1, 0
        %v3924 = vsel %vm3796, 1, 0
        %v3925 = vsel %vm3797, 1, 0
        %v3926 = vsel %vm3798, 1, 0
        %v3927 = vsel %vm3799, 1, 0
        %v3928 = vsel %vm3800, 1, 0
        %v3929 = vsel %vm3801, 1, 0
        %v3930 = vsel %vm3802, 1, 0
        %v3931 = vsel %vm3803, 1, 0
        %v3932 = vsel %vm3804, 1, 0
        %v3933 = vsel %vm3805, 1, 0
        %v3934 = vsel %vm3806, 1, 0
        %v3935 = vsel %vm3807, 1, 0
        %v3936 = vsel %vm3808, 1, 0
        %v3937 = vsel %vm3809, 1, 0
        %v3938 = vsel %vm3810, 1, 0
        %v3939 = vsel %vm3811, 1, 0
        %v3940 = vsel %vm3812, 1, 0
        %v3941 = vsel %vm3813, 1, 0
        %v3942 = vsel %vm3814, 1, 0
        %v3943 = vsel %vm3815, 1, 0
        %v3944 = vsel %vm3816, 1, 0
        %v3945 = vsel %vm3817, 1, 0
        %v3946 = vsel %vm3818, 1, 0
        %v3947 = vsel %vm3819, 1, 0
        %v3948 = vsel %vm3820, 1, 0
        %v3949 = vsel %vm3821, 1, 0
        %v3950 = vsel %vm3822, 1, 0
        %v3951 = vsel %vm3823, 1, 0
        %v3952 = vsel %vm3824, 1, 0
        %v3953 = vsel %vm3825, 1, 0
        %v3954 = vsel %vm3826, 1, 0
        %v3955 = vsel %vm3827, 1, 0
        %v3956 = vsel %vm3828, 1, 0
        %v3957 = vsel %vm3829, 1, 0
        %v3958 = vsel %vm3830, 1, 0
        %v3959 = vsel %vm3831, 1, 0
        %v3960 = vsel %vm3832, 1, 0
        %v3961 = vsel %vm3833, 1, 0
        %v3962 = vsel %vm3834, 1, 0
        %v3963 = vsel %vm3835, 1, 0
        %v3964 = vsel %vm3836, 1, 0
        %v3965 = vsel %vm3837, 1, 0
        %v3966 = vsel %vm3838, 1, 0
        %v3967 = vsel %vm3839, 1, 0
        %v3968 = vsel %vm3840, 1, 0
        %v3969 = vsel %vm3841, 1, 0
        %v3970 = vsel %vm3842, 1, 0
        %v3971 = vsel %vm3843, 1, 0
        %v3972 = vsel %vm3844, 1, 0
        %v3973 = vsel %vm3845, 1, 0
        %v3974 = vsel %vm3846, 1, 0
        %v3975 = vsel %vm3847, 1, 0
        %v3976 = vsel %vm3848, 1, 0
        %v3977 = vsel %vm3849, 1, 0
        %v3978 = vsel %vm3850, 1, 0
        %v3979 = vsel %vm3851, 1, 0
        %v3980 = vsel %vm3852, 1, 0
        %v3981 = vsel %vm3853, 1, 0
        %v3982 = vsel %vm3854, 1, 0
        %v3983 = vsel %vm3855, 1, 0
        %v3984 = vsel %vm3856, 1, 0
        %v3985 = vsel %vm3857, 1, 0
        %v3986 = vsel %vm3858, 1, 0
        %v3987 = vsel %vm3859, 1, 0
        %v3988 = vsel %vm3860, 1, 0
        %v3989 = vsel %vm3861, 1, 0
        %v3990 = vsel %vm3862, 1, 0
        %v3991 = vsel %vm3863, 1, 0
        %v3992 = vsel %vm3864, 1, 0
        %v3993 = vcvt.s32.f32 %v3865
        %v3994 = vcvt.s32.f32 %v3866
        %v3995 = vcvt.s32.f32 %v3867
        %v3996 = vcvt.s32.f32 %v3868
        %v3997 = vcvt.s32.f32 %v3869
        %v3998 = vcvt.s32.f32 %v3870
        %v3999 = vcvt.s32.f32 %v3871
        %v4000 = vcvt.s32.f32 %v3872
        %v4001 = vcvt.s32.f32 %v3873
        %v4002 = vcvt.s32.f32 %v3874
        %v4003 = vcvt.s32.f32 %v3875
        %v4004 = vcvt.s32.f32 %v3876
        %v4005 = vcvt.s32.f32 %v3877
        %v4006 = vcvt.s32.f32 %v3878
        %v4007 = vcvt.s32.f32 %v3879
        %v4008 = vcvt.s32.f32 %v3880
        %v4009 = vcvt.s32.f32 %v3881
        %v4010 = vcvt.s32.f32 %v3882
        %v4011 = vcvt.s32.f32 %v3883
        %v4012 = vcvt.s32.f32 %v3884
        %v4013 = vcvt.s32.f32 %v3885
        %v4014 = vcvt.s32.f32 %v3886
        %v4015 = vcvt.s32.f32 %v3887
        %v4016 = vcvt.s32.f32 %v3888
        %v4017 = vcvt.s32.f32 %v3889
        %v4018 = vcvt.s32.f32 %v3890
        %v4019 = vcvt.s32.f32 %v3891
        %v4020 = vcvt.s32.f32 %v3892
        %v4021 = vcvt.s32.f32 %v3893
        %v4022 = vcvt.s32.f32 %v3894
        %v4023 = vcvt.s32.f32 %v3895
        %v4024 = vcvt.s32.f32 %v3896
        %v4025 = vcvt.s32.f32 %v3897
        %v4026 = vcvt.s32.f32 %v3898
        %v4027 = vcvt.s32.f32 %v3899
        %v4028 = vcvt.s32.f32 %v3900
        %v4029 = vcvt.s32.f32 %v3901
        %v4030 = vcvt.s32.f32 %v3902
        %v4031 = vcvt.s32.f32 %v3903
        %v4032 = vcvt.s32.f32 %v3904
        %v4033 = vcvt.s32.f32 %v3905
        %v4034 = vcvt.s32.f32 %v3906
        %v4035 = vcvt.s32.f32 %v3907
        %v4036 = vcvt.s32.f32 %v3908
        %v4037 = vcvt.s32.f32 %v3909
        %v4038 = vcvt.s32.f32 %v3910
        %v4039 = vcvt.s32.f32 %v3911
        %v4040 = vcvt.s32.f32 %v3912
        %v4041 = vcvt.s32.f32 %v3913
        %v4042 = vcvt.s32.f32 %v3914
        %v4043 = vcvt.s32.f32 %v3915
        %v4044 = vcvt.s32.f32 %v3916
        %v4045 = vcvt.s32.f32 %v3917
        %v4046 = vcvt.s32.f32 %v3918
        %v4047 = vcvt.s32.f32 %v3919
        %v4048 = vcvt.s32.f32 %v3920
        %v4049 = vcvt.s32.f32 %v3921
        %v4050 = vcvt.s32.f32 %v3922
        %v4051 = vcvt.s32.f32 %v3923
        %v4052 = vcvt.s32.f32 %v3924
        %v4053 = vcvt.s32.f32 %v3925
        %v4054 = vcvt.s32.f32 %v3926
        %v4055 = vcvt.s32.f32 %v3927
        %v4056 = vcvt.s32.f32 %v3928
        %v4057 = vcvt.s32.f32 %v3929
        %v4058 = vcvt.s32.f32 %v3930
        %v4059 = vcvt.s32.f32 %v3931
        %v4060 = vcvt.s32.f32 %v3932
        %v4061 = vcvt.s32.f32 %v3933
        %v4062 = vcvt.s32.f32 %v3934
        %v4063 = vcvt.s32.f32 %v3935
        %v4064 = vcvt.s32.f32 %v3936
        %v4065 = vcvt.s32.f32 %v3937
        %v4066 = vcvt.s32.f32 %v3938
        %v4067 = vcvt.s32.f32 %v3939
        %v4068 = vcvt.s32.f32 %v3940
        %v4069 = vcvt.s32.f32 %v3941
        %v4070 = vcvt.s32.f32 %v3942
        %v4071 = vcvt.s32.f32 %v3943
        %v4072 = vcvt.s32.f32 %v3944
        %v4073 = vcvt.s32.f32 %v3945
        %v4074 = vcvt.s32.f32 %v3946
        %v4075 = vcvt.s32.f32 %v3947
        %v4076 = vcvt.s32.f32 %v3948
        %v4077 = vcvt.s32.f32 %v3949
        %v4078 = vcvt.s32.f32 %v3950
        %v4079 = vcvt.s32.f32 %v3951
        %v4080 = vcvt.s32.f32 %v3952
        %v4081 = vcvt.s32.f32 %v3953
        %v4082 = vcvt.s32.f32 %v3954
        %v4083 = vcvt.s32.f32 %v3955
        %v4084 = vcvt.s32.f32 %v3956
        %v4085 = vcvt.s32.f32 %v3957
        %v4086 = vcvt.s32.f32 %v3958
        %v4087 = vcvt.s32.f32 %v3959
        %v4088 = vcvt.s32.f32 %v3960
        %v4089 = vcvt.s32.f32 %v3961
        %v4090 = vcvt.s32.f32 %v3962
        %v4091 = vcvt.s32.f32 %v3963
        %v4092 = vcvt.s32.f32 %v3964
        %v4093 = vcvt.s32.f32 %v3965
        %v4094 = vcvt.s32.f32 %v3966
        %v4095 = vcvt.s32.f32 %v3967
        %v4096 = vcvt.s32.f32 %v3968
        %v4097 = vcvt.s32.f32 %v3969
        %v4098 = vcvt.s32.f32 %v3970
        %v4099 = vcvt.s32.f32 %v3971
        %v4100 = vcvt.s32.f32 %v3972
        %v4101 = vcvt.s32.f32 %v3973
        %v4102 = vcvt.s32.f32 %v3974
        %v4103 = vcvt.s32.f32 %v3975
        %v4104 = vcvt.s32.f32 %v3976
        %v4105 = vcvt.s32.f32 %v3977
        %v4106 = vcvt.s32.f32 %v3978
        %v4107 = vcvt.s32.f32 %v3979
        %v4108 = vcvt.s32.f32 %v3980
        %v4109 = vcvt.s32.f32 %v3981
        %v4110 = vcvt.s32.f32 %v3982
        %v4111 = vcvt.s32.f32 %v3983
        %v4112 = vcvt.s32.f32 %v3984
        %v4113 = vcvt.s32.f32 %v3985
        %v4114 = vcvt.s32.f32 %v3986
        %v4115 = vcvt.s32.f32 %v3987
        %v4116 = vcvt.s32.f32 %v3988
        %v4117 = vcvt.s32.f32 %v3989
        %v4118 = vcvt.s32.f32 %v3990
        %v4119 = vcvt.s32.f32 %v3991
        %v4120 = vcvt.s32.f32 %v3992
        %v4122 = vcombine.high %v3605, %v3605
        %v4124 = vunpack.c.l.s4 1966171168
        %v4125 = vunpack.c.0.s8 %v4124
        %v4126 = vlaneseq
        %v4127 = vshrl.u32 %v4126, 7
        %v4128 = vsub.s32 %v4125, %v4127
        %v4129 = vrot.slane %v3605, %v4128
        %v4131 = vunpack.c.l.s4 1966171168
        %v4132 = vunpack.c.0.s8 %v4131
        %v4133 = vlaneseq
        %v4134 = vshrl.u32 %v4133, 7
        %v4135 = vsub.s32 %v4132, %v4134
        %v4136 = vrot.slane %v4122, %v4135
        %v4137 = vcombine.high %v4129, %v4129
        %v4138 = vcombine.high %v4136, %v4136
        %v4140 = vunpack.c.l.s4 1966171168
        %v4141 = vunpack.c.0.s8 %v4140
        %v4142 = vlaneseq
        %v4143 = vshrl.u32 %v4142, 7
        %v4144 = vsub.s32 %v4141, %v4143
        %v4145 = vrot.slane %v4129, %v4144
        %v4147 = vunpack.c.l.s4 1966171168
        %v4148 = vunpack.c.0.s8 %v4147
        %v4149 = vlaneseq
        %v4150 = vshrl.u32 %v4149, 7
        %v4151 = vsub.s32 %v4148, %v4150
        %v4152 = vrot.slane %v4136, %v4151
        %v4154 = vunpack.c.l.s4 1966171168
        %v4155 = vunpack.c.0.s8 %v4154
        %v4156 = vlaneseq
        %v4157 = vshrl.u32 %v4156, 7
        %v4158 = vsub.s32 %v4155, %v4157
        %v4159 = vrot.slane %v4137, %v4158
        %v4161 = vunpack.c.l.s4 1966171168
        %v4162 = vunpack.c.0.s8 %v4161
        %v4163 = vlaneseq
        %v4164 = vshrl.u32 %v4163, 7
        %v4165 = vsub.s32 %v4162, %v4164
        %v4166 = vrot.slane %v4138, %v4165
        %v4167 = vcombine.high %v4145, %v4145
        %v4168 = vcombine.high %v4152, %v4152
        %v4169 = vcombine.high %v4159, %v4159
        %v4170 = vcombine.high %v4166, %v4166
        %v4171 = vsel %vm1696, %v4145, 0
        %4173 = vmatprep.subr.mxu0 %v3994
        %4174 = vmatpush1.msra.mxu0 %v3993
        %4175 = vmatprep.subr.mxu0 %v3998
        %4176 = vmatpush1.msra.mxu0 %v3997
        %4177 = vmatprep.subr.mxu0 %v4002
        %4178 = vmatpush1.msra.mxu0 %v4001
        %4179 = vmatprep.subr.mxu0 %v4006
        %4180 = vmatpush1.msra.mxu0 %v4005
        %4181 = vmatprep.subr.mxu0 0.0
        %4182 = vmatpush1.msra.mxu0 0.0
        %4183 = vmatprep.subr.mxu0 0.0
        %4184 = vmatpush1.msra.mxu0 0.0
        %4185 = vmatprep.subr.mxu0 0.0
        %4186 = vmatpush1.msra.mxu0 0.0
        %4187 = vmatprep.subr.mxu0 0.0
        %4188 = vmatpush1.msra.mxu0 0.0
        %4189 = vmatprep.subr.mxu0 0.0
        %4190 = vmatpush1.msra.mxu0 0.0
        %4191 = vmatprep.subr.mxu0 0.0
        %4192 = vmatpush1.msra.mxu0 0.0
        %4193 = vmatprep.subr.mxu0 0.0
        %4194 = vmatpush1.msra.mxu0 0.0
        %4195 = vmatprep.subr.mxu0 0.0
        %4196 = vmatpush1.msra.mxu0 0.0
        %4197 = vmatprep.subr.mxu0 0.0
        %4198 = vmatpush1.msra.mxu0 0.0
        %4199 = vmatprep.subr.mxu0 0.0
        %4200 = vmatpush1.msra.mxu0 0.0
        %4201 = vmatprep.subr.mxu0 0.0
        %4202 = vmatpush1.msra.mxu0 0.0
        %4203 = vmatprep.subr.mxu0 0.0
        %4204 = vmatpush1.msra.mxu0 0.0
        %4205 = vmatprep.subr.mxu0 0.0
        %4206 = vmatpush1.msra.mxu0 0.0
        %4207 = vmatprep.subr.mxu0 0.0
        %4208 = vmatpush1.msra.mxu0 0.0
        %4209 = vmatprep.subr.mxu0 0.0
        %4210 = vmatpush1.msra.mxu0 0.0
        %4211 = vmatprep.subr.mxu0 0.0
        %4212 = vmatpush1.msra.mxu0 0.0
        %4213 = vmatprep.subr.mxu0 0.0
        %4214 = vmatpush1.msra.mxu0 0.0
        %4215 = vmatprep.subr.mxu0 0.0
        %4216 = vmatpush1.msra.mxu0 0.0
        %4217 = vmatprep.subr.mxu0 0.0
        %4218 = vmatpush1.msra.mxu0 0.0
        %4219 = vmatprep.subr.mxu0 0.0
        %4220 = vmatpush1.msra.mxu0 0.0
        %4221 = vmatprep.subr.mxu0 0.0
        %4222 = vmatpush1.msra.mxu0 0.0
        %4223 = vmatprep.subr.mxu0 0.0
        %4224 = vmatpush1.msra.mxu0 0.0
        %4225 = vmatprep.subr.mxu0 0.0
        %4226 = vmatpush1.msra.mxu0 0.0
        %4227 = vmatprep.subr.mxu0 0.0
        %4228 = vmatpush1.msra.mxu0 0.0
        %4229 = vmatprep.subr.mxu0 0.0
        %4230 = vmatpush1.msra.mxu0 0.0
        %4231 = vmatprep.subr.mxu0 0.0
        %4232 = vmatpush1.msra.mxu0 0.0
        %4233 = vmatprep.subr.mxu0 0.0
        %4234 = vmatpush1.msra.mxu0 0.0
        %4235 = vmatprep.subr.mxu0 0.0
        %4236 = vmatpush1.msra.mxu0 0.0
        %4237 = vmatprep.mubr.f32.mxu0 0.0
        %4238 = vmatmul.mubr.f32.gmra.mrb[0].mxu0 %v4171
        %v4239 = vpop.f32.mrb[0].mxu0
        %v4240 = vadd.f32 0.0, %v4239
        %v4241 = vpop.f32.mrb[0].mxu0
        %v4242 = vadd.f32 0.0, %v4241
        %4243 = vdwg.mxu0
        %4244 = vmatprep.subr.mxu0 %v3996
        %4245 = vmatpush1.msra.mxu0 %v3995
        %4246 = vmatprep.subr.mxu0 %v4000
        %4247 = vmatpush1.msra.mxu0 %v3999
        %4248 = vmatprep.subr.mxu0 %v4004
        %4249 = vmatpush1.msra.mxu0 %v4003
        %4250 = vmatprep.subr.mxu0 %v4008
        %4251 = vmatpush1.msra.mxu0 %v4007
        %4252 = vmatprep.subr.mxu0 0.0
        %4253 = vmatpush1.msra.mxu0 0.0
        %4254 = vmatprep.subr.mxu0 0.0
        %4255 = vmatpush1.msra.mxu0 0.0
        %4256 = vmatprep.subr.mxu0 0.0
        %4257 = vmatpush1.msra.mxu0 0.0
        %4258 = vmatprep.subr.mxu0 0.0
        %4259 = vmatpush1.msra.mxu0 0.0
        %4260 = vmatprep.subr.mxu0 0.0
        %4261 = vmatpush1.msra.mxu0 0.0
        %4262 = vmatprep.subr.mxu0 0.0
        %4263 = vmatpush1.msra.mxu0 0.0
        %4264 = vmatprep.subr.mxu0 0.0
        %4265 = vmatpush1.msra.mxu0 0.0
        %4266 = vmatprep.subr.mxu0 0.0
        %4267 = vmatpush1.msra.mxu0 0.0
        %4268 = vmatprep.subr.mxu0 0.0
        %4269 = vmatpush1.msra.mxu0 0.0
        %4270 = vmatprep.subr.mxu0 0.0
        %4271 = vmatpush1.msra.mxu0 0.0
        %4272 = vmatprep.subr.mxu0 0.0
        %4273 = vmatpush1.msra.mxu0 0.0
        %4274 = vmatprep.subr.mxu0 0.0
        %4275 = vmatpush1.msra.mxu0 0.0
        %4276 = vmatprep.subr.mxu0 0.0
        %4277 = vmatpush1.msra.mxu0 0.0
        %4278 = vmatprep.subr.mxu0 0.0
        %4279 = vmatpush1.msra.mxu0 0.0
        %4280 = vmatprep.subr.mxu0 0.0
        %4281 = vmatpush1.msra.mxu0 0.0
        %4282 = vmatprep.subr.mxu0 0.0
        %4283 = vmatpush1.msra.mxu0 0.0
        %4284 = vmatprep.subr.mxu0 0.0
        %4285 = vmatpush1.msra.mxu0 0.0
        %4286 = vmatprep.subr.mxu0 0.0
        %4287 = vmatpush1.msra.mxu0 0.0
        %4288 = vmatprep.subr.mxu0 0.0
        %4289 = vmatpush1.msra.mxu0 0.0
        %4290 = vmatprep.subr.mxu0 0.0
        %4291 = vmatpush1.msra.mxu0 0.0
        %4292 = vmatprep.subr.mxu0 0.0
        %4293 = vmatpush1.msra.mxu0 0.0
        %4294 = vmatprep.subr.mxu0 0.0
        %4295 = vmatpush1.msra.mxu0 0.0
        %4296 = vmatprep.subr.mxu0 0.0
        %4297 = vmatpush1.msra.mxu0 0.0
        %4298 = vmatprep.subr.mxu0 0.0
        %4299 = vmatpush1.msra.mxu0 0.0
        %4300 = vmatprep.subr.mxu0 0.0
        %4301 = vmatpush1.msra.mxu0 0.0
        %4302 = vmatprep.subr.mxu0 0.0
        %4303 = vmatpush1.msra.mxu0 0.0
        %4304 = vmatprep.subr.mxu0 0.0
        %4305 = vmatpush1.msra.mxu0 0.0
        %4306 = vmatprep.subr.mxu0 0.0
        %4307 = vmatpush1.msra.mxu0 0.0
        %4308 = vmatprep.mubr.f32.mxu0 0.0
        %4309 = vmatmul.mubr.f32.gmra.mrb[0].mxu0 %v4171
        %v4310 = vpop.f32.mrb[0].mxu0
        %v4311 = vadd.f32 0.0, %v4310
        %v4312 = vpop.f32.mrb[0].mxu0
        %v4313 = vadd.f32 0.0, %v4312
        %4314 = vdwg.mxu0
        %v4315 = vsel %vm1696, %v4159, 0
        %4317 = vmatprep.subr.mxu0 %v4010
        %4318 = vmatpush1.msra.mxu0 %v4009
        %4319 = vmatprep.subr.mxu0 %v4014
        %4320 = vmatpush1.msra.mxu0 %v4013
        %4321 = vmatprep.subr.mxu0 %v4018
        %4322 = vmatpush1.msra.mxu0 %v4017
        %4323 = vmatprep.subr.mxu0 %v4022
        %4324 = vmatpush1.msra.mxu0 %v4021
        %4325 = vmatprep.subr.mxu0 0.0
        %4326 = vmatpush1.msra.mxu0 0.0
        %4327 = vmatprep.subr.mxu0 0.0
        %4328 = vmatpush1.msra.mxu0 0.0
        %4329 = vmatprep.subr.mxu0 0.0
        %4330 = vmatpush1.msra.mxu0 0.0
        %4331 = vmatprep.subr.mxu0 0.0
        %4332 = vmatpush1.msra.mxu0 0.0
        %4333 = vmatprep.subr.mxu0 0.0
        %4334 = vmatpush1.msra.mxu0 0.0
        %4335 = vmatprep.subr.mxu0 0.0
        %4336 = vmatpush1.msra.mxu0 0.0
        %4337 = vmatprep.subr.mxu0 0.0
        %4338 = vmatpush1.msra.mxu0 0.0
        %4339 = vmatprep.subr.mxu0 0.0
        %4340 = vmatpush1.msra.mxu0 0.0
        %4341 = vmatprep.subr.mxu0 0.0
        %4342 = vmatpush1.msra.mxu0 0.0
        %4343 = vmatprep.subr.mxu0 0.0
        %4344 = vmatpush1.msra.mxu0 0.0
        %4345 = vmatprep.subr.mxu0 0.0
        %4346 = vmatpush1.msra.mxu0 0.0
        %4347 = vmatprep.subr.mxu0 0.0
        %4348 = vmatpush1.msra.mxu0 0.0
        %4349 = vmatprep.subr.mxu0 0.0
        %4350 = vmatpush1.msra.mxu0 0.0
        %4351 = vmatprep.subr.mxu0 0.0
        %4352 = vmatpush1.msra.mxu0 0.0
        %4353 = vmatprep.subr.mxu0 0.0
        %4354 = vmatpush1.msra.mxu0 0.0
        %4355 = vmatprep.subr.mxu0 0.0
        %4356 = vmatpush1.msra.mxu0 0.0
        %4357 = vmatprep.subr.mxu0 0.0
        %4358 = vmatpush1.msra.mxu0 0.0
        %4359 = vmatprep.subr.mxu0 0.0
        %4360 = vmatpush1.msra.mxu0 0.0
        %4361 = vmatprep.subr.mxu0 0.0
        %4362 = vmatpush1.msra.mxu0 0.0
        %4363 = vmatprep.subr.mxu0 0.0
        %4364 = vmatpush1.msra.mxu0 0.0
        %4365 = vmatprep.subr.mxu0 0.0
        %4366 = vmatpush1.msra.mxu0 0.0
        %4367 = vmatprep.subr.mxu0 0.0
        %4368 = vmatpush1.msra.mxu0 0.0
        %4369 = vmatprep.subr.mxu0 0.0
        %4370 = vmatpush1.msra.mxu0 0.0
        %4371 = vmatprep.subr.mxu0 0.0
        %4372 = vmatpush1.msra.mxu0 0.0
        %4373 = vmatprep.subr.mxu0 0.0
        %4374 = vmatpush1.msra.mxu0 0.0
        %4375 = vmatprep.subr.mxu0 0.0
        %4376 = vmatpush1.msra.mxu0 0.0
        %4377 = vmatprep.subr.mxu0 0.0
        %4378 = vmatpush1.msra.mxu0 0.0
        %4379 = vmatprep.subr.mxu0 0.0
        %4380 = vmatpush1.msra.mxu0 0.0
        %4381 = vmatprep.mubr.f32.mxu0 0.0
        %4382 = vmatmul.mubr.f32.gmra.mrb[0].mxu0 %v4315
        %v4383 = vpop.f32.mrb[0].mxu0
        %v4384 = vadd.f32 0.0, %v4383
        %v4385 = vpop.f32.mrb[0].mxu0
        %v4386 = vadd.f32 0.0, %v4385
        %4387 = vdwg.mxu0
        %4388 = vmatprep.subr.mxu0 %v4012
        %4389 = vmatpush1.msra.mxu0 %v4011
        %4390 = vmatprep.subr.mxu0 %v4016
        %4391 = vmatpush1.msra.mxu0 %v4015
        %4392 = vmatprep.subr.mxu0 %v4020
        %4393 = vmatpush1.msra.mxu0 %v4019
        %4394 = vmatprep.subr.mxu0 %v4024
        %4395 = vmatpush1.msra.mxu0 %v4023
        %4396 = vmatprep.subr.mxu0 0.0
        %4397 = vmatpush1.msra.mxu0 0.0
        %4398 = vmatprep.subr.mxu0 0.0
        %4399 = vmatpush1.msra.mxu0 0.0
        %4400 = vmatprep.subr.mxu0 0.0
        %4401 = vmatpush1.msra.mxu0 0.0
        %4402 = vmatprep.subr.mxu0 0.0
        %4403 = vmatpush1.msra.mxu0 0.0
        %4404 = vmatprep.subr.mxu0 0.0
        %4405 = vmatpush1.msra.mxu0 0.0
        %4406 = vmatprep.subr.mxu0 0.0
        %4407 = vmatpush1.msra.mxu0 0.0
        %4408 = vmatprep.subr.mxu0 0.0
        %4409 = vmatpush1.msra.mxu0 0.0
        %4410 = vmatprep.subr.mxu0 0.0
        %4411 = vmatpush1.msra.mxu0 0.0
        %4412 = vmatprep.subr.mxu0 0.0
        %4413 = vmatpush1.msra.mxu0 0.0
        %4414 = vmatprep.subr.mxu0 0.0
        %4415 = vmatpush1.msra.mxu0 0.0
        %4416 = vmatprep.subr.mxu0 0.0
        %4417 = vmatpush1.msra.mxu0 0.0
        %4418 = vmatprep.subr.mxu0 0.0
        %4419 = vmatpush1.msra.mxu0 0.0
        %4420 = vmatprep.subr.mxu0 0.0
        %4421 = vmatpush1.msra.mxu0 0.0
        %4422 = vmatprep.subr.mxu0 0.0
        %4423 = vmatpush1.msra.mxu0 0.0
        %4424 = vmatprep.subr.mxu0 0.0
        %4425 = vmatpush1.msra.mxu0 0.0
        %4426 = vmatprep.subr.mxu0 0.0
        %4427 = vmatpush1.msra.mxu0 0.0
        %4428 = vmatprep.subr.mxu0 0.0
        %4429 = vmatpush1.msra.mxu0 0.0
        %4430 = vmatprep.subr.mxu0 0.0
        %4431 = vmatpush1.msra.mxu0 0.0
        %4432 = vmatprep.subr.mxu0 0.0
        %4433 = vmatpush1.msra.mxu0 0.0
        %4434 = vmatprep.subr.mxu0 0.0
        %4435 = vmatpush1.msra.mxu0 0.0
        %4436 = vmatprep.subr.mxu0 0.0
        %4437 = vmatpush1.msra.mxu0 0.0
        %4438 = vmatprep.subr.mxu0 0.0
        %4439 = vmatpush1.msra.mxu0 0.0
        %4440 = vmatprep.subr.mxu0 0.0
        %4441 = vmatpush1.msra.mxu0 0.0
        %4442 = vmatprep.subr.mxu0 0.0
        %4443 = vmatpush1.msra.mxu0 0.0
        %4444 = vmatprep.subr.mxu0 0.0
        %4445 = vmatpush1.msra.mxu0 0.0
        %4446 = vmatprep.subr.mxu0 0.0
        %4447 = vmatpush1.msra.mxu0 0.0
        %4448 = vmatprep.subr.mxu0 0.0
        %4449 = vmatpush1.msra.mxu0 0.0
        %4450 = vmatprep.subr.mxu0 0.0
        %4451 = vmatpush1.msra.mxu0 0.0
        %4452 = vmatprep.mubr.f32.mxu0 0.0
        %4453 = vmatmul.mubr.f32.gmra.mrb[0].mxu0 %v4315
        %v4454 = vpop.f32.mrb[0].mxu0
        %v4455 = vadd.f32 0.0, %v4454
        %v4456 = vpop.f32.mrb[0].mxu0
        %v4457 = vadd.f32 0.0, %v4456
        %4458 = vdwg.mxu0
        %v4459 = vsel %vm1696, %v4167, 0
        %4461 = vmatprep.subr.mxu0 %v4026
        %4462 = vmatpush1.msra.mxu0 %v4025
        %4463 = vmatprep.subr.mxu0 %v4030
        %4464 = vmatpush1.msra.mxu0 %v4029
        %4465 = vmatprep.subr.mxu0 %v4034
        %4466 = vmatpush1.msra.mxu0 %v4033
        %4467 = vmatprep.subr.mxu0 %v4038
        %4468 = vmatpush1.msra.mxu0 %v4037
        %4469 = vmatprep.subr.mxu0 0.0
        %4470 = vmatpush1.msra.mxu0 0.0
        %4471 = vmatprep.subr.mxu0 0.0
        %4472 = vmatpush1.msra.mxu0 0.0
        %4473 = vmatprep.subr.mxu0 0.0
        %4474 = vmatpush1.msra.mxu0 0.0
        %4475 = vmatprep.subr.mxu0 0.0
        %4476 = vmatpush1.msra.mxu0 0.0
        %4477 = vmatprep.subr.mxu0 0.0
        %4478 = vmatpush1.msra.mxu0 0.0
        %4479 = vmatprep.subr.mxu0 0.0
        %4480 = vmatpush1.msra.mxu0 0.0
        %4481 = vmatprep.subr.mxu0 0.0
        %4482 = vmatpush1.msra.mxu0 0.0
        %4483 = vmatprep.subr.mxu0 0.0
        %4484 = vmatpush1.msra.mxu0 0.0
        %4485 = vmatprep.subr.mxu0 0.0
        %4486 = vmatpush1.msra.mxu0 0.0
        %4487 = vmatprep.subr.mxu0 0.0
        %4488 = vmatpush1.msra.mxu0 0.0
        %4489 = vmatprep.subr.mxu0 0.0
        %4490 = vmatpush1.msra.mxu0 0.0
        %4491 = vmatprep.subr.mxu0 0.0
        %4492 = vmatpush1.msra.mxu0 0.0
        %4493 = vmatprep.subr.mxu0 0.0
        %4494 = vmatpush1.msra.mxu0 0.0
        %4495 = vmatprep.subr.mxu0 0.0
        %4496 = vmatpush1.msra.mxu0 0.0
        %4497 = vmatprep.subr.mxu0 0.0
        %4498 = vmatpush1.msra.mxu0 0.0
        %4499 = vmatprep.subr.mxu0 0.0
        %4500 = vmatpush1.msra.mxu0 0.0
        %4501 = vmatprep.subr.mxu0 0.0
        %4502 = vmatpush1.msra.mxu0 0.0
        %4503 = vmatprep.subr.mxu0 0.0
        %4504 = vmatpush1.msra.mxu0 0.0
        %4505 = vmatprep.subr.mxu0 0.0
        %4506 = vmatpush1.msra.mxu0 0.0
        %4507 = vmatprep.subr.mxu0 0.0
        %4508 = vmatpush1.msra.mxu0 0.0
        %4509 = vmatprep.subr.mxu0 0.0
        %4510 = vmatpush1.msra.mxu0 0.0
        %4511 = vmatprep.subr.mxu0 0.0
        %4512 = vmatpush1.msra.mxu0 0.0
        %4513 = vmatprep.subr.mxu0 0.0
        %4514 = vmatpush1.msra.mxu0 0.0
        %4515 = vmatprep.subr.mxu0 0.0
        %4516 = vmatpush1.msra.mxu0 0.0
        %4517 = vmatprep.subr.mxu0 0.0
        %4518 = vmatpush1.msra.mxu0 0.0
        %4519 = vmatprep.subr.mxu0 0.0
        %4520 = vmatpush1.msra.mxu0 0.0
        %4521 = vmatprep.subr.mxu0 0.0
        %4522 = vmatpush1.msra.mxu0 0.0
        %4523 = vmatprep.subr.mxu0 0.0
        %4524 = vmatpush1.msra.mxu0 0.0
        %4525 = vmatprep.mubr.f32.mxu0 0.0
        %4526 = vmatmul.mubr.f32.gmra.mrb[0].mxu0 %v4459
        %v4527 = vpop.f32.mrb[0].mxu0
        %v4528 = vadd.f32 0.0, %v4527
        %v4529 = vpop.f32.mrb[0].mxu0
        %v4530 = vadd.f32 0.0, %v4529
        %4531 = vdwg.mxu0
        %4532 = vmatprep.subr.mxu0 %v4028
        %4533 = vmatpush1.msra.mxu0 %v4027
        %4534 = vmatprep.subr.mxu0 %v4032
        %4535 = vmatpush1.msra.mxu0 %v4031
        %4536 = vmatprep.subr.mxu0 %v4036
        %4537 = vmatpush1.msra.mxu0 %v4035
        %4538 = vmatprep.subr.mxu0 %v4040
        %4539 = vmatpush1.msra.mxu0 %v4039
        %4540 = vmatprep.subr.mxu0 0.0
        %4541 = vmatpush1.msra.mxu0 0.0
        %4542 = vmatprep.subr.mxu0 0.0
        %4543 = vmatpush1.msra.mxu0 0.0
        %4544 = vmatprep.subr.mxu0 0.0
        %4545 = vmatpush1.msra.mxu0 0.0
        %4546 = vmatprep.subr.mxu0 0.0
        %4547 = vmatpush1.msra.mxu0 0.0
        %4548 = vmatprep.subr.mxu0 0.0
        %4549 = vmatpush1.msra.mxu0 0.0
        %4550 = vmatprep.subr.mxu0 0.0
        %4551 = vmatpush1.msra.mxu0 0.0
        %4552 = vmatprep.subr.mxu0 0.0
        %4553 = vmatpush1.msra.mxu0 0.0
        %4554 = vmatprep.subr.mxu0 0.0
        %4555 = vmatpush1.msra.mxu0 0.0
        %4556 = vmatprep.subr.mxu0 0.0
        %4557 = vmatpush1.msra.mxu0 0.0
        %4558 = vmatprep.subr.mxu0 0.0
        %4559 = vmatpush1.msra.mxu0 0.0
        %4560 = vmatprep.subr.mxu0 0.0
        %4561 = vmatpush1.msra.mxu0 0.0
        %4562 = vmatprep.subr.mxu0 0.0
        %4563 = vmatpush1.msra.mxu0 0.0
        %4564 = vmatprep.subr.mxu0 0.0
        %4565 = vmatpush1.msra.mxu0 0.0
        %4566 = vmatprep.subr.mxu0 0.0
        %4567 = vmatpush1.msra.mxu0 0.0
        %4568 = vmatprep.subr.mxu0 0.0
        %4569 = vmatpush1.msra.mxu0 0.0
        %4570 = vmatprep.subr.mxu0 0.0
        %4571 = vmatpush1.msra.mxu0 0.0
        %4572 = vmatprep.subr.mxu0 0.0
        %4573 = vmatpush1.msra.mxu0 0.0
        %4574 = vmatprep.subr.mxu0 0.0
        %4575 = vmatpush1.msra.mxu0 0.0
        %4576 = vmatprep.subr.mxu0 0.0
        %4577 = vmatpush1.msra.mxu0 0.0
        %4578 = vmatprep.subr.mxu0 0.0
        %4579 = vmatpush1.msra.mxu0 0.0
        %4580 = vmatprep.subr.mxu0 0.0
        %4581 = vmatpush1.msra.mxu0 0.0
        %4582 = vmatprep.subr.mxu0 0.0
        %4583 = vmatpush1.msra.mxu0 0.0
        %4584 = vmatprep.subr.mxu0 0.0
        %4585 = vmatpush1.msra.mxu0 0.0
        %4586 = vmatprep.subr.mxu0 0.0
        %4587 = vmatpush1.msra.mxu0 0.0
        %4588 = vmatprep.subr.mxu0 0.0
        %4589 = vmatpush1.msra.mxu0 0.0
        %4590 = vmatprep.subr.mxu0 0.0
        %4591 = vmatpush1.msra.mxu0 0.0
        %4592 = vmatprep.subr.mxu0 0.0
        %4593 = vmatpush1.msra.mxu0 0.0
        %4594 = vmatprep.subr.mxu0 0.0
        %4595 = vmatpush1.msra.mxu0 0.0
        %4596 = vmatprep.mubr.f32.mxu0 0.0
        %4597 = vmatmul.mubr.f32.gmra.mrb[0].mxu0 %v4459
        %v4598 = vpop.f32.mrb[0].mxu0
        %v4599 = vadd.f32 0.0, %v4598
        %v4600 = vpop.f32.mrb[0].mxu0
        %v4601 = vadd.f32 0.0, %v4600
        %4602 = vdwg.mxu0
        %v4603 = vsel %vm1696, %v4169, 0
        %4605 = vmatprep.subr.mxu0 %v4042
        %4606 = vmatpush1.msra.mxu0 %v4041
        %4607 = vmatprep.subr.mxu0 %v4046
        %4608 = vmatpush1.msra.mxu0 %v4045
        %4609 = vmatprep.subr.mxu0 %v4050
        %4610 = vmatpush1.msra.mxu0 %v4049
        %4611 = vmatprep.subr.mxu0 %v4054
        %4612 = vmatpush1.msra.mxu0 %v4053
        %4613 = vmatprep.subr.mxu0 0.0
        %4614 = vmatpush1.msra.mxu0 0.0
        %4615 = vmatprep.subr.mxu0 0.0
        %4616 = vmatpush1.msra.mxu0 0.0
        %4617 = vmatprep.subr.mxu0 0.0
        %4618 = vmatpush1.msra.mxu0 0.0
        %4619 = vmatprep.subr.mxu0 0.0
        %4620 = vmatpush1.msra.mxu0 0.0
        %4621 = vmatprep.subr.mxu0 0.0
        %4622 = vmatpush1.msra.mxu0 0.0
        %4623 = vmatprep.subr.mxu0 0.0
        %4624 = vmatpush1.msra.mxu0 0.0
        %4625 = vmatprep.subr.mxu0 0.0
        %4626 = vmatpush1.msra.mxu0 0.0
        %4627 = vmatprep.subr.mxu0 0.0
        %4628 = vmatpush1.msra.mxu0 0.0
        %4629 = vmatprep.subr.mxu0 0.0
        %4630 = vmatpush1.msra.mxu0 0.0
        %4631 = vmatprep.subr.mxu0 0.0
        %4632 = vmatpush1.msra.mxu0 0.0
        %4633 = vmatprep.subr.mxu0 0.0
        %4634 = vmatpush1.msra.mxu0 0.0
        %4635 = vmatprep.subr.mxu0 0.0
        %4636 = vmatpush1.msra.mxu0 0.0
        %4637 = vmatprep.subr.mxu0 0.0
        %4638 = vmatpush1.msra.mxu0 0.0
        %4639 = vmatprep.subr.mxu0 0.0
        %4640 = vmatpush1.msra.mxu0 0.0
        %4641 = vmatprep.subr.mxu0 0.0
        %4642 = vmatpush1.msra.mxu0 0.0
        %4643 = vmatprep.subr.mxu0 0.0
        %4644 = vmatpush1.msra.mxu0 0.0
        %4645 = vmatprep.subr.mxu0 0.0
        %4646 = vmatpush1.msra.mxu0 0.0
        %4647 = vmatprep.subr.mxu0 0.0
        %4648 = vmatpush1.msra.mxu0 0.0
        %4649 = vmatprep.subr.mxu0 0.0
        %4650 = vmatpush1.msra.mxu0 0.0
        %4651 = vmatprep.subr.mxu0 0.0
        %4652 = vmatpush1.msra.mxu0 0.0
        %4653 = vmatprep.subr.mxu0 0.0
        %4654 = vmatpush1.msra.mxu0 0.0
        %4655 = vmatprep.subr.mxu0 0.0
        %4656 = vmatpush1.msra.mxu0 0.0
        %4657 = vmatprep.subr.mxu0 0.0
        %4658 = vmatpush1.msra.mxu0 0.0
        %4659 = vmatprep.subr.mxu0 0.0
        %4660 = vmatpush1.msra.mxu0 0.0
        %4661 = vmatprep.subr.mxu0 0.0
        %4662 = vmatpush1.msra.mxu0 0.0
        %4663 = vmatprep.subr.mxu0 0.0
        %4664 = vmatpush1.msra.mxu0 0.0
        %4665 = vmatprep.subr.mxu0 0.0
        %4666 = vmatpush1.msra.mxu0 0.0
        %4667 = vmatprep.subr.mxu0 0.0
        %4668 = vmatpush1.msra.mxu0 0.0
        %4669 = vmatprep.mubr.f32.mxu0 0.0
        %4670 = vmatmul.mubr.f32.gmra.mrb[0].mxu0 %v4603
        %v4671 = vpop.f32.mrb[0].mxu0
        %v4672 = vadd.f32 0.0, %v4671
        %v4673 = vpop.f32.mrb[0].mxu0
        %v4674 = vadd.f32 0.0, %v4673
        %4675 = vdwg.mxu0
        %4676 = vmatprep.subr.mxu0 %v4044
        %4677 = vmatpush1.msra.mxu0 %v4043
        %4678 = vmatprep.subr.mxu0 %v4048
        %4679 = vmatpush1.msra.mxu0 %v4047
        %4680 = vmatprep.subr.mxu0 %v4052
        %4681 = vmatpush1.msra.mxu0 %v4051
        %4682 = vmatprep.subr.mxu0 %v4056
        %4683 = vmatpush1.msra.mxu0 %v4055
        %4684 = vmatprep.subr.mxu0 0.0
        %4685 = vmatpush1.msra.mxu0 0.0
        %4686 = vmatprep.subr.mxu0 0.0
        %4687 = vmatpush1.msra.mxu0 0.0
        %4688 = vmatprep.subr.mxu0 0.0
        %4689 = vmatpush1.msra.mxu0 0.0
        %4690 = vmatprep.subr.mxu0 0.0
        %4691 = vmatpush1.msra.mxu0 0.0
        %4692 = vmatprep.subr.mxu0 0.0
        %4693 = vmatpush1.msra.mxu0 0.0
        %4694 = vmatprep.subr.mxu0 0.0
        %4695 = vmatpush1.msra.mxu0 0.0
        %4696 = vmatprep.subr.mxu0 0.0
        %4697 = vmatpush1.msra.mxu0 0.0
        %4698 = vmatprep.subr.mxu0 0.0
        %4699 = vmatpush1.msra.mxu0 0.0
        %4700 = vmatprep.subr.mxu0 0.0
        %4701 = vmatpush1.msra.mxu0 0.0
        %4702 = vmatprep.subr.mxu0 0.0
        %4703 = vmatpush1.msra.mxu0 0.0
        %4704 = vmatprep.subr.mxu0 0.0
        %4705 = vmatpush1.msra.mxu0 0.0
        %4706 = vmatprep.subr.mxu0 0.0
        %4707 = vmatpush1.msra.mxu0 0.0
        %4708 = vmatprep.subr.mxu0 0.0
        %4709 = vmatpush1.msra.mxu0 0.0
        %4710 = vmatprep.subr.mxu0 0.0
        %4711 = vmatpush1.msra.mxu0 0.0
        %4712 = vmatprep.subr.mxu0 0.0
        %4713 = vmatpush1.msra.mxu0 0.0
        %4714 = vmatprep.subr.mxu0 0.0
        %4715 = vmatpush1.msra.mxu0 0.0
        %4716 = vmatprep.subr.mxu0 0.0
        %4717 = vmatpush1.msra.mxu0 0.0
        %4718 = vmatprep.subr.mxu0 0.0
        %4719 = vmatpush1.msra.mxu0 0.0
        %4720 = vmatprep.subr.mxu0 0.0
        %4721 = vmatpush1.msra.mxu0 0.0
        %4722 = vmatprep.subr.mxu0 0.0
        %4723 = vmatpush1.msra.mxu0 0.0
        %4724 = vmatprep.subr.mxu0 0.0
        %4725 = vmatpush1.msra.mxu0 0.0
        %4726 = vmatprep.subr.mxu0 0.0
        %4727 = vmatpush1.msra.mxu0 0.0
        %4728 = vmatprep.subr.mxu0 0.0
        %4729 = vmatpush1.msra.mxu0 0.0
        %4730 = vmatprep.subr.mxu0 0.0
        %4731 = vmatpush1.msra.mxu0 0.0
        %4732 = vmatprep.subr.mxu0 0.0
        %4733 = vmatpush1.msra.mxu0 0.0
        %4734 = vmatprep.subr.mxu0 0.0
        %4735 = vmatpush1.msra.mxu0 0.0
        %4736 = vmatprep.subr.mxu0 0.0
        %4737 = vmatpush1.msra.mxu0 0.0
        %4738 = vmatprep.subr.mxu0 0.0
        %4739 = vmatpush1.msra.mxu0 0.0
        %4740 = vmatprep.mubr.f32.mxu0 0.0
        %4741 = vmatmul.mubr.f32.gmra.mrb[0].mxu0 %v4603
        %v4742 = vpop.f32.mrb[0].mxu0
        %v4743 = vadd.f32 0.0, %v4742
        %v4744 = vpop.f32.mrb[0].mxu0
        %v4745 = vadd.f32 0.0, %v4744
        %4746 = vdwg.mxu0
        %v4747 = vsel %vm1696, %v4152, 0
        %4749 = vmatprep.subr.mxu0 %v4058
        %4750 = vmatpush1.msra.mxu0 %v4057
        %4751 = vmatprep.subr.mxu0 %v4062
        %4752 = vmatpush1.msra.mxu0 %v4061
        %4753 = vmatprep.subr.mxu0 %v4066
        %4754 = vmatpush1.msra.mxu0 %v4065
        %4755 = vmatprep.subr.mxu0 %v4070
        %4756 = vmatpush1.msra.mxu0 %v4069
        %4757 = vmatprep.subr.mxu0 0.0
        %4758 = vmatpush1.msra.mxu0 0.0
        %4759 = vmatprep.subr.mxu0 0.0
        %4760 = vmatpush1.msra.mxu0 0.0
        %4761 = vmatprep.subr.mxu0 0.0
        %4762 = vmatpush1.msra.mxu0 0.0
        %4763 = vmatprep.subr.mxu0 0.0
        %4764 = vmatpush1.msra.mxu0 0.0
        %4765 = vmatprep.subr.mxu0 0.0
        %4766 = vmatpush1.msra.mxu0 0.0
        %4767 = vmatprep.subr.mxu0 0.0
        %4768 = vmatpush1.msra.mxu0 0.0
        %4769 = vmatprep.subr.mxu0 0.0
        %4770 = vmatpush1.msra.mxu0 0.0
        %4771 = vmatprep.subr.mxu0 0.0
        %4772 = vmatpush1.msra.mxu0 0.0
        %4773 = vmatprep.subr.mxu0 0.0
        %4774 = vmatpush1.msra.mxu0 0.0
        %4775 = vmatprep.subr.mxu0 0.0
        %4776 = vmatpush1.msra.mxu0 0.0
        %4777 = vmatprep.subr.mxu0 0.0
        %4778 = vmatpush1.msra.mxu0 0.0
        %4779 = vmatprep.subr.mxu0 0.0
        %4780 = vmatpush1.msra.mxu0 0.0
        %4781 = vmatprep.subr.mxu0 0.0
        %4782 = vmatpush1.msra.mxu0 0.0
        %4783 = vmatprep.subr.mxu0 0.0
        %4784 = vmatpush1.msra.mxu0 0.0
        %4785 = vmatprep.subr.mxu0 0.0
        %4786 = vmatpush1.msra.mxu0 0.0
        %4787 = vmatprep.subr.mxu0 0.0
        %4788 = vmatpush1.msra.mxu0 0.0
        %4789 = vmatprep.subr.mxu0 0.0
        %4790 = vmatpush1.msra.mxu0 0.0
        %4791 = vmatprep.subr.mxu0 0.0
        %4792 = vmatpush1.msra.mxu0 0.0
        %4793 = vmatprep.subr.mxu0 0.0
        %4794 = vmatpush1.msra.mxu0 0.0
        %4795 = vmatprep.subr.mxu0 0.0
        %4796 = vmatpush1.msra.mxu0 0.0
        %4797 = vmatprep.subr.mxu0 0.0
        %4798 = vmatpush1.msra.mxu0 0.0
        %4799 = vmatprep.subr.mxu0 0.0
        %4800 = vmatpush1.msra.mxu0 0.0
        %4801 = vmatprep.subr.mxu0 0.0
        %4802 = vmatpush1.msra.mxu0 0.0
        %4803 = vmatprep.subr.mxu0 0.0
        %4804 = vmatpush1.msra.mxu0 0.0
        %4805 = vmatprep.subr.mxu0 0.0
        %4806 = vmatpush1.msra.mxu0 0.0
        %4807 = vmatprep.subr.mxu0 0.0
        %4808 = vmatpush1.msra.mxu0 0.0
        %4809 = vmatprep.subr.mxu0 0.0
        %4810 = vmatpush1.msra.mxu0 0.0
        %4811 = vmatprep.subr.mxu0 0.0
        %4812 = vmatpush1.msra.mxu0 0.0
        %4813 = vmatprep.mubr.f32.mxu0 0.0
        %4814 = vmatmul.mubr.f32.gmra.mrb[0].mxu0 %v4747
        %v4815 = vpop.f32.mrb[0].mxu0
        %v4816 = vadd.f32 0.0, %v4815
        %v4817 = vpop.f32.mrb[0].mxu0
        %v4818 = vadd.f32 0.0, %v4817
        %4819 = vdwg.mxu0
        %4820 = vmatprep.subr.mxu0 %v4060
        %4821 = vmatpush1.msra.mxu0 %v4059
        %4822 = vmatprep.subr.mxu0 %v4064
        %4823 = vmatpush1.msra.mxu0 %v4063
        %4824 = vmatprep.subr.mxu0 %v4068
        %4825 = vmatpush1.msra.mxu0 %v4067
        %4826 = vmatprep.subr.mxu0 %v4072
        %4827 = vmatpush1.msra.mxu0 %v4071
        %4828 = vmatprep.subr.mxu0 0.0
        %4829 = vmatpush1.msra.mxu0 0.0
        %4830 = vmatprep.subr.mxu0 0.0
        %4831 = vmatpush1.msra.mxu0 0.0
        %4832 = vmatprep.subr.mxu0 0.0
        %4833 = vmatpush1.msra.mxu0 0.0
        %4834 = vmatprep.subr.mxu0 0.0
        %4835 = vmatpush1.msra.mxu0 0.0
        %4836 = vmatprep.subr.mxu0 0.0
        %4837 = vmatpush1.msra.mxu0 0.0
        %4838 = vmatprep.subr.mxu0 0.0
        %4839 = vmatpush1.msra.mxu0 0.0
        %4840 = vmatprep.subr.mxu0 0.0
        %4841 = vmatpush1.msra.mxu0 0.0
        %4842 = vmatprep.subr.mxu0 0.0
        %4843 = vmatpush1.msra.mxu0 0.0
        %4844 = vmatprep.subr.mxu0 0.0
        %4845 = vmatpush1.msra.mxu0 0.0
        %4846 = vmatprep.subr.mxu0 0.0
        %4847 = vmatpush1.msra.mxu0 0.0
        %4848 = vmatprep.subr.mxu0 0.0
        %4849 = vmatpush1.msra.mxu0 0.0
        %4850 = vmatprep.subr.mxu0 0.0
        %4851 = vmatpush1.msra.mxu0 0.0
        %4852 = vmatprep.subr.mxu0 0.0
        %4853 = vmatpush1.msra.mxu0 0.0
        %4854 = vmatprep.subr.mxu0 0.0
        %4855 = vmatpush1.msra.mxu0 0.0
        %4856 = vmatprep.subr.mxu0 0.0
        %4857 = vmatpush1.msra.mxu0 0.0
        %4858 = vmatprep.subr.mxu0 0.0
        %4859 = vmatpush1.msra.mxu0 0.0
        %4860 = vmatprep.subr.mxu0 0.0
        %4861 = vmatpush1.msra.mxu0 0.0
        %4862 = vmatprep.subr.mxu0 0.0
        %4863 = vmatpush1.msra.mxu0 0.0
        %4864 = vmatprep.subr.mxu0 0.0
        %4865 = vmatpush1.msra.mxu0 0.0
        %4866 = vmatprep.subr.mxu0 0.0
        %4867 = vmatpush1.msra.mxu0 0.0
        %4868 = vmatprep.subr.mxu0 0.0
        %4869 = vmatpush1.msra.mxu0 0.0
        %4870 = vmatprep.subr.mxu0 0.0
        %4871 = vmatpush1.msra.mxu0 0.0
        %4872 = vmatprep.subr.mxu0 0.0
        %4873 = vmatpush1.msra.mxu0 0.0
        %4874 = vmatprep.subr.mxu0 0.0
        %4875 = vmatpush1.msra.mxu0 0.0
        %4876 = vmatprep.subr.mxu0 0.0
        %4877 = vmatpush1.msra.mxu0 0.0
        %4878 = vmatprep.subr.mxu0 0.0
        %4879 = vmatpush1.msra.mxu0 0.0
        %4880 = vmatprep.subr.mxu0 0.0
        %4881 = vmatpush1.msra.mxu0 0.0
        %4882 = vmatprep.subr.mxu0 0.0
        %4883 = vmatpush1.msra.mxu0 0.0
        %4884 = vmatprep.mubr.f32.mxu0 0.0
        %4885 = vmatmul.mubr.f32.gmra.mrb[0].mxu0 %v4747
        %v4886 = vpop.f32.mrb[0].mxu0
        %v4887 = vadd.f32 0.0, %v4886
        %v4888 = vpop.f32.mrb[0].mxu0
        %v4889 = vadd.f32 0.0, %v4888
        %4890 = vdwg.mxu0
        %v4891 = vsel %vm1696, %v4166, 0
        %4893 = vmatprep.subr.mxu0 %v4074
        %4894 = vmatpush1.msra.mxu0 %v4073
        %4895 = vmatprep.subr.mxu0 %v4078
        %4896 = vmatpush1.msra.mxu0 %v4077
        %4897 = vmatprep.subr.mxu0 %v4082
        %4898 = vmatpush1.msra.mxu0 %v4081
        %4899 = vmatprep.subr.mxu0 %v4086
        %4900 = vmatpush1.msra.mxu0 %v4085
        %4901 = vmatprep.subr.mxu0 0.0
        %4902 = vmatpush1.msra.mxu0 0.0
        %4903 = vmatprep.subr.mxu0 0.0
        %4904 = vmatpush1.msra.mxu0 0.0
        %4905 = vmatprep.subr.mxu0 0.0
        %4906 = vmatpush1.msra.mxu0 0.0
        %4907 = vmatprep.subr.mxu0 0.0
        %4908 = vmatpush1.msra.mxu0 0.0
        %4909 = vmatprep.subr.mxu0 0.0
        %4910 = vmatpush1.msra.mxu0 0.0
        %4911 = vmatprep.subr.mxu0 0.0
        %4912 = vmatpush1.msra.mxu0 0.0
        %4913 = vmatprep.subr.mxu0 0.0
        %4914 = vmatpush1.msra.mxu0 0.0
        %4915 = vmatprep.subr.mxu0 0.0
        %4916 = vmatpush1.msra.mxu0 0.0
        %4917 = vmatprep.subr.mxu0 0.0
        %4918 = vmatpush1.msra.mxu0 0.0
        %4919 = vmatprep.subr.mxu0 0.0
        %4920 = vmatpush1.msra.mxu0 0.0
        %4921 = vmatprep.subr.mxu0 0.0
        %4922 = vmatpush1.msra.mxu0 0.0
        %4923 = vmatprep.subr.mxu0 0.0
        %4924 = vmatpush1.msra.mxu0 0.0
        %4925 = vmatprep.subr.mxu0 0.0
        %4926 = vmatpush1.msra.mxu0 0.0
        %4927 = vmatprep.subr.mxu0 0.0
        %4928 = vmatpush1.msra.mxu0 0.0
        %4929 = vmatprep.subr.mxu0 0.0
        %4930 = vmatpush1.msra.mxu0 0.0
        %4931 = vmatprep.subr.mxu0 0.0
        %4932 = vmatpush1.msra.mxu0 0.0
        %4933 = vmatprep.subr.mxu0 0.0
        %4934 = vmatpush1.msra.mxu0 0.0
        %4935 = vmatprep.subr.mxu0 0.0
        %4936 = vmatpush1.msra.mxu0 0.0
        %4937 = vmatprep.subr.mxu0 0.0
        %4938 = vmatpush1.msra.mxu0 0.0
        %4939 = vmatprep.subr.mxu0 0.0
        %4940 = vmatpush1.msra.mxu0 0.0
        %4941 = vmatprep.subr.mxu0 0.0
        %4942 = vmatpush1.msra.mxu0 0.0
        %4943 = vmatprep.subr.mxu0 0.0
        %4944 = vmatpush1.msra.mxu0 0.0
        %4945 = vmatprep.subr.mxu0 0.0
        %4946 = vmatpush1.msra.mxu0 0.0
        %4947 = vmatprep.subr.mxu0 0.0
        %4948 = vmatpush1.msra.mxu0 0.0
        %4949 = vmatprep.subr.mxu0 0.0
        %4950 = vmatpush1.msra.mxu0 0.0
        %4951 = vmatprep.subr.mxu0 0.0
        %4952 = vmatpush1.msra.mxu0 0.0
        %4953 = vmatprep.subr.mxu0 0.0
        %4954 = vmatpush1.msra.mxu0 0.0
        %4955 = vmatprep.subr.mxu0 0.0
        %4956 = vmatpush1.msra.mxu0 0.0
        %4957 = vmatprep.mubr.f32.mxu0 0.0
        %4958 = vmatmul.mubr.f32.gmra.mrb[0].mxu0 %v4891
        %v4959 = vpop.f32.mrb[0].mxu0
        %v4960 = vadd.f32 0.0, %v4959
        %v4961 = vpop.f32.mrb[0].mxu0
        %v4962 = vadd.f32 0.0, %v4961
        %4963 = vdwg.mxu0
        %4964 = vmatprep.subr.mxu0 %v4076
        %4965 = vmatpush1.msra.mxu0 %v4075
        %4966 = vmatprep.subr.mxu0 %v4080
        %4967 = vmatpush1.msra.mxu0 %v4079
        %4968 = vmatprep.subr.mxu0 %v4084
        %4969 = vmatpush1.msra.mxu0 %v4083
        %4970 = vmatprep.subr.mxu0 %v4088
        %4971 = vmatpush1.msra.mxu0 %v4087
        %4972 = vmatprep.subr.mxu0 0.0
        %4973 = vmatpush1.msra.mxu0 0.0
        %4974 = vmatprep.subr.mxu0 0.0
        %4975 = vmatpush1.msra.mxu0 0.0
        %4976 = vmatprep.subr.mxu0 0.0
        %4977 = vmatpush1.msra.mxu0 0.0
        %4978 = vmatprep.subr.mxu0 0.0
        %4979 = vmatpush1.msra.mxu0 0.0
        %4980 = vmatprep.subr.mxu0 0.0
        %4981 = vmatpush1.msra.mxu0 0.0
        %4982 = vmatprep.subr.mxu0 0.0
        %4983 = vmatpush1.msra.mxu0 0.0
        %4984 = vmatprep.subr.mxu0 0.0
        %4985 = vmatpush1.msra.mxu0 0.0
        %4986 = vmatprep.subr.mxu0 0.0
        %4987 = vmatpush1.msra.mxu0 0.0
        %4988 = vmatprep.subr.mxu0 0.0
        %4989 = vmatpush1.msra.mxu0 0.0
        %4990 = vmatprep.subr.mxu0 0.0
        %4991 = vmatpush1.msra.mxu0 0.0
        %4992 = vmatprep.subr.mxu0 0.0
        %4993 = vmatpush1.msra.mxu0 0.0
        %4994 = vmatprep.subr.mxu0 0.0
        %4995 = vmatpush1.msra.mxu0 0.0
        %4996 = vmatprep.subr.mxu0 0.0
        %4997 = vmatpush1.msra.mxu0 0.0
        %4998 = vmatprep.subr.mxu0 0.0
        %4999 = vmatpush1.msra.mxu0 0.0
        %5000 = vmatprep.subr.mxu0 0.0
        %5001 = vmatpush1.msra.mxu0 0.0
        %5002 = vmatprep.subr.mxu0 0.0
        %5003 = vmatpush1.msra.mxu0 0.0
        %5004 = vmatprep.subr.mxu0 0.0
        %5005 = vmatpush1.msra.mxu0 0.0
        %5006 = vmatprep.subr.mxu0 0.0
        %5007 = vmatpush1.msra.mxu0 0.0
        %5008 = vmatprep.subr.mxu0 0.0
        %5009 = vmatpush1.msra.mxu0 0.0
        %5010 = vmatprep.subr.mxu0 0.0
        %5011 = vmatpush1.msra.mxu0 0.0
        %5012 = vmatprep.subr.mxu0 0.0
        %5013 = vmatpush1.msra.mxu0 0.0
        %5014 = vmatprep.subr.mxu0 0.0
        %5015 = vmatpush1.msra.mxu0 0.0
        %5016 = vmatprep.subr.mxu0 0.0
        %5017 = vmatpush1.msra.mxu0 0.0
        %5018 = vmatprep.subr.mxu0 0.0
        %5019 = vmatpush1.msra.mxu0 0.0
        %5020 = vmatprep.subr.mxu0 0.0
        %5021 = vmatpush1.msra.mxu0 0.0
        %5022 = vmatprep.subr.mxu0 0.0
        %5023 = vmatpush1.msra.mxu0 0.0
        %5024 = vmatprep.subr.mxu0 0.0
        %5025 = vmatpush1.msra.mxu0 0.0
        %5026 = vmatprep.subr.mxu0 0.0
        %5027 = vmatpush1.msra.mxu0 0.0
        %5028 = vmatprep.mubr.f32.mxu0 0.0
        %5029 = vmatmul.mubr.f32.gmra.mrb[0].mxu0 %v4891
        %v5030 = vpop.f32.mrb[0].mxu0
        %v5031 = vadd.f32 0.0, %v5030
        %v5032 = vpop.f32.mrb[0].mxu0
        %v5033 = vadd.f32 0.0, %v5032
        %5034 = vdwg.mxu0
        %v5035 = vsel %vm1696, %v4168, 0
        %5037 = vmatprep.subr.mxu0 %v4090
        %5038 = vmatpush1.msra.mxu0 %v4089
        %5039 = vmatprep.subr.mxu0 %v4094
        %5040 = vmatpush1.msra.mxu0 %v4093
        %5041 = vmatprep.subr.mxu0 %v4098
        %5042 = vmatpush1.msra.mxu0 %v4097
        %5043 = vmatprep.subr.mxu0 %v4102
        %5044 = vmatpush1.msra.mxu0 %v4101
        %5045 = vmatprep.subr.mxu0 0.0
        %5046 = vmatpush1.msra.mxu0 0.0
        %5047 = vmatprep.subr.mxu0 0.0
        %5048 = vmatpush1.msra.mxu0 0.0
        %5049 = vmatprep.subr.mxu0 0.0
        %5050 = vmatpush1.msra.mxu0 0.0
        %5051 = vmatprep.subr.mxu0 0.0
        %5052 = vmatpush1.msra.mxu0 0.0
        %5053 = vmatprep.subr.mxu0 0.0
        %5054 = vmatpush1.msra.mxu0 0.0
        %5055 = vmatprep.subr.mxu0 0.0
        %5056 = vmatpush1.msra.mxu0 0.0
        %5057 = vmatprep.subr.mxu0 0.0
        %5058 = vmatpush1.msra.mxu0 0.0
        %5059 = vmatprep.subr.mxu0 0.0
        %5060 = vmatpush1.msra.mxu0 0.0
        %5061 = vmatprep.subr.mxu0 0.0
        %5062 = vmatpush1.msra.mxu0 0.0
        %5063 = vmatprep.subr.mxu0 0.0
        %5064 = vmatpush1.msra.mxu0 0.0
        %5065 = vmatprep.subr.mxu0 0.0
        %5066 = vmatpush1.msra.mxu0 0.0
        %5067 = vmatprep.subr.mxu0 0.0
        %5068 = vmatpush1.msra.mxu0 0.0
        %5069 = vmatprep.subr.mxu0 0.0
        %5070 = vmatpush1.msra.mxu0 0.0
        %5071 = vmatprep.subr.mxu0 0.0
        %5072 = vmatpush1.msra.mxu0 0.0
        %5073 = vmatprep.subr.mxu0 0.0
        %5074 = vmatpush1.msra.mxu0 0.0
        %5075 = vmatprep.subr.mxu0 0.0
        %5076 = vmatpush1.msra.mxu0 0.0
        %5077 = vmatprep.subr.mxu0 0.0
        %5078 = vmatpush1.msra.mxu0 0.0
        %5079 = vmatprep.subr.mxu0 0.0
        %5080 = vmatpush1.msra.mxu0 0.0
        %5081 = vmatprep.subr.mxu0 0.0
        %5082 = vmatpush1.msra.mxu0 0.0
        %5083 = vmatprep.subr.mxu0 0.0
        %5084 = vmatpush1.msra.mxu0 0.0
        %5085 = vmatprep.subr.mxu0 0.0
        %5086 = vmatpush1.msra.mxu0 0.0
        %5087 = vmatprep.subr.mxu0 0.0
        %5088 = vmatpush1.msra.mxu0 0.0
        %5089 = vmatprep.subr.mxu0 0.0
        %5090 = vmatpush1.msra.mxu0 0.0
        %5091 = vmatprep.subr.mxu0 0.0
        %5092 = vmatpush1.msra.mxu0 0.0
        %5093 = vmatprep.subr.mxu0 0.0
        %5094 = vmatpush1.msra.mxu0 0.0
        %5095 = vmatprep.subr.mxu0 0.0
        %5096 = vmatpush1.msra.mxu0 0.0
        %5097 = vmatprep.subr.mxu0 0.0
        %5098 = vmatpush1.msra.mxu0 0.0
        %5099 = vmatprep.subr.mxu0 0.0
        %5100 = vmatpush1.msra.mxu0 0.0
        %5101 = vmatprep.mubr.f32.mxu0 0.0
        %5102 = vmatmul.mubr.f32.gmra.mrb[0].mxu0 %v5035
        %v5103 = vpop.f32.mrb[0].mxu0
        %v5104 = vadd.f32 0.0, %v5103
        %v5105 = vpop.f32.mrb[0].mxu0
        %v5106 = vadd.f32 0.0, %v5105
        %5107 = vdwg.mxu0
        %5108 = vmatprep.subr.mxu0 %v4092
        %5109 = vmatpush1.msra.mxu0 %v4091
        %5110 = vmatprep.subr.mxu0 %v4096
        %5111 = vmatpush1.msra.mxu0 %v4095
        %5112 = vmatprep.subr.mxu0 %v4100
        %5113 = vmatpush1.msra.mxu0 %v4099
        %5114 = vmatprep.subr.mxu0 %v4104
        %5115 = vmatpush1.msra.mxu0 %v4103
        %5116 = vmatprep.subr.mxu0 0.0
        %5117 = vmatpush1.msra.mxu0 0.0
        %5118 = vmatprep.subr.mxu0 0.0
        %5119 = vmatpush1.msra.mxu0 0.0
        %5120 = vmatprep.subr.mxu0 0.0
        %5121 = vmatpush1.msra.mxu0 0.0
        %5122 = vmatprep.subr.mxu0 0.0
        %5123 = vmatpush1.msra.mxu0 0.0
        %5124 = vmatprep.subr.mxu0 0.0
        %5125 = vmatpush1.msra.mxu0 0.0
        %5126 = vmatprep.subr.mxu0 0.0
        %5127 = vmatpush1.msra.mxu0 0.0
        %5128 = vmatprep.subr.mxu0 0.0
        %5129 = vmatpush1.msra.mxu0 0.0
        %5130 = vmatprep.subr.mxu0 0.0
        %5131 = vmatpush1.msra.mxu0 0.0
        %5132 = vmatprep.subr.mxu0 0.0
        %5133 = vmatpush1.msra.mxu0 0.0
        %5134 = vmatprep.subr.mxu0 0.0
        %5135 = vmatpush1.msra.mxu0 0.0
        %5136 = vmatprep.subr.mxu0 0.0
        %5137 = vmatpush1.msra.mxu0 0.0
        %5138 = vmatprep.subr.mxu0 0.0
        %5139 = vmatpush1.msra.mxu0 0.0
        %5140 = vmatprep.subr.mxu0 0.0
        %5141 = vmatpush1.msra.mxu0 0.0
        %5142 = vmatprep.subr.mxu0 0.0
        %5143 = vmatpush1.msra.mxu0 0.0
        %5144 = vmatprep.subr.mxu0 0.0
        %5145 = vmatpush1.msra.mxu0 0.0
        %5146 = vmatprep.subr.mxu0 0.0
        %5147 = vmatpush1.msra.mxu0 0.0
        %5148 = vmatprep.subr.mxu0 0.0
        %5149 = vmatpush1.msra.mxu0 0.0
        %5150 = vmatprep.subr.mxu0 0.0
        %5151 = vmatpush1.msra.mxu0 0.0
        %5152 = vmatprep.subr.mxu0 0.0
        %5153 = vmatpush1.msra.mxu0 0.0
        %5154 = vmatprep.subr.mxu0 0.0
        %5155 = vmatpush1.msra.mxu0 0.0
        %5156 = vmatprep.subr.mxu0 0.0
        %5157 = vmatpush1.msra.mxu0 0.0
        %5158 = vmatprep.subr.mxu0 0.0
        %5159 = vmatpush1.msra.mxu0 0.0
        %5160 = vmatprep.subr.mxu0 0.0
        %5161 = vmatpush1.msra.mxu0 0.0
        %5162 = vmatprep.subr.mxu0 0.0
        %5163 = vmatpush1.msra.mxu0 0.0
        %5164 = vmatprep.subr.mxu0 0.0
        %5165 = vmatpush1.msra.mxu0 0.0
        %5166 = vmatprep.subr.mxu0 0.0
        %5167 = vmatpush1.msra.mxu0 0.0
        %5168 = vmatprep.subr.mxu0 0.0
        %5169 = vmatpush1.msra.mxu0 0.0
        %5170 = vmatprep.subr.mxu0 0.0
        %5171 = vmatpush1.msra.mxu0 0.0
        %5172 = vmatprep.mubr.f32.mxu0 0.0
        %5173 = vmatmul.mubr.f32.gmra.mrb[0].mxu0 %v5035
        %v5174 = vpop.f32.mrb[0].mxu0
        %v5175 = vadd.f32 0.0, %v5174
        %v5176 = vpop.f32.mrb[0].mxu0
        %v5177 = vadd.f32 0.0, %v5176
        %5178 = vdwg.mxu0
        %v5179 = vsel %vm1696, %v4170, 0
        %5181 = vmatprep.subr.mxu0 %v4106
        %5182 = vmatpush1.msra.mxu0 %v4105
        %5183 = vmatprep.subr.mxu0 %v4110
        %5184 = vmatpush1.msra.mxu0 %v4109
        %5185 = vmatprep.subr.mxu0 %v4114
        %5186 = vmatpush1.msra.mxu0 %v4113
        %5187 = vmatprep.subr.mxu0 %v4118
        %5188 = vmatpush1.msra.mxu0 %v4117
        %5189 = vmatprep.subr.mxu0 0.0
        %5190 = vmatpush1.msra.mxu0 0.0
        %5191 = vmatprep.subr.mxu0 0.0
        %5192 = vmatpush1.msra.mxu0 0.0
        %5193 = vmatprep.subr.mxu0 0.0
        %5194 = vmatpush1.msra.mxu0 0.0
        %5195 = vmatprep.subr.mxu0 0.0
        %5196 = vmatpush1.msra.mxu0 0.0
        %5197 = vmatprep.subr.mxu0 0.0
        %5198 = vmatpush1.msra.mxu0 0.0
        %5199 = vmatprep.subr.mxu0 0.0
        %5200 = vmatpush1.msra.mxu0 0.0
        %5201 = vmatprep.subr.mxu0 0.0
        %5202 = vmatpush1.msra.mxu0 0.0
        %5203 = vmatprep.subr.mxu0 0.0
        %5204 = vmatpush1.msra.mxu0 0.0
        %5205 = vmatprep.subr.mxu0 0.0
        %5206 = vmatpush1.msra.mxu0 0.0
        %5207 = vmatprep.subr.mxu0 0.0
        %5208 = vmatpush1.msra.mxu0 0.0
        %5209 = vmatprep.subr.mxu0 0.0
        %5210 = vmatpush1.msra.mxu0 0.0
        %5211 = vmatprep.subr.mxu0 0.0
        %5212 = vmatpush1.msra.mxu0 0.0
        %5213 = vmatprep.subr.mxu0 0.0
        %5214 = vmatpush1.msra.mxu0 0.0
        %5215 = vmatprep.subr.mxu0 0.0
        %5216 = vmatpush1.msra.mxu0 0.0
        %5217 = vmatprep.subr.mxu0 0.0
        %5218 = vmatpush1.msra.mxu0 0.0
        %5219 = vmatprep.subr.mxu0 0.0
        %5220 = vmatpush1.msra.mxu0 0.0
        %5221 = vmatprep.subr.mxu0 0.0
        %5222 = vmatpush1.msra.mxu0 0.0
        %5223 = vmatprep.subr.mxu0 0.0
        %5224 = vmatpush1.msra.mxu0 0.0
        %5225 = vmatprep.subr.mxu0 0.0
        %5226 = vmatpush1.msra.mxu0 0.0
        %5227 = vmatprep.subr.mxu0 0.0
        %5228 = vmatpush1.msra.mxu0 0.0
        %5229 = vmatprep.subr.mxu0 0.0
        %5230 = vmatpush1.msra.mxu0 0.0
        %5231 = vmatprep.subr.mxu0 0.0
        %5232 = vmatpush1.msra.mxu0 0.0
        %5233 = vmatprep.subr.mxu0 0.0
        %5234 = vmatpush1.msra.mxu0 0.0
        %5235 = vmatprep.subr.mxu0 0.0
        %5236 = vmatpush1.msra.mxu0 0.0
        %5237 = vmatprep.subr.mxu0 0.0
        %5238 = vmatpush1.msra.mxu0 0.0
        %5239 = vmatprep.subr.mxu0 0.0
        %5240 = vmatpush1.msra.mxu0 0.0
        %5241 = vmatprep.subr.mxu0 0.0
        %5242 = vmatpush1.msra.mxu0 0.0
        %5243 = vmatprep.subr.mxu0 0.0
        %5244 = vmatpush1.msra.mxu0 0.0
        %5245 = vmatprep.mubr.f32.mxu0 0.0
        %5246 = vmatmul.mubr.f32.gmra.mrb[0].mxu0 %v5179
        %v5247 = vpop.f32.mrb[0].mxu0
        %v5248 = vadd.f32 0.0, %v5247
        %v5249 = vpop.f32.mrb[0].mxu0
        %v5250 = vadd.f32 0.0, %v5249
        %5251 = vdwg.mxu0
        %5252 = vmatprep.subr.mxu0 %v4108
        %5253 = vmatpush1.msra.mxu0 %v4107
        %5254 = vmatprep.subr.mxu0 %v4112
        %5255 = vmatpush1.msra.mxu0 %v4111
        %5256 = vmatprep.subr.mxu0 %v4116
        %5257 = vmatpush1.msra.mxu0 %v4115
        %5258 = vmatprep.subr.mxu0 %v4120
        %5259 = vmatpush1.msra.mxu0 %v4119
        %5260 = vmatprep.subr.mxu0 0.0
        %5261 = vmatpush1.msra.mxu0 0.0
        %5262 = vmatprep.subr.mxu0 0.0
        %5263 = vmatpush1.msra.mxu0 0.0
        %5264 = vmatprep.subr.mxu0 0.0
        %5265 = vmatpush1.msra.mxu0 0.0
        %5266 = vmatprep.subr.mxu0 0.0
        %5267 = vmatpush1.msra.mxu0 0.0
        %5268 = vmatprep.subr.mxu0 0.0
        %5269 = vmatpush1.msra.mxu0 0.0
        %5270 = vmatprep.subr.mxu0 0.0
        %5271 = vmatpush1.msra.mxu0 0.0
        %5272 = vmatprep.subr.mxu0 0.0
        %5273 = vmatpush1.msra.mxu0 0.0
        %5274 = vmatprep.subr.mxu0 0.0
        %5275 = vmatpush1.msra.mxu0 0.0
        %5276 = vmatprep.subr.mxu0 0.0
        %5277 = vmatpush1.msra.mxu0 0.0
        %5278 = vmatprep.subr.mxu0 0.0
        %5279 = vmatpush1.msra.mxu0 0.0
        %5280 = vmatprep.subr.mxu0 0.0
        %5281 = vmatpush1.msra.mxu0 0.0
        %5282 = vmatprep.subr.mxu0 0.0
        %5283 = vmatpush1.msra.mxu0 0.0
        %5284 = vmatprep.subr.mxu0 0.0
        %5285 = vmatpush1.msra.mxu0 0.0
        %5286 = vmatprep.subr.mxu0 0.0
        %5287 = vmatpush1.msra.mxu0 0.0
        %5288 = vmatprep.subr.mxu0 0.0
        %5289 = vmatpush1.msra.mxu0 0.0
        %5290 = vmatprep.subr.mxu0 0.0
        %5291 = vmatpush1.msra.mxu0 0.0
        %5292 = vmatprep.subr.mxu0 0.0
        %5293 = vmatpush1.msra.mxu0 0.0
        %5294 = vmatprep.subr.mxu0 0.0
        %5295 = vmatpush1.msra.mxu0 0.0
        %5296 = vmatprep.subr.mxu0 0.0
        %5297 = vmatpush1.msra.mxu0 0.0
        %5298 = vmatprep.subr.mxu0 0.0
        %5299 = vmatpush1.msra.mxu0 0.0
        %5300 = vmatprep.subr.mxu0 0.0
        %5301 = vmatpush1.msra.mxu0 0.0
        %5302 = vmatprep.subr.mxu0 0.0
        %5303 = vmatpush1.msra.mxu0 0.0
        %5304 = vmatprep.subr.mxu0 0.0
        %5305 = vmatpush1.msra.mxu0 0.0
        %5306 = vmatprep.subr.mxu0 0.0
        %5307 = vmatpush1.msra.mxu0 0.0
        %5308 = vmatprep.subr.mxu0 0.0
        %5309 = vmatpush1.msra.mxu0 0.0
        %5310 = vmatprep.subr.mxu0 0.0
        %5311 = vmatpush1.msra.mxu0 0.0
        %5312 = vmatprep.subr.mxu0 0.0
        %5313 = vmatpush1.msra.mxu0 0.0
        %5314 = vmatprep.subr.mxu0 0.0
        %5315 = vmatpush1.msra.mxu0 0.0
        %5316 = vmatprep.mubr.f32.mxu0 0.0
        %5317 = vmatmul.mubr.f32.gmra.mrb[0].mxu0 %v5179
        %v5318 = vpop.f32.mrb[0].mxu0
        %v5319 = vadd.f32 0.0, %v5318
        %v5320 = vpop.f32.mrb[0].mxu0
        %v5321 = vadd.f32 0.0, %v5320
        %5322 = vdwg.mxu0
        %v5355 = vrot.slane %v4384, 7
        %v5356 = vsel %vm3242, %v5355, %v4240
        %v5357 = vrot.slane %v4528, 6
        %v5358 = vsel %vm3244, %v5357, %v5356
        %v5359 = vrot.slane %v4672, 5
        %v5360 = vsel %vm3246, %v5359, %v5358
        %v5361 = vrot.slane %v4816, 4
        %v5362 = vsel %vm3248, %v5361, %v5360
        %v5363 = vrot.slane %v4960, 3
        %v5364 = vsel %vm3250, %v5363, %v5362
        %v5365 = vrot.slane %v5104, 2
        %v5366 = vsel %vm3252, %v5365, %v5364
        %v5367 = vrot.slane %v5248, 1
        %v5368 = vsel %vm3254, %v5367, %v5366
        %v5369 = vrot.slane %v4386, 7
        %v5370 = vsel %vm3242, %v5369, %v4242
        %v5371 = vrot.slane %v4530, 6
        %v5372 = vsel %vm3244, %v5371, %v5370
        %v5373 = vrot.slane %v4674, 5
        %v5374 = vsel %vm3246, %v5373, %v5372
        %v5375 = vrot.slane %v4818, 4
        %v5376 = vsel %vm3248, %v5375, %v5374
        %v5377 = vrot.slane %v4962, 3
        %v5378 = vsel %vm3250, %v5377, %v5376
        %v5379 = vrot.slane %v5106, 2
        %v5380 = vsel %vm3252, %v5379, %v5378
        %v5381 = vrot.slane %v5250, 1
        %v5382 = vsel %vm3254, %v5381, %v5380
        %v5383 = vrot.slane %v4455, 7
        %v5384 = vsel %vm3242, %v5383, %v4311
        %v5385 = vrot.slane %v4599, 6
        %v5386 = vsel %vm3244, %v5385, %v5384
        %v5387 = vrot.slane %v4743, 5
        %v5388 = vsel %vm3246, %v5387, %v5386
        %v5389 = vrot.slane %v4887, 4
        %v5390 = vsel %vm3248, %v5389, %v5388
        %v5391 = vrot.slane %v5031, 3
        %v5392 = vsel %vm3250, %v5391, %v5390
        %v5393 = vrot.slane %v5175, 2
        %v5394 = vsel %vm3252, %v5393, %v5392
        %v5395 = vrot.slane %v5319, 1
        %v5396 = vsel %vm3254, %v5395, %v5394
        %v5397 = vrot.slane %v4457, 7
        %v5398 = vsel %vm3242, %v5397, %v4313
        %v5399 = vrot.slane %v4601, 6
        %v5400 = vsel %vm3244, %v5399, %v5398
        %v5401 = vrot.slane %v4745, 5
        %v5402 = vsel %vm3246, %v5401, %v5400
        %v5403 = vrot.slane %v4889, 4
        %v5404 = vsel %vm3248, %v5403, %v5402
        %v5405 = vrot.slane %v5033, 3
        %v5406 = vsel %vm3250, %v5405, %v5404
        %v5407 = vrot.slane %v5177, 2
        %v5408 = vsel %vm3252, %v5407, %v5406
        %v5409 = vrot.slane %v5321, 1
        %v5410 = vsel %vm3254, %v5409, %v5408
        %5415 = vst [vmem:[%s940] sm:$0xff] %v5368
        %5416 = vst [vmem:[%s940 + $0x8] sm:$0xff] %v5382
        %5417 = vst [vmem:[%s940 + $0x10] sm:$0xff] %v5396
        %5418 = vst [vmem:[%s940 + $0x18] sm:$0xff] %v5410
        %s5419 = sand.u32 %s549, 1
        %s5420 = scalar_lea.sflag [#allocation5], %s5419
        %s5421 = sand.u32 %s549, 1
        %s5422 = smul.addr %s5421, 32
        %s5423 = scalar_lea.vmem [#allocation18], %s5422
        %p5424 = scmp.lt.s32.totalorder %s49, 1
        %s5425 = scalar_select %p5424, %s49, 1
        %s5426 = smul.addr %s5425, 8
        %s5427 = scalar_lea.vmem %s23, %s5426
        // Predicated region
        $region145: #{tpu_custom_call.1} parent=107 // pred_check
          %p5428 = pneg %p559
        $region146: #{tpu_custom_call.1} parent=107 // pred_check_branch
          %5430 = sbr.rel (%p5428) target = $region148
        $region147: #{tpu_custom_call.1} parent=107 // pred_region
          %s5432 = ssub.s32 512, 512
          %5433 = vsyncadd %s5420, %s5432
          %s5434 = smul.addr %s49, 4
          %s5435 = smul.addr %s5434, 128
          %s5436 = scalar_lea.hbm %s22, %s5435
          %s5438 = sshll.u32 %s5423, 4
          %s5439 = int_to_ptr.vmem [resolvable:$true] %s5438
          %5441 = dma.vmem_to_hbm [thread:$0]  %s5439, 512, %s5436, %s5420
        $region148: #{tpu_custom_call.1} parent=107 // pred_fallthru
          _
        // Predicated region
        $region149: #{tpu_custom_call.1} parent=107 // pred_check
          %p5442 = pneg %p585
        $region150: #{tpu_custom_call.1} parent=107 // pred_check_branch
          %5444 = sbr.rel (%p5442) target = $region152
        $region151: #{tpu_custom_call.1} parent=107 // pred_region
          _
        $region152: #{tpu_custom_call.1} parent=107 // pred_fallthru
          _
      $region108: #{tpu_custom_call.1} parent=5 // pred_fallthru
        _
      %p5445 = scmp.le.s32.totalorder 2, %s44
      // Predicated region
      $region153: #{tpu_custom_call.1} parent=5 // pred_check
        %p5446 = pneg %p5445
      $region154: #{tpu_custom_call.1} parent=5 // pred_check_branch
        %5448 = sbr.rel (%p5446) target = $region156
      $region155: #{tpu_custom_call.1} parent=5 // pred_region
        %s5449 = ssub.s32 %s44, 2
        // Predicated region
        $region157: #{tpu_custom_call.1} parent=155 // pred_check
          %p5450 = pneg %p565
        $region158: #{tpu_custom_call.1} parent=155 // pred_check_branch
          %5452 = sbr.rel (%p5450) target = $region160
        $region159: #{tpu_custom_call.1} parent=155 // pred_region
          %s5453 = sand.u32 %s550, 1
          %s5454 = scalar_lea.sflag [#allocation5], %s5453
          %s5455 = sand.u32 %s550, 1
          %s5456 = smul.addr %s5455, 32
          %s5457 = scalar_lea.vmem [#allocation18], %s5456
          %5458 = dma.done %s5454, 512
        $region160: #{tpu_custom_call.1} parent=155 // pred_fallthru
          _
        // Predicated region
        $region161: #{tpu_custom_call.1} parent=155 // pred_check
          %p5459 = pneg %p591
        $region162: #{tpu_custom_call.1} parent=155 // pred_check_branch
          %5461 = sbr.rel (%p5459) target = $region164
        $region163: #{tpu_custom_call.1} parent=155 // pred_region
          %p5462 = scmp.lt.s32.totalorder %s50, 1
          %s5463 = scalar_select %p5462, %s50, 1
          %s5464 = smul.addr %s5463, 8
          %s5465 = scalar_lea.vmem %s23, %s5464
        $region164: #{tpu_custom_call.1} parent=155 // pred_fallthru
          _
      $region156: #{tpu_custom_call.1} parent=5 // pred_fallthru
        _
    $region6: #{tpu_custom_call.1} parent=1 // loop_footer
      %s48 = sadd.s32 1, %s44
    $region7: #{tpu_custom_call.1} parent=1 // loop_footer_branch
      %43 = sbr.rel target = $region3
    $region8: #{tpu_custom_call.1} parent=1 // loop_exit
      _
    %5466 = vsyncpa [#allocation4], 1
    %s5467 = scalar_lea.sflag [#allocation4], 1
    %5468 = vsyncpa %s5467, 1
    %5469 = vsyncpa [#allocation7], 1
    %s5470 = scalar_lea.sflag [#allocation7], 1
    %5471 = vsyncpa %s5470, 1
    %5472 = vsyncpa [#allocation10], 1
    %5473 = vsyncpa [#allocation13], 1
    %5474 = vsyncpa [#allocation16], 1
    %5475 = vsyncpa [#allocation5], 1
    %s5476 = scalar_lea.sflag [#allocation5], 1
    %5477 = vsyncpa %s5476, 1

</llo_original>
